<compile_context>
chip_gen: v6e
topology: v6e:2x2x1
jax: 0.10.0
libtpu: 0.0.40
codegen_flags: <defaults>
</compile_context>

<pallas_src>
import functools

import jax
import jax.numpy as jnp
from jax.experimental import pallas as pl
from jax.experimental.pallas import tpu as pltpu

DPAD = 128  # padded latent width (lane-dense)


def _vae_kernel(x_ref, eps_ref,
                w1_ref, b1_ref,
                wmulv_ref, bmulv_ref,
                w3_ref, b3_ref,
                w4_ref, b4_ref,
                out_ref, mulv_ref):
    dpad = DPAD

    x = x_ref[...]                                  # already bf16

    # ---- encode ----
    h = jnp.dot(x, w1_ref[...], preferred_element_type=jnp.float32) + b1_ref[...]
    h = jnp.maximum(h, 0.0)                         # ReLU

    # Fused mu||logvar projection: one MXU pass, lane-dense (2*DPAD) output.
    mulv = jnp.dot(h.astype(jnp.bfloat16), wmulv_ref[...],
                   preferred_element_type=jnp.float32) + bmulv_ref[...]
    mu = mulv[:, :dpad]                             # slice at a 128-lane boundary
    logvar = mulv[:, dpad:]

    # ---- reparameterize ----  z = mu + exp(0.5 * logvar) * eps
    std = jnp.exp(0.5 * logvar)
    z = mu + std * eps_ref[...]                     # padded lanes: mu=0, eps=0 -> z=0

    # ---- decode ----
    h2 = jnp.dot(z.astype(jnp.bfloat16), w3_ref[...],
                 preferred_element_type=jnp.float32) + b3_ref[...]
    h2 = jnp.maximum(h2, 0.0)                       # ReLU
    logits = jnp.dot(h2.astype(jnp.bfloat16), w4_ref[...],
                     preferred_element_type=jnp.float32) + b4_ref[...]

    # sigmoid on bf16 logits: bf16 EUP on v6e/v7x, output is bf16 anyway.
    out_ref[...] = jax.nn.sigmoid(logits.astype(jnp.bfloat16)).astype(out_ref.dtype)
    mulv_ref[...] = mulv                            # fused mu||logvar, f32 (KL math)


def _round_up(n, m):
    return ((n + m - 1) // m) * m


def prepare_params(params):
    """One-time parameter prep (run once, outside the steady-state forward).

    Returns bf16 weights with:
      * mu/logvar projections fused into one (400, 2*DPAD) matrix, each block
        zero-padded 20 -> 128 lanes so the fused output is lane-dense.
      * decoder-input weight zero-padded (20 -> DPAD rows, 8/16-aligned sublanes).
    """
    (w1, b1, wmu, bmu, wlv, blv, w3, b3, w4, b4) = params
    hidden = w1.shape[1]
    dist_dim = wmu.shape[1]

    w1b = w1.astype(jnp.bfloat16)
    w4b = w4.astype(jnp.bfloat16)

    wmulv = jnp.zeros((hidden, 2 * DPAD), jnp.float32)
    wmulv = wmulv.at[:, :dist_dim].set(wmu).at[:, DPAD:DPAD + dist_dim].set(wlv)
    wmulv = wmulv.astype(jnp.bfloat16)
    bmulv = jnp.zeros((1, 2 * DPAD), jnp.float32)
    bmulv = bmulv.at[:, :dist_dim].set(bmu).at[:, DPAD:DPAD + dist_dim].set(blv)

    w3p = jnp.zeros((DPAD, hidden), jnp.float32).at[:dist_dim, :].set(w3)
    w3p = w3p.astype(jnp.bfloat16)

    return (w1b, b1, wmulv, bmulv, w3p, b3, w4b, b4)


@functools.partial(jax.jit, static_argnames=("block_b",))
def vae_forward(x, eps, prepared, *, block_b=512):
    """Whole VAE forward in one Pallas kernel, tiled over the batch.

    x:        (B, input_dim) bfloat16  (caller casts once at data-load time)
    eps:      (B, distribution_dim) float32  (the randn_like sample)
    prepared: output of prepare_params(params)
    block_b:  max batch tile; 512 sits near the HBM-roofline sweet spot while
              keeping double-buffered tiles well inside v7x's 64 MiB VMEM.
    """
    b, input_dim = x.shape
    dist_dim = eps.shape[1]
    (w1b, b1, wmulv, bmulv, w3p, b3, w4b, b4) = prepared

    # ---- batch tile choice ----
    # Round rows to 16 (bf16 sublane packing). Prefer >= 2 grid steps whenever
    # there is enough work so both v7x TensorCores get a share; cap at block_b.
    pb16 = _round_up(b, 16)
    if pb16 >= 32:
        half = pb16 // 2
        tb = half if half % 16 == 0 else _round_up(half, 16)
    else:
        tb = pb16
    tb = min(tb, max(16, _round_up(block_b, 16)))
    pb = _round_up(b, tb)
    grid = (pb // tb,)

    # Only pay a pad copy of x when B is not a multiple of the tile.
    x_p = x if pb == b else jnp.pad(x, ((0, pb - b), (0, 0)))
    # eps must be widened 20 -> 128 lanes regardless (small: pb x 128 f32).
    eps_p = jnp.zeros((pb, DPAD), jnp.float32).at[:b, :dist_dim].set(eps)

    def batch_map(i):
        return (i, 0)

    def const_map(i):
        return (0, 0)            # weights/biases: resident, never re-DMA'd

    in_specs = [
        pl.BlockSpec((tb, input_dim), batch_map),   # x  (bf16, pipelined per tile)
        pl.BlockSpec((tb, DPAD), batch_map),        # eps
        pl.BlockSpec(w1b.shape, const_map),         # w1 (bf16)
        pl.BlockSpec(b1.shape, const_map),          # b1
        pl.BlockSpec(wmulv.shape, const_map),       # fused wmu||wlv (bf16)
        pl.BlockSpec(bmulv.shape, const_map),       # fused bmu||blv
        pl.BlockSpec(w3p.shape, const_map),         # w3 (bf16, padded to DPAD rows)
        pl.BlockSpec(b3.shape, const_map),          # b3
        pl.BlockSpec(w4b.shape, const_map),         # w4 (bf16)
        pl.BlockSpec(b4.shape, const_map),          # b4
    ]
    out_specs = (
        pl.BlockSpec((tb, input_dim), batch_map),   # reconstruction (bf16)
        pl.BlockSpec((tb, 2 * DPAD), batch_map),    # fused mu||logvar (f32)
    )
    out_shapes = (
        jax.ShapeDtypeStruct((pb, input_dim), jnp.bfloat16),
        jax.ShapeDtypeStruct((pb, 2 * DPAD), jnp.float32),
    )

    out_p, mulv_p = pl.pallas_call(
        _vae_kernel,
        grid=grid,
        in_specs=in_specs,
        out_specs=out_specs,
        out_shape=out_shapes,
        compiler_params=pltpu.CompilerParams(
            dimension_semantics=("parallel",),      # batch split across TCs on v7x
            vmem_limit_bytes=32 << 20,              # fits v7x 64 MiB VMEM w/ headroom
        ),
    )(x_p, eps_p, w1b, b1, wmulv, bmulv, w3p, b3, w4b, b4)

    out = out_p[:b]                                 # bf16 reconstruction
    mu = mulv_p[:b, :dist_dim]
    logvar = mulv_p[:b, DPAD:DPAD + dist_dim]
    return out, mu, logvar


def init_vae_params(key, input_dim=784, hidden=400, dist_dim=20):
    """Deterministic init mimicking PyTorch Linear default (U(-1/sqrt(fan_in), +))."""
    def linear(k, fan_in, fan_out):
        kw, kb = jax.random.split(k)
        bound = 1.0 / jnp.sqrt(fan_in)
        # Stored as (in, out) == transpose of torch's (out, in).
        w = jax.random.uniform(kw, (fan_in, fan_out), jnp.float32, -bound, bound)
        bias = jax.random.uniform(kb, (1, fan_out), jnp.float32, -bound, bound)
        return w, bias

    k1, k2, k3, k4, k5 = jax.random.split(key, 5)
    w1, b1 = linear(k1, input_dim, hidden)       # layer1
    wmu, bmu = linear(k2, hidden, dist_dim)      # layer2_mu
    wlv, blv = linear(k3, hidden, dist_dim)      # layer2_logvar
    w3, b3 = linear(k4, dist_dim, hidden)        # layer3
    w4, b4 = linear(k5, hidden, input_dim)       # layer4
    return (w1, b1, wmu, bmu, wlv, blv, w3, b3, w4, b4)


def vae_forward_ref(x_bf16, eps, params):
    """Pure-JAX reference using the same bf16-weight / f32-accumulate math.

    (bf16 weights/activations are an intentional precision trade vs. the f32
    torch module; the sigmoid is also evaluated on bf16 logits like the kernel.)
    """
    (w1, b1, wmu, bmu, wlv, blv, w3, b3, w4, b4) = params

    def mm(a, w):
        return jnp.dot(a.astype(jnp.bfloat16), w.astype(jnp.bfloat16),
                       preferred_element_type=jnp.float32)

    h = jax.nn.relu(mm(x_bf16, w1) + b1)
    mu = mm(h, wmu) + bmu
    logvar = mm(h, wlv) + blv
    z = mu + jnp.exp(0.5 * logvar) * eps
    h2 = jax.nn.relu(mm(z, w3) + b3)
    out = jax.nn.sigmoid((mm(h2, w4) + b4).astype(jnp.bfloat16))
    return out, mu, logvar


if __name__ == "__main__":
    INPUT_DIM = 784
    DIST_DIM = 20
    BATCH = 32

    key = jax.random.PRNGKey(0)
    k_params, k_x, k_eps = jax.random.split(key, 3)

    params = init_vae_params(k_params, INPUT_DIM, 400, DIST_DIM)
    prepared = jax.block_until_ready(prepare_params(params))   # one-time prep

    x = jax.random.uniform(k_x, (BATCH, INPUT_DIM), jnp.float32)   # MNIST-like pixels
    x_bf16 = x.astype(jnp.bfloat16)                                # cast once at data-load
    # TODO(synk): torch.randn_like is supplied as an explicit eps input; it could be
    # generated in-kernel with pltpu.prng_seed / pltpu.prng_random_bits instead.
    eps = jax.random.normal(k_eps, (BATCH, DIST_DIM), jnp.float32)

    # block_b=16 -> grid of 2 batch tiles (no pad needed): exercises the
    # pipelined / megacore-parallel grid path at this small demo batch.
    out, mu, logvar = vae_forward(x_bf16, eps, prepared, block_b=16)
    jax.block_until_ready((out, mu, logvar))

    # sanity check against pure-JAX reference (same bf16/f32 math)
    ref_out, ref_mu, ref_logvar = vae_forward_ref(x_bf16, eps, params)
    assert out.shape == (BATCH, INPUT_DIM) and out.dtype == jnp.bfloat16
    assert mu.shape == (BATCH, DIST_DIM) and logvar.shape == (BATCH, DIST_DIM)
    assert jnp.allclose(out.astype(jnp.float32), ref_out.astype(jnp.float32),
                        atol=1e-2, rtol=1e-2)
    assert jnp.allclose(mu, ref_mu, atol=2e-3, rtol=2e-3)
    assert jnp.allclose(logvar, ref_logvar, atol=2e-3, rtol=2e-3)

    print("KERNEL_OK")
</pallas_src>

<mosaic_0001>
module attributes {stable_mosaic.version = 11 : i64} {
  func.func @_vae_kernel(%arg0: i32, %arg1: memref<16x784xbf16, #tpu.memory_space<vmem>>, %arg2: memref<16x128xf32, #tpu.memory_space<vmem>>, %arg3: memref<784x400xbf16, #tpu.memory_space<vmem>>, %arg4: memref<1x400xf32, #tpu.memory_space<vmem>>, %arg5: memref<400x256xbf16, #tpu.memory_space<vmem>>, %arg6: memref<1x256xf32, #tpu.memory_space<vmem>>, %arg7: memref<128x400xbf16, #tpu.memory_space<vmem>>, %arg8: memref<1x400xf32, #tpu.memory_space<vmem>>, %arg9: memref<400x784xbf16, #tpu.memory_space<vmem>>, %arg10: memref<1x784xf32, #tpu.memory_space<vmem>>, %arg11: memref<16x784xbf16, #tpu.memory_space<vmem>>, %arg12: memref<16x256xf32, #tpu.memory_space<vmem>>) attributes {dimension_semantics = [#tpu.dimension_semantics<parallel>], iteration_bounds = array<i64: 2>, scalar_prefetch = 0 : i64, scratch_operands = 0 : i64, tpu.core_type = #tpu.core_type<tc>, window_params = [{transform_indices = @transform_0, window_bounds = array<i64: 16, 784>}, {transform_indices = @transform_1, window_bounds = array<i64: 16, 128>}, {pipeline_mode = #tpu.pipeline_mode<synchronous>, transform_indices = @transform_2, window_bounds = array<i64: 784, 400>}, {pipeline_mode = #tpu.pipeline_mode<synchronous>, transform_indices = @transform_3, window_bounds = array<i64: 1, 400>}, {pipeline_mode = #tpu.pipeline_mode<synchronous>, transform_indices = @transform_4, window_bounds = array<i64: 400, 256>}, {pipeline_mode = #tpu.pipeline_mode<synchronous>, transform_indices = @transform_5, window_bounds = array<i64: 1, 256>}, {pipeline_mode = #tpu.pipeline_mode<synchronous>, transform_indices = @transform_6, window_bounds = array<i64: 128, 400>}, {pipeline_mode = #tpu.pipeline_mode<synchronous>, transform_indices = @transform_7, window_bounds = array<i64: 1, 400>}, {pipeline_mode = #tpu.pipeline_mode<synchronous>, transform_indices = @transform_8, window_bounds = array<i64: 400, 784>}, {pipeline_mode = #tpu.pipeline_mode<synchronous>, transform_indices = @transform_9, window_bounds = array<i64: 1, 784>}, {transform_indices = @transform_10, window_bounds = array<i64: 16, 784>}, {transform_indices = @transform_11, window_bounds = array<i64: 16, 256>}]} {
    %c0 = arith.constant 0 : index
    %c0_0 = arith.constant 0 : index
    %0 = vector.load %arg1[%c0, %c0_0] : memref<16x784xbf16, #tpu.memory_space<vmem>>, vector<16x784xbf16>
    %c0_1 = arith.constant 0 : index
    %c0_2 = arith.constant 0 : index
    %1 = vector.load %arg3[%c0_1, %c0_2] : memref<784x400xbf16, #tpu.memory_space<vmem>>, vector<784x400xbf16>
    %cst = arith.constant dense<0.000000e+00> : vector<16x400xf32>
    %2 = tpu.matmul %0, %1, %cst {dimension_numbers = #tpu.dot_dimension_numbers<[1], [0], [0], [1], [0, 0, 1, 1], [], []>} : vector<16x784xbf16>, vector<784x400xbf16>, vector<16x400xf32> -> vector<16x400xf32>
    %c0_3 = arith.constant 0 : index
    %c0_4 = arith.constant 0 : index
    %3 = vector.load %arg4[%c0_3, %c0_4] : memref<1x400xf32, #tpu.memory_space<vmem>>, vector<1x400xf32>
    %4 = vector.broadcast %3 : vector<1x400xf32> to vector<16x400xf32>
    %5 = arith.addf %2, %4 : vector<16x400xf32>
    %cst_5 = arith.constant 0.000000e+00 : f32
    %6 = vector.broadcast %cst_5 : f32 to vector<16x400xf32>
    %7 = arith.maximumf %5, %6 : vector<16x400xf32>
    %8 = arith.truncf %7 : vector<16x400xf32> to vector<16x400xbf16>
    %c0_6 = arith.constant 0 : index
    %c0_7 = arith.constant 0 : index
    %9 = vector.load %arg5[%c0_6, %c0_7] : memref<400x256xbf16, #tpu.memory_space<vmem>>, vector<400x256xbf16>
    %cst_8 = arith.constant dense<0.000000e+00> : vector<16x256xf32>
    %10 = tpu.matmul %8, %9, %cst_8 {dimension_numbers = #tpu.dot_dimension_numbers<[1], [0], [0], [1], [0, 0, 1, 1], [], []>} : vector<16x400xbf16>, vector<400x256xbf16>, vector<16x256xf32> -> vector<16x256xf32>
    %c0_9 = arith.constant 0 : index
    %c0_10 = arith.constant 0 : index
    %11 = vector.load %arg6[%c0_9, %c0_10] : memref<1x256xf32, #tpu.memory_space<vmem>>, vector<1x256xf32>
    %12 = vector.broadcast %11 : vector<1x256xf32> to vector<16x256xf32>
    %13 = arith.addf %10, %12 : vector<16x256xf32>
    %14 = vector.extract_strided_slice %13 {offsets = [0, 0], sizes = [16, 128], strides = [1, 1]} : vector<16x256xf32> to vector<16x128xf32>
    %15 = vector.extract_strided_slice %13 {offsets = [0, 128], sizes = [16, 128], strides = [1, 1]} : vector<16x256xf32> to vector<16x128xf32>
    %cst_11 = arith.constant 5.000000e-01 : f32
    %16 = vector.broadcast %cst_11 : f32 to vector<16x128xf32>
    %17 = arith.mulf %16, %15 : vector<16x128xf32>
    %18 = math.exp %17 : vector<16x128xf32>
    %c0_12 = arith.constant 0 : index
    %c0_13 = arith.constant 0 : index
    %19 = vector.load %arg2[%c0_12, %c0_13] : memref<16x128xf32, #tpu.memory_space<vmem>>, vector<16x128xf32>
    %20 = arith.mulf %18, %19 : vector<16x128xf32>
    %21 = arith.addf %14, %20 : vector<16x128xf32>
    %22 = arith.truncf %21 : vector<16x128xf32> to vector<16x128xbf16>
    %c0_14 = arith.constant 0 : index
    %c0_15 = arith.constant 0 : index
    %23 = vector.load %arg7[%c0_14, %c0_15] : memref<128x400xbf16, #tpu.memory_space<vmem>>, vector<128x400xbf16>
    %cst_16 = arith.constant dense<0.000000e+00> : vector<16x400xf32>
    %24 = tpu.matmul %22, %23, %cst_16 {dimension_numbers = #tpu.dot_dimension_numbers<[1], [0], [0], [1], [0, 0, 1, 1], [], []>} : vector<16x128xbf16>, vector<128x400xbf16>, vector<16x400xf32> -> vector<16x400xf32>
    %c0_17 = arith.constant 0 : index
    %c0_18 = arith.constant 0 : index
    %25 = vector.load %arg8[%c0_17, %c0_18] : memref<1x400xf32, #tpu.memory_space<vmem>>, vector<1x400xf32>
    %26 = vector.broadcast %25 : vector<1x400xf32> to vector<16x400xf32>
    %27 = arith.addf %24, %26 : vector<16x400xf32>
    %cst_19 = arith.constant 0.000000e+00 : f32
    %28 = vector.broadcast %cst_19 : f32 to vector<16x400xf32>
    %29 = arith.maximumf %27, %28 : vector<16x400xf32>
    %30 = arith.truncf %29 : vector<16x400xf32> to vector<16x400xbf16>
    %c0_20 = arith.constant 0 : index
    %c0_21 = arith.constant 0 : index
    %31 = vector.load %arg9[%c0_20, %c0_21] : memref<400x784xbf16, #tpu.memory_space<vmem>>, vector<400x784xbf16>
    %cst_22 = arith.constant dense<0.000000e+00> : vector<16x784xf32>
    %32 = tpu.matmul %30, %31, %cst_22 {dimension_numbers = #tpu.dot_dimension_numbers<[1], [0], [0], [1], [0, 0, 1, 1], [], []>} : vector<16x400xbf16>, vector<400x784xbf16>, vector<16x784xf32> -> vector<16x784xf32>
    %c0_23 = arith.constant 0 : index
    %c0_24 = arith.constant 0 : index
    %33 = vector.load %arg10[%c0_23, %c0_24] : memref<1x784xf32, #tpu.memory_space<vmem>>, vector<1x784xf32>
    %34 = vector.broadcast %33 : vector<1x784xf32> to vector<16x784xf32>
    %35 = arith.addf %32, %34 : vector<16x784xf32>
    %36 = arith.truncf %35 : vector<16x784xf32> to vector<16x784xbf16>
    %37 = arith.negf %36 : vector<16x784xbf16>
    %38 = math.exp %37 : vector<16x784xbf16>
    %cst_25 = arith.constant 1.000000e+00 : bf16
    %39 = vector.broadcast %cst_25 : bf16 to vector<16x784xbf16>
    %40 = arith.addf %39, %38 : vector<16x784xbf16>
    %41 = arith.divf %39, %40 : vector<16x784xbf16>
    %c0_26 = arith.constant 0 : index
    %c0_27 = arith.constant 0 : index
    %42 = vector.load %arg11[%c0_26, %c0_27] : memref<16x784xbf16, #tpu.memory_space<vmem>>, vector<16x784xbf16>
    tpu.vector_store %arg11[%c0_26, %c0_27], %41 {strides = array<i32>} : memref<16x784xbf16, #tpu.memory_space<vmem>>, vector<16x784xbf16>,
    %c0_28 = arith.constant 0 : index
    %c0_29 = arith.constant 0 : index
    %43 = vector.load %arg12[%c0_28, %c0_29] : memref<16x256xf32, #tpu.memory_space<vmem>>, vector<16x256xf32>
    tpu.vector_store %arg12[%c0_28, %c0_29], %13 {strides = array<i32>} : memref<16x256xf32, #tpu.memory_space<vmem>>, vector<16x256xf32>,
    return
  }
  func.func @transform_0(%arg0: i32) -> (i32, i32) {
    %c0_i32 = arith.constant 0 : i32
    %c0_i32_0 = arith.constant 0 : i32
    return %arg0, %c0_i32 : i32, i32
  }
  func.func @transform_1(%arg0: i32) -> (i32, i32) {
    %c0_i32 = arith.constant 0 : i32
    %c0_i32_0 = arith.constant 0 : i32
    return %arg0, %c0_i32 : i32, i32
  }
  func.func @transform_2(%arg0: i32) -> (i32, i32) {
    %c0_i32 = arith.constant 0 : i32
    %c0_i32_0 = arith.constant 0 : i32
    %c0_i32_1 = arith.constant 0 : i32
    return %c0_i32, %c0_i32_0 : i32, i32
  }
  func.func @transform_3(%arg0: i32) -> (i32, i32) {
    %c0_i32 = arith.constant 0 : i32
    %c0_i32_0 = arith.constant 0 : i32
    %c0_i32_1 = arith.constant 0 : i32
    return %c0_i32, %c0_i32_0 : i32, i32
  }
  func.func @transform_4(%arg0: i32) -> (i32, i32) {
    %c0_i32 = arith.constant 0 : i32
    %c0_i32_0 = arith.constant 0 : i32
    %c0_i32_1 = arith.constant 0 : i32
    return %c0_i32, %c0_i32_0 : i32, i32
  }
  func.func @transform_5(%arg0: i32) -> (i32, i32) {
    %c0_i32 = arith.constant 0 : i32
    %c0_i32_0 = arith.constant 0 : i32
    %c0_i32_1 = arith.constant 0 : i32
    return %c0_i32, %c0_i32_0 : i32, i32
  }
  func.func @transform_6(%arg0: i32) -> (i32, i32) {
    %c0_i32 = arith.constant 0 : i32
    %c0_i32_0 = arith.constant 0 : i32
    %c0_i32_1 = arith.constant 0 : i32
    return %c0_i32, %c0_i32_0 : i32, i32
  }
  func.func @transform_7(%arg0: i32) -> (i32, i32) {
    %c0_i32 = arith.constant 0 : i32
    %c0_i32_0 = arith.constant 0 : i32
    %c0_i32_1 = arith.constant 0 : i32
    return %c0_i32, %c0_i32_0 : i32, i32
  }
  func.func @transform_8(%arg0: i32) -> (i32, i32) {
    %c0_i32 = arith.constant 0 : i32
    %c0_i32_0 = arith.constant 0 : i32
    %c0_i32_1 = arith.constant 0 : i32
    return %c0_i32, %c0_i32_0 : i32, i32
  }
  func.func @transform_9(%arg0: i32) -> (i32, i32) {
    %c0_i32 = arith.constant 0 : i32
    %c0_i32_0 = arith.constant 0 : i32
    %c0_i32_1 = arith.constant 0 : i32
    return %c0_i32, %c0_i32_0 : i32, i32
  }
  func.func @transform_10(%arg0: i32) -> (i32, i32) {
    %c0_i32 = arith.constant 0 : i32
    %c0_i32_0 = arith.constant 0 : i32
    return %arg0, %c0_i32 : i32, i32
  }
  func.func @transform_11(%arg0: i32) -> (i32, i32) {
    %c0_i32 = arith.constant 0 : i32
    %c0_i32_0 = arith.constant 0 : i32
    return %arg0, %c0_i32 : i32, i32
  }
}

</mosaic_0001>

<llo_original>
// kernel: vae_forward.1
$region0: #{vae_forward.1}
  #allocation0 [shape = 'u32[]', space=smem, size = 0x4, offset = 0x4, fixed_abs, tag = 'smem constant byte address 0x4 - core index']
  #allocation1 [shape = 'u32[144,128]{1,0:T(1,128)}', space=vmem, size = 0x12000, scoped, tag = 'internal scratch']
  %s0 = inlined_call_operand.vmem [shape: bf16[32,784], index: 0, kind: input, shape index: {}]
  %s1 = inlined_call_operand.vmem [shape: f32[32,128], index: 1, kind: input, shape index: {}]
  %s2 = inlined_call_operand.vmem [shape: bf16[784,400], index: 2, kind: input, shape index: {}]
  %s3 = inlined_call_operand.vmem [shape: f32[1,400], index: 3, kind: input, shape index: {}]
  %s4 = inlined_call_operand.vmem [shape: bf16[400,256], index: 4, kind: input, shape index: {}]
  %s5 = inlined_call_operand.vmem [shape: f32[1,256], index: 5, kind: input, shape index: {}]
  %s6 = inlined_call_operand.vmem [shape: bf16[128,400], index: 6, kind: input, shape index: {}]
  %s7 = inlined_call_operand.vmem [shape: f32[1,400], index: 7, kind: input, shape index: {}]
  %s8 = inlined_call_operand.vmem [shape: bf16[400,784], index: 8, kind: input, shape index: {}]
  %s9 = inlined_call_operand.vmem [shape: f32[1,784], index: 9, kind: input, shape index: {}]
  %s10 = inlined_call_operand.hbm [shape: bf16[32,784], index: 10, kind: output, shape index: {0}]
  %s11 = inlined_call_operand.vmem [shape: f32[32,256], index: 11, kind: output, shape index: {1}]
  %12 = xla_tuple %s10, %s11
  %s13 = sld [smem:[#allocation0]]
  $region81: #{vae_forward.1} parent=0
    _
  %s15 = ssub.s32 1, %s13
  %s16 = scalar_select 0, %s15, %s13
  $region1: #{vae_forward.1} parent=0
    #allocation2 [shape = 'u8[57344]{0}', space=vmem, size = 0xe000, scoped, tag = 'output window, operand 0']
    #allocation3 [shape = 's32[2]{0}', space=sflag, size = 0x8, scoped, tag = 'scoped memory for vae_forward.1']
    %17 = vsyncpa [#allocation3], 0
    %s18 = scalar_lea.sflag [#allocation3], 1
    %19 = vsyncpa %s18, 0
    loop: start=0, step=1, limit=4
    $region2: #{vae_forward.1} parent=1 // loop_pre_header
      _
    $region3: #{vae_forward.1} parent=1 // loop_header
      %s21 = sphi 0, %s25
      %p22 = scmp.ge.s32.totalorder %s21, 4
      %s31 = sphi 0, %s33
      %s34 = sphi 0, %s31
      %s35 = sphi 0, %s34
      %s51 = sphi 0, %s35
      %s57 = sphi 0, %s59
      %s60 = sphi 0, %s57
      %s61 = sphi 0, %s60
      %s77 = sphi 0, %s61
      %s81 = sphi 0, %s81
      %s83 = sphi 0, %s81
      %s84 = sphi 0, %s83
      %s98 = sphi 0, %s84
      %s102 = sphi 0, %s102
      %s104 = sphi 0, %s102
      %s105 = sphi 0, %s104
      %s119 = sphi 0, %s105
      %s123 = sphi 0, %s123
      %s125 = sphi 0, %s123
      %s126 = sphi 0, %s125
      %s140 = sphi 0, %s126
      %s144 = sphi 0, %s144
      %s146 = sphi 0, %s144
      %s147 = sphi 0, %s146
      %s161 = sphi 0, %s147
      %s165 = sphi 0, %s165
      %s167 = sphi 0, %s165
      %s168 = sphi 0, %s167
      %s182 = sphi 0, %s168
      %s186 = sphi 0, %s186
      %s188 = sphi 0, %s186
      %s189 = sphi 0, %s188
      %s203 = sphi 0, %s189
      %s207 = sphi 0, %s207
      %s209 = sphi 0, %s207
      %s210 = sphi 0, %s209
      %s224 = sphi 0, %s210
      %s228 = sphi 0, %s228
      %s230 = sphi 0, %s228
      %s231 = sphi 0, %s230
      %s245 = sphi 0, %s231
      %s251 = sphi 0, %s253
      %s254 = sphi 0, %s251
      %s255 = sphi 0, %s254
      %s271 = sphi 0, %s255
      %s277 = sphi 0, %s279
      %s280 = sphi 0, %s277
      %s281 = sphi 0, %s280
      %s297 = sphi 0, %s281
    $region4: #{vae_forward.1} parent=1 // loop_header_branch
      %24 = sbr.rel (%p22) target = $region8
    $region5: #{vae_forward.1} parent=1 // loop_body
      %s26 = ssub.s32 %s21, 1
      %s27 = ssub.s32 %s21, 2
      %s28 = sadd.s32 %s21, 1
      %s29 = ssub.s32 %s21, %s28
      %p30 = scmp.eq.s32.totalorder %s29, 0
      %s32 = sadd.s32 %s31, 1
      %s33 = scalar_select %p30, %s31, %s32
      %p36 = pneg %p30
      %p37 = scmp.eq.s32.totalorder %s21, 1
      %p38 = por %p36, %p37
      %p39 = scmp.ne.s32.totalorder %s31, %s34
      %p40 = scmp.eq.s32.totalorder %s21, 0
      %p41 = por %p39, %p40
      %p42 = scmp.ne.s32.totalorder %s31, %s34
      %p43 = scmp.eq.s32.totalorder %s26, 1
      %p44 = por %p42, %p43
      %p45 = scmp.ne.s32.totalorder %s34, %s35
      %p46 = scmp.eq.s32.totalorder %s26, 0
      %p47 = por %p45, %p46
      %p48 = scmp.ne.s32.totalorder %s34, %s35
      %p49 = scmp.eq.s32.totalorder %s27, 1
      %p50 = por %p48, %p49
      %p52 = scmp.ne.s32.totalorder %s35, %s51
      %p53 = scmp.eq.s32.totalorder %s27, 0
      %p54 = por %p52, %p53
      %s55 = ssub.s32 %s21, %s28
      %p56 = scmp.eq.s32.totalorder %s55, 0
      %s58 = sadd.s32 %s57, 1
      %s59 = scalar_select %p56, %s57, %s58
      %p62 = pneg %p56
      %p63 = scmp.eq.s32.totalorder %s21, 1
      %p64 = por %p62, %p63
      %p65 = scmp.ne.s32.totalorder %s57, %s60
      %p66 = scmp.eq.s32.totalorder %s21, 0
      %p67 = por %p65, %p66
      %p68 = scmp.ne.s32.totalorder %s57, %s60
      %p69 = scmp.eq.s32.totalorder %s26, 1
      %p70 = por %p68, %p69
      %p71 = scmp.ne.s32.totalorder %s60, %s61
      %p72 = scmp.eq.s32.totalorder %s26, 0
      %p73 = por %p71, %p72
      %p74 = scmp.ne.s32.totalorder %s60, %s61
      %p75 = scmp.eq.s32.totalorder %s27, 1
      %p76 = por %p74, %p75
      %p78 = scmp.ne.s32.totalorder %s61, %s77
      %p79 = scmp.eq.s32.totalorder %s27, 0
      %p80 = por %p78, %p79
      %s82 = sadd.s32 %s81, 1
      %p85 = scmp.eq.s32.totalorder %s21, 1
      %p86 = scmp.ne.s32.totalorder %s81, %s83
      %p87 = scmp.eq.s32.totalorder %s21, 0
      %p88 = por %p86, %p87
      %p89 = scmp.ne.s32.totalorder %s81, %s83
      %p90 = scmp.eq.s32.totalorder %s26, 1
      %p91 = por %p89, %p90
      %p92 = scmp.ne.s32.totalorder %s83, %s84
      %p93 = scmp.eq.s32.totalorder %s26, 0
      %p94 = por %p92, %p93
      %p95 = scmp.ne.s32.totalorder %s83, %s84
      %p96 = scmp.eq.s32.totalorder %s27, 1
      %p97 = por %p95, %p96
      %p99 = scmp.ne.s32.totalorder %s84, %s98
      %p100 = scmp.eq.s32.totalorder %s27, 0
      %p101 = por %p99, %p100
      %s103 = sadd.s32 %s102, 1
      %p106 = scmp.eq.s32.totalorder %s21, 1
      %p107 = scmp.ne.s32.totalorder %s102, %s104
      %p108 = scmp.eq.s32.totalorder %s21, 0
      %p109 = por %p107, %p108
      %p110 = scmp.ne.s32.totalorder %s102, %s104
      %p111 = scmp.eq.s32.totalorder %s26, 1
      %p112 = por %p110, %p111
      %p113 = scmp.ne.s32.totalorder %s104, %s105
      %p114 = scmp.eq.s32.totalorder %s26, 0
      %p115 = por %p113, %p114
      %p116 = scmp.ne.s32.totalorder %s104, %s105
      %p117 = scmp.eq.s32.totalorder %s27, 1
      %p118 = por %p116, %p117
      %p120 = scmp.ne.s32.totalorder %s105, %s119
      %p121 = scmp.eq.s32.totalorder %s27, 0
      %p122 = por %p120, %p121
      %s124 = sadd.s32 %s123, 1
      %p127 = scmp.eq.s32.totalorder %s21, 1
      %p128 = scmp.ne.s32.totalorder %s123, %s125
      %p129 = scmp.eq.s32.totalorder %s21, 0
      %p130 = por %p128, %p129
      %p131 = scmp.ne.s32.totalorder %s123, %s125
      %p132 = scmp.eq.s32.totalorder %s26, 1
      %p133 = por %p131, %p132
      %p134 = scmp.ne.s32.totalorder %s125, %s126
      %p135 = scmp.eq.s32.totalorder %s26, 0
      %p136 = por %p134, %p135
      %p137 = scmp.ne.s32.totalorder %s125, %s126
      %p138 = scmp.eq.s32.totalorder %s27, 1
      %p139 = por %p137, %p138
      %p141 = scmp.ne.s32.totalorder %s126, %s140
      %p142 = scmp.eq.s32.totalorder %s27, 0
      %p143 = por %p141, %p142
      %s145 = sadd.s32 %s144, 1
      %p148 = scmp.eq.s32.totalorder %s21, 1
      %p149 = scmp.ne.s32.totalorder %s144, %s146
      %p150 = scmp.eq.s32.totalorder %s21, 0
      %p151 = por %p149, %p150
      %p152 = scmp.ne.s32.totalorder %s144, %s146
      %p153 = scmp.eq.s32.totalorder %s26, 1
      %p154 = por %p152, %p153
      %p155 = scmp.ne.s32.totalorder %s146, %s147
      %p156 = scmp.eq.s32.totalorder %s26, 0
      %p157 = por %p155, %p156
      %p158 = scmp.ne.s32.totalorder %s146, %s147
      %p159 = scmp.eq.s32.totalorder %s27, 1
      %p160 = por %p158, %p159
      %p162 = scmp.ne.s32.totalorder %s147, %s161
      %p163 = scmp.eq.s32.totalorder %s27, 0
      %p164 = por %p162, %p163
      %s166 = sadd.s32 %s165, 1
      %p169 = scmp.eq.s32.totalorder %s21, 1
      %p170 = scmp.ne.s32.totalorder %s165, %s167
      %p171 = scmp.eq.s32.totalorder %s21, 0
      %p172 = por %p170, %p171
      %p173 = scmp.ne.s32.totalorder %s165, %s167
      %p174 = scmp.eq.s32.totalorder %s26, 1
      %p175 = por %p173, %p174
      %p176 = scmp.ne.s32.totalorder %s167, %s168
      %p177 = scmp.eq.s32.totalorder %s26, 0
      %p178 = por %p176, %p177
      %p179 = scmp.ne.s32.totalorder %s167, %s168
      %p180 = scmp.eq.s32.totalorder %s27, 1
      %p181 = por %p179, %p180
      %p183 = scmp.ne.s32.totalorder %s168, %s182
      %p184 = scmp.eq.s32.totalorder %s27, 0
      %p185 = por %p183, %p184
      %s187 = sadd.s32 %s186, 1
      %p190 = scmp.eq.s32.totalorder %s21, 1
      %p191 = scmp.ne.s32.totalorder %s186, %s188
      %p192 = scmp.eq.s32.totalorder %s21, 0
      %p193 = por %p191, %p192
      %p194 = scmp.ne.s32.totalorder %s186, %s188
      %p195 = scmp.eq.s32.totalorder %s26, 1
      %p196 = por %p194, %p195
      %p197 = scmp.ne.s32.totalorder %s188, %s189
      %p198 = scmp.eq.s32.totalorder %s26, 0
      %p199 = por %p197, %p198
      %p200 = scmp.ne.s32.totalorder %s188, %s189
      %p201 = scmp.eq.s32.totalorder %s27, 1
      %p202 = por %p200, %p201
      %p204 = scmp.ne.s32.totalorder %s189, %s203
      %p205 = scmp.eq.s32.totalorder %s27, 0
      %p206 = por %p204, %p205
      %s208 = sadd.s32 %s207, 1
      %p211 = scmp.eq.s32.totalorder %s21, 1
      %p212 = scmp.ne.s32.totalorder %s207, %s209
      %p213 = scmp.eq.s32.totalorder %s21, 0
      %p214 = por %p212, %p213
      %p215 = scmp.ne.s32.totalorder %s207, %s209
      %p216 = scmp.eq.s32.totalorder %s26, 1
      %p217 = por %p215, %p216
      %p218 = scmp.ne.s32.totalorder %s209, %s210
      %p219 = scmp.eq.s32.totalorder %s26, 0
      %p220 = por %p218, %p219
      %p221 = scmp.ne.s32.totalorder %s209, %s210
      %p222 = scmp.eq.s32.totalorder %s27, 1
      %p223 = por %p221, %p222
      %p225 = scmp.ne.s32.totalorder %s210, %s224
      %p226 = scmp.eq.s32.totalorder %s27, 0
      %p227 = por %p225, %p226
      %s229 = sadd.s32 %s228, 1
      %p232 = scmp.eq.s32.totalorder %s21, 1
      %p233 = scmp.ne.s32.totalorder %s228, %s230
      %p234 = scmp.eq.s32.totalorder %s21, 0
      %p235 = por %p233, %p234
      %p236 = scmp.ne.s32.totalorder %s228, %s230
      %p237 = scmp.eq.s32.totalorder %s26, 1
      %p238 = por %p236, %p237
      %p239 = scmp.ne.s32.totalorder %s230, %s231
      %p240 = scmp.eq.s32.totalorder %s26, 0
      %p241 = por %p239, %p240
      %p242 = scmp.ne.s32.totalorder %s230, %s231
      %p243 = scmp.eq.s32.totalorder %s27, 1
      %p244 = por %p242, %p243
      %p246 = scmp.ne.s32.totalorder %s231, %s245
      %p247 = scmp.eq.s32.totalorder %s27, 0
      %p248 = por %p246, %p247
      %s249 = ssub.s32 %s21, %s28
      %p250 = scmp.eq.s32.totalorder %s249, 0
      %s252 = sadd.s32 %s251, 1
      %s253 = scalar_select %p250, %s251, %s252
      %p256 = pneg %p250
      %p257 = scmp.eq.s32.totalorder %s21, 1
      %p258 = por %p256, %p257
      %p259 = scmp.ne.s32.totalorder %s251, %s254
      %p260 = scmp.eq.s32.totalorder %s21, 0
      %p261 = por %p259, %p260
      %p262 = scmp.ne.s32.totalorder %s251, %s254
      %p263 = scmp.eq.s32.totalorder %s26, 1
      %p264 = por %p262, %p263
      %p265 = scmp.ne.s32.totalorder %s254, %s255
      %p266 = scmp.eq.s32.totalorder %s26, 0
      %p267 = por %p265, %p266
      %p268 = scmp.ne.s32.totalorder %s254, %s255
      %p269 = scmp.eq.s32.totalorder %s27, 1
      %p270 = por %p268, %p269
      %p272 = scmp.ne.s32.totalorder %s255, %s271
      %p273 = scmp.eq.s32.totalorder %s27, 0
      %p274 = por %p272, %p273
      %s275 = ssub.s32 %s21, %s28
      %p276 = scmp.eq.s32.totalorder %s275, 0
      %s278 = sadd.s32 %s277, 1
      %s279 = scalar_select %p276, %s277, %s278
      %p282 = pneg %p276
      %p283 = scmp.eq.s32.totalorder %s21, 1
      %p284 = por %p282, %p283
      %p285 = scmp.ne.s32.totalorder %s277, %s280
      %p286 = scmp.eq.s32.totalorder %s21, 0
      %p287 = por %p285, %p286
      %p288 = scmp.ne.s32.totalorder %s277, %s280
      %p289 = scmp.eq.s32.totalorder %s26, 1
      %p290 = por %p288, %p289
      %p291 = scmp.ne.s32.totalorder %s280, %s281
      %p292 = scmp.eq.s32.totalorder %s26, 0
      %p293 = por %p291, %p292
      %p294 = scmp.ne.s32.totalorder %s280, %s281
      %p295 = scmp.eq.s32.totalorder %s27, 1
      %p296 = por %p294, %p295
      %p298 = scmp.ne.s32.totalorder %s281, %s297
      %p299 = scmp.eq.s32.totalorder %s27, 0
      %p300 = por %p298, %p299
      %p301 = scmp.le.s32.totalorder 1, %s21
      %p302 = scmp.lt.s32.totalorder %s21, 3
      %p303 = pnand %p301, %p302
      %p304 = pneg %p303
      // Predicated region
      $region9: #{vae_forward.1} parent=5 // pred_check
        _
      $region10: #{vae_forward.1} parent=5 // pred_check_branch
        %306 = sbr.rel (%p303) target = $region12
      $region11: #{vae_forward.1} parent=5 // pred_region
        %s307 = ssub.s32 %s21, 1
        // Predicated region
        $region13: #{vae_forward.1} parent=11 // pred_check
          %p308 = pneg %p94
        $region14: #{vae_forward.1} parent=11 // pred_check_branch
          %310 = sbr.rel (%p308) target = $region16
        $region15: #{vae_forward.1} parent=11 // pred_region
          _
        $region16: #{vae_forward.1} parent=11 // pred_fallthru
          _
        // Predicated region
        $region17: #{vae_forward.1} parent=11 // pred_check
          %p311 = pneg %p115
        $region18: #{vae_forward.1} parent=11 // pred_check_branch
          %313 = sbr.rel (%p311) target = $region20
        $region19: #{vae_forward.1} parent=11 // pred_region
          _
        $region20: #{vae_forward.1} parent=11 // pred_fallthru
          _
        // Predicated region
        $region21: #{vae_forward.1} parent=11 // pred_check
          %p314 = pneg %p136
        $region22: #{vae_forward.1} parent=11 // pred_check_branch
          %316 = sbr.rel (%p314) target = $region24
        $region23: #{vae_forward.1} parent=11 // pred_region
          _
        $region24: #{vae_forward.1} parent=11 // pred_fallthru
          _
        // Predicated region
        $region25: #{vae_forward.1} parent=11 // pred_check
          %p317 = pneg %p157
        $region26: #{vae_forward.1} parent=11 // pred_check_branch
          %319 = sbr.rel (%p317) target = $region28
        $region27: #{vae_forward.1} parent=11 // pred_region
          _
        $region28: #{vae_forward.1} parent=11 // pred_fallthru
          _
        // Predicated region
        $region29: #{vae_forward.1} parent=11 // pred_check
          %p320 = pneg %p178
        $region30: #{vae_forward.1} parent=11 // pred_check_branch
          %322 = sbr.rel (%p320) target = $region32
        $region31: #{vae_forward.1} parent=11 // pred_region
          _
        $region32: #{vae_forward.1} parent=11 // pred_fallthru
          _
        // Predicated region
        $region33: #{vae_forward.1} parent=11 // pred_check
          %p323 = pneg %p199
        $region34: #{vae_forward.1} parent=11 // pred_check_branch
          %325 = sbr.rel (%p323) target = $region36
        $region35: #{vae_forward.1} parent=11 // pred_region
          _
        $region36: #{vae_forward.1} parent=11 // pred_fallthru
          _
        // Predicated region
        $region37: #{vae_forward.1} parent=11 // pred_check
          %p326 = pneg %p220
        $region38: #{vae_forward.1} parent=11 // pred_check_branch
          %328 = sbr.rel (%p326) target = $region40
        $region39: #{vae_forward.1} parent=11 // pred_region
          _
        $region40: #{vae_forward.1} parent=11 // pred_fallthru
          _
        // Predicated region
        $region41: #{vae_forward.1} parent=11 // pred_check
          %p329 = pneg %p241
        $region42: #{vae_forward.1} parent=11 // pred_check_branch
          %331 = sbr.rel (%p329) target = $region44
        $region43: #{vae_forward.1} parent=11 // pred_region
          _
        $region44: #{vae_forward.1} parent=11 // pred_fallthru
          _
      $region12: #{vae_forward.1} parent=5 // pred_fallthru
        _
      %p332 = scmp.lt.s32.totalorder %s21, 2
      // Predicated region
      $region45: #{vae_forward.1} parent=5 // pred_check
        %p333 = pneg %p332
      $region46: #{vae_forward.1} parent=5 // pred_check_branch
        %335 = sbr.rel (%p333) target = $region48
      $region47: #{vae_forward.1} parent=5 // pred_region
        // Predicated region
        $region49: #{vae_forward.1} parent=47 // pred_check
          %p336 = pneg %p41
        $region50: #{vae_forward.1} parent=47 // pred_check_branch
          %338 = sbr.rel (%p336) target = $region52
        $region51: #{vae_forward.1} parent=47 // pred_region
          %s339 = smul.u32 2, %s21
          %p340 = scmp.lt.s32.totalorder %s339, 3
          %s341 = scalar_select %p340, %s339, 3
          %s342 = smul.addr %s341, 7
          %s343 = smul.addr %s342, 4
          %s344 = scalar_lea.vmem %s0, %s343
          %s345 = smul.u32 2, %s21
        $region52: #{vae_forward.1} parent=47 // pred_fallthru
          _
        // Predicated region
        $region53: #{vae_forward.1} parent=47 // pred_check
          %p346 = pneg %p67
        $region54: #{vae_forward.1} parent=47 // pred_check_branch
          %348 = sbr.rel (%p346) target = $region56
        $region55: #{vae_forward.1} parent=47 // pred_region
          %s349 = smul.u32 2, %s21
          %p350 = scmp.lt.s32.totalorder %s349, 3
          %s351 = scalar_select %p350, %s349, 3
          %s352 = smul.addr %s351, 8
          %s353 = scalar_lea.vmem %s1, %s352
          %s354 = smul.u32 2, %s21
        $region56: #{vae_forward.1} parent=47 // pred_fallthru
          _
      $region48: #{vae_forward.1} parent=5 // pred_fallthru
        _
      %p355 = scmp.le.s32.totalorder 1, %s21
      %p356 = scmp.lt.s32.totalorder %s21, 3
      %p357 = pnand %p355, %p356
      %p358 = pneg %p357
      // Predicated region
      $region57: #{vae_forward.1} parent=5 // pred_check
        _
      $region58: #{vae_forward.1} parent=5 // pred_check_branch
        %360 = sbr.rel (%p357) target = $region60
      $region59: #{vae_forward.1} parent=5 // pred_region
        %s361 = ssub.s32 %s21, 1
        %s362 = smul.u32 2, %s26
        %p363 = scmp.lt.s32.totalorder %s362, 3
        %s364 = scalar_select %p363, %s362, 3
        %s365 = smul.addr %s364, 7
        %s366 = smul.addr %s365, 4
        %s367 = scalar_lea.vmem %s0, %s366
        %p368 = pneg %p47
        %p369 = pneg %p44
        %s370 = smul.u32 2, %s26
        %p371 = scmp.lt.s32.totalorder %s370, 3
        %s372 = scalar_select %p371, %s370, 3
        %s373 = smul.addr %s372, 8
        %s374 = scalar_lea.vmem %s1, %s373
        %p375 = pneg %p73
        %p376 = pneg %p70
        %p377 = pneg %p94
        %p378 = pneg %p91
        %p379 = pneg %p115
        %p380 = pneg %p112
        %p381 = pneg %p136
        %p382 = pneg %p133
        %p383 = pneg %p157
        %p384 = pneg %p154
        %p385 = pneg %p178
        %p386 = pneg %p175
        %p387 = pneg %p199
        %p388 = pneg %p196
        %p389 = pneg %p220
        %p390 = pneg %p217
        %p391 = pneg %p241
        %p392 = pneg %p238
        %p393 = pneg %p267
        %p394 = pneg %p264
        %s395 = sand.u32 %s254, 1
        %s396 = scalar_lea.sflag [#allocation3], %s395
        %s397 = sand.u32 %s254, 1
        %s398 = smul.addr %s397, 56
        %s399 = scalar_lea.vmem [#allocation2], %s398
        %p400 = pneg %p293
        %p401 = pneg %p290
        %s402 = smul.u32 2, %s26
        %p403 = scmp.lt.s32.totalorder %s402, 3
        %s404 = scalar_select %p403, %s402, 3
        %s405 = smul.addr %s404, 2
        %s406 = smul.addr %s405, 8
        %s407 = scalar_lea.vmem %s11, %s406
        %s408 = smul.u32 2, %s26
        %p409 = scmp.lt.s32.totalorder %s408, 3
        %s410 = scalar_select %p409, %s408, 3
        %s411 = smul.addr %s410, 7
        %s412 = smul.addr %s411, 4
        %s413 = scalar_lea.vmem %s0, %s412
        %s414 = smul.u32 2, %s26
        %s415 = smul.u32 2, %s26
        %p416 = scmp.lt.s32.totalorder %s415, 3
        %s417 = scalar_select %p416, %s415, 3
        %s418 = smul.addr %s417, 8
        %s419 = scalar_lea.vmem %s1, %s418
        %s420 = smul.u32 2, %s26
        %s421 = smul.u32 2, %s26
        %s422 = smul.u32 2, %s26
        %p423 = scmp.lt.s32.totalorder %s422, 3
        %s424 = scalar_select %p423, %s422, 3
        %s425 = smul.addr %s424, 2
        %s426 = smul.addr %s425, 8
        %s427 = scalar_lea.vmem %s11, %s426
        %s428 = smul.u32 2, %s26
        %v431 = vld [vmem:[%s413] sm:$0xff]
        %v432 = vld [vmem:[%s413 + $0x8] sm:$0xff]
        %v433 = vld [vmem:[%s413 + $0x10] sm:$0xff]
        %v434 = vld [vmem:[%s413 + $0x18] sm:$0xf]
        %v435 = vld [vmem:[%s413 + $0x1c] sm:$0xff]
        %v436 = vld [vmem:[%s413 + $0x24] sm:$0xff]
        %v437 = vld [vmem:[%s413 + $0x2c] sm:$0xff]
        %v438 = vld [vmem:[%s413 + $0x34] sm:$0xf]
        %v439 = vld [vmem:[%s2] sm:$0xff]
        %v440 = vld [vmem:[%s2 + $0x8] sm:$0xff]
        %v441 = vld [vmem:[%s2 + $0x10] sm:$0xff]
        %v442 = vld [vmem:[%s2 + $0x18] sm:$0xff]
        %v443 = vld [vmem:[%s2 + $0x20] sm:$0xff]
        %v444 = vld [vmem:[%s2 + $0x28] sm:$0xff]
        %v445 = vld [vmem:[%s2 + $0x30] sm:$0xff]
        %v446 = vld [vmem:[%s2 + $0x38] sm:$0xff]
        %v447 = vld [vmem:[%s2 + $0x40] sm:$0xff]
        %v448 = vld [vmem:[%s2 + $0x48] sm:$0xff]
        %v449 = vld [vmem:[%s2 + $0x50] sm:$0xff]
        %v450 = vld [vmem:[%s2 + $0x58] sm:$0xff]
        %v451 = vld [vmem:[%s2 + $0x60] sm:$0xff]
        %v452 = vld [vmem:[%s2 + $0x68] sm:$0xff]
        %v453 = vld [vmem:[%s2 + $0x70] sm:$0xff]
        %v454 = vld [vmem:[%s2 + $0x78] sm:$0xff]
        %v455 = vld [vmem:[%s2 + $0x80] sm:$0xff]
        %v456 = vld [vmem:[%s2 + $0x88] sm:$0xff]
        %v457 = vld [vmem:[%s2 + $0x90] sm:$0xff]
        %v458 = vld [vmem:[%s2 + $0x98] sm:$0xff]
        %v459 = vld [vmem:[%s2 + $0xa0] sm:$0xff]
        %v460 = vld [vmem:[%s2 + $0xa8] sm:$0xff]
        %v461 = vld [vmem:[%s2 + $0xb0] sm:$0xff]
        %v462 = vld [vmem:[%s2 + $0xb8] sm:$0xff]
        %v463 = vld [vmem:[%s2 + $0xc0] sm:$0xff]
        %v464 = vld [vmem:[%s2 + $0xc8] sm:$0xff]
        %v465 = vld [vmem:[%s2 + $0xd0] sm:$0xff]
        %v466 = vld [vmem:[%s2 + $0xd8] sm:$0xff]
        %v467 = vld [vmem:[%s2 + $0xe0] sm:$0xff]
        %v468 = vld [vmem:[%s2 + $0xe8] sm:$0xff]
        %v469 = vld [vmem:[%s2 + $0xf0] sm:$0xff]
        %v470 = vld [vmem:[%s2 + $0xf8] sm:$0xff]
        %v471 = vld [vmem:[%s2 + $0x100] sm:$0xff]
        %v472 = vld [vmem:[%s2 + $0x108] sm:$0xff]
        %v473 = vld [vmem:[%s2 + $0x110] sm:$0xff]
        %v474 = vld [vmem:[%s2 + $0x118] sm:$0xff]
        %v475 = vld [vmem:[%s2 + $0x120] sm:$0xff]
        %v476 = vld [vmem:[%s2 + $0x128] sm:$0xff]
        %v477 = vld [vmem:[%s2 + $0x130] sm:$0xff]
        %v478 = vld [vmem:[%s2 + $0x138] sm:$0xff]
        %v479 = vld [vmem:[%s2 + $0x140] sm:$0xff]
        %v480 = vld [vmem:[%s2 + $0x148] sm:$0xff]
        %v481 = vld [vmem:[%s2 + $0x150] sm:$0xff]
        %v482 = vld [vmem:[%s2 + $0x158] sm:$0xff]
        %v483 = vld [vmem:[%s2 + $0x160] sm:$0xff]
        %v484 = vld [vmem:[%s2 + $0x168] sm:$0xff]
        %v485 = vld [vmem:[%s2 + $0x170] sm:$0xff]
        %v486 = vld [vmem:[%s2 + $0x178] sm:$0xff]
        %v487 = vld [vmem:[%s2 + $0x180] sm:$0xff]
        %v488 = vld [vmem:[%s2 + $0x188] sm:$0xff]
        %v489 = vld [vmem:[%s2 + $0x190] sm:$0xff]
        %v490 = vld [vmem:[%s2 + $0x198] sm:$0xff]
        %v491 = vld [vmem:[%s2 + $0x1a0] sm:$0xff]
        %v492 = vld [vmem:[%s2 + $0x1a8] sm:$0xff]
        %v493 = vld [vmem:[%s2 + $0x1b0] sm:$0xff]
        %v494 = vld [vmem:[%s2 + $0x1b8] sm:$0xff]
        %v495 = vld [vmem:[%s2 + $0x1c0] sm:$0xff]
        %v496 = vld [vmem:[%s2 + $0x1c8] sm:$0xff]
        %v497 = vld [vmem:[%s2 + $0x1d0] sm:$0xff]
        %v498 = vld [vmem:[%s2 + $0x1d8] sm:$0xff]
        %v499 = vld [vmem:[%s2 + $0x1e0] sm:$0xff]
        %v500 = vld [vmem:[%s2 + $0x1e8] sm:$0xff]
        %v501 = vld [vmem:[%s2 + $0x1f0] sm:$0xff]
        %v502 = vld [vmem:[%s2 + $0x1f8] sm:$0xff]
        %v503 = vld [vmem:[%s2 + $0x200] sm:$0xff]
        %v504 = vld [vmem:[%s2 + $0x208] sm:$0xff]
        %v505 = vld [vmem:[%s2 + $0x210] sm:$0xff]
        %v506 = vld [vmem:[%s2 + $0x218] sm:$0xff]
        %v507 = vld [vmem:[%s2 + $0x220] sm:$0xff]
        %v508 = vld [vmem:[%s2 + $0x228] sm:$0xff]
        %v509 = vld [vmem:[%s2 + $0x230] sm:$0xff]
        %v510 = vld [vmem:[%s2 + $0x238] sm:$0xff]
        %v511 = vld [vmem:[%s2 + $0x240] sm:$0xff]
        %v512 = vld [vmem:[%s2 + $0x248] sm:$0xff]
        %v513 = vld [vmem:[%s2 + $0x250] sm:$0xff]
        %v514 = vld [vmem:[%s2 + $0x258] sm:$0xff]
        %v515 = vld [vmem:[%s2 + $0x260] sm:$0xff]
        %v516 = vld [vmem:[%s2 + $0x268] sm:$0xff]
        %v517 = vld [vmem:[%s2 + $0x270] sm:$0xff]
        %v518 = vld [vmem:[%s2 + $0x278] sm:$0xff]
        %v519 = vld [vmem:[%s2 + $0x280] sm:$0xff]
        %v520 = vld [vmem:[%s2 + $0x288] sm:$0xff]
        %v521 = vld [vmem:[%s2 + $0x290] sm:$0xff]
        %v522 = vld [vmem:[%s2 + $0x298] sm:$0xff]
        %v523 = vld [vmem:[%s2 + $0x2a0] sm:$0xff]
        %v524 = vld [vmem:[%s2 + $0x2a8] sm:$0xff]
        %v525 = vld [vmem:[%s2 + $0x2b0] sm:$0xff]
        %v526 = vld [vmem:[%s2 + $0x2b8] sm:$0xff]
        %v527 = vld [vmem:[%s2 + $0x2c0] sm:$0xff]
        %v528 = vld [vmem:[%s2 + $0x2c8] sm:$0xff]
        %v529 = vld [vmem:[%s2 + $0x2d0] sm:$0xff]
        %v530 = vld [vmem:[%s2 + $0x2d8] sm:$0xff]
        %v531 = vld [vmem:[%s2 + $0x2e0] sm:$0xff]
        %v532 = vld [vmem:[%s2 + $0x2e8] sm:$0xff]
        %v533 = vld [vmem:[%s2 + $0x2f0] sm:$0xff]
        %v534 = vld [vmem:[%s2 + $0x2f8] sm:$0xff]
        %v535 = vld [vmem:[%s2 + $0x300] sm:$0xff]
        %v536 = vld [vmem:[%s2 + $0x308] sm:$0xff]
        %v537 = vld [vmem:[%s2 + $0x310] sm:$0xff]
        %v538 = vld [vmem:[%s2 + $0x318] sm:$0xff]
        %v539 = vld [vmem:[%s2 + $0x320] sm:$0xff]
        %v540 = vld [vmem:[%s2 + $0x328] sm:$0xff]
        %v541 = vld [vmem:[%s2 + $0x330] sm:$0xff]
        %v542 = vld [vmem:[%s2 + $0x338] sm:$0xff]
        %v543 = vld [vmem:[%s2 + $0x340] sm:$0xff]
        %v544 = vld [vmem:[%s2 + $0x348] sm:$0xff]
        %v545 = vld [vmem:[%s2 + $0x350] sm:$0xff]
        %v546 = vld [vmem:[%s2 + $0x358] sm:$0xff]
        %v547 = vld [vmem:[%s2 + $0x360] sm:$0xff]
        %v548 = vld [vmem:[%s2 + $0x368] sm:$0xff]
        %v549 = vld [vmem:[%s2 + $0x370] sm:$0xff]
        %v550 = vld [vmem:[%s2 + $0x378] sm:$0xff]
        %v551 = vld [vmem:[%s2 + $0x380] sm:$0xff]
        %v552 = vld [vmem:[%s2 + $0x388] sm:$0xff]
        %v553 = vld [vmem:[%s2 + $0x390] sm:$0xff]
        %v554 = vld [vmem:[%s2 + $0x398] sm:$0xff]
        %v555 = vld [vmem:[%s2 + $0x3a0] sm:$0xff]
        %v556 = vld [vmem:[%s2 + $0x3a8] sm:$0xff]
        %v557 = vld [vmem:[%s2 + $0x3b0] sm:$0xff]
        %v558 = vld [vmem:[%s2 + $0x3b8] sm:$0xff]
        %v559 = vld [vmem:[%s2 + $0x3c0] sm:$0xff]
        %v560 = vld [vmem:[%s2 + $0x3c8] sm:$0xff]
        %v561 = vld [vmem:[%s2 + $0x3d0] sm:$0xff]
        %v562 = vld [vmem:[%s2 + $0x3d8] sm:$0xff]
        %v563 = vld [vmem:[%s2 + $0x3e0] sm:$0xff]
        %v564 = vld [vmem:[%s2 + $0x3e8] sm:$0xff]
        %v565 = vld [vmem:[%s2 + $0x3f0] sm:$0xff]
        %v566 = vld [vmem:[%s2 + $0x3f8] sm:$0xff]
        %v567 = vld [vmem:[%s2 + $0x400] sm:$0xff]
        %v568 = vld [vmem:[%s2 + $0x408] sm:$0xff]
        %v569 = vld [vmem:[%s2 + $0x410] sm:$0xff]
        %v570 = vld [vmem:[%s2 + $0x418] sm:$0xff]
        %v571 = vld [vmem:[%s2 + $0x420] sm:$0xff]
        %v572 = vld [vmem:[%s2 + $0x428] sm:$0xff]
        %v573 = vld [vmem:[%s2 + $0x430] sm:$0xff]
        %v574 = vld [vmem:[%s2 + $0x438] sm:$0xff]
        %v575 = vld [vmem:[%s2 + $0x440] sm:$0xff]
        %v576 = vld [vmem:[%s2 + $0x448] sm:$0xff]
        %v577 = vld [vmem:[%s2 + $0x450] sm:$0xff]
        %v578 = vld [vmem:[%s2 + $0x458] sm:$0xff]
        %v579 = vld [vmem:[%s2 + $0x460] sm:$0xff]
        %v580 = vld [vmem:[%s2 + $0x468] sm:$0xff]
        %v581 = vld [vmem:[%s2 + $0x470] sm:$0xff]
        %v582 = vld [vmem:[%s2 + $0x478] sm:$0xff]
        %v583 = vld [vmem:[%s2 + $0x480] sm:$0xff]
        %v584 = vld [vmem:[%s2 + $0x488] sm:$0xff]
        %v585 = vld [vmem:[%s2 + $0x490] sm:$0xff]
        %v586 = vld [vmem:[%s2 + $0x498] sm:$0xff]
        %v587 = vld [vmem:[%s2 + $0x4a0] sm:$0xff]
        %v588 = vld [vmem:[%s2 + $0x4a8] sm:$0xff]
        %v589 = vld [vmem:[%s2 + $0x4b0] sm:$0xff]
        %v590 = vld [vmem:[%s2 + $0x4b8] sm:$0xff]
        %v591 = vld [vmem:[%s2 + $0x4c0] sm:$0xff]
        %v592 = vld [vmem:[%s2 + $0x4c8] sm:$0xff]
        %v593 = vld [vmem:[%s2 + $0x4d0] sm:$0xff]
        %v594 = vld [vmem:[%s2 + $0x4d8] sm:$0xff]
        %v595 = vld [vmem:[%s2 + $0x4e0] sm:$0xff]
        %v596 = vld [vmem:[%s2 + $0x4e8] sm:$0xff]
        %v597 = vld [vmem:[%s2 + $0x4f0] sm:$0xff]
        %v598 = vld [vmem:[%s2 + $0x4f8] sm:$0xff]
        %v599 = vld [vmem:[%s2 + $0x500] sm:$0xff]
        %v600 = vld [vmem:[%s2 + $0x508] sm:$0xff]
        %v601 = vld [vmem:[%s2 + $0x510] sm:$0xff]
        %v602 = vld [vmem:[%s2 + $0x518] sm:$0xff]
        %v603 = vld [vmem:[%s2 + $0x520] sm:$0xff]
        %v604 = vld [vmem:[%s2 + $0x528] sm:$0xff]
        %v605 = vld [vmem:[%s2 + $0x530] sm:$0xff]
        %v606 = vld [vmem:[%s2 + $0x538] sm:$0xff]
        %v607 = vld [vmem:[%s2 + $0x540] sm:$0xff]
        %v608 = vld [vmem:[%s2 + $0x548] sm:$0xff]
        %v609 = vld [vmem:[%s2 + $0x550] sm:$0xff]
        %v610 = vld [vmem:[%s2 + $0x558] sm:$0xff]
        %v611 = vld [vmem:[%s2 + $0x560] sm:$0xff]
        %v612 = vld [vmem:[%s2 + $0x568] sm:$0xff]
        %v613 = vld [vmem:[%s2 + $0x570] sm:$0xff]
        %v614 = vld [vmem:[%s2 + $0x578] sm:$0xff]
        %v615 = vld [vmem:[%s2 + $0x580] sm:$0xff]
        %v616 = vld [vmem:[%s2 + $0x588] sm:$0xff]
        %v617 = vld [vmem:[%s2 + $0x590] sm:$0xff]
        %v618 = vld [vmem:[%s2 + $0x598] sm:$0xff]
        %v619 = vld [vmem:[%s2 + $0x5a0] sm:$0xff]
        %v620 = vld [vmem:[%s2 + $0x5a8] sm:$0xff]
        %v621 = vld [vmem:[%s2 + $0x5b0] sm:$0xff]
        %v622 = vld [vmem:[%s2 + $0x5b8] sm:$0xff]
        %v623 = vld [vmem:[%s2 + $0x5c0] sm:$0xff]
        %v624 = vld [vmem:[%s2 + $0x5c8] sm:$0xff]
        %v625 = vld [vmem:[%s2 + $0x5d0] sm:$0xff]
        %v626 = vld [vmem:[%s2 + $0x5d8] sm:$0xff]
        %v627 = vld [vmem:[%s2 + $0x5e0] sm:$0xff]
        %v628 = vld [vmem:[%s2 + $0x5e8] sm:$0xff]
        %v629 = vld [vmem:[%s2 + $0x5f0] sm:$0xff]
        %v630 = vld [vmem:[%s2 + $0x5f8] sm:$0xff]
        %v631 = vld [vmem:[%s2 + $0x600] sm:$0xff]
        %v632 = vld [vmem:[%s2 + $0x608] sm:$0xff]
        %v633 = vld [vmem:[%s2 + $0x610] sm:$0xff]
        %v634 = vld [vmem:[%s2 + $0x618] sm:$0xff]
        %v635 = vld [vmem:[%s3] sm:$0xf]
        %v637 = vlaneseq
        %v638 = vshrl.u32 %v637, 7
        %v639 = vsub.s32 0, %v638
        %v640 = vrot.slane %v635, %v639
        %v641 = vlaneseq
        %v642 = vshrl.u32 %v641, 7
        %v643 = vsub.s32 1, %v642
        %v644 = vrot.slane %v635, %v643
        %v645 = vlaneseq
        %v646 = vshrl.u32 %v645, 7
        %v647 = vsub.s32 2, %v646
        %v648 = vrot.slane %v635, %v647
        %v649 = vlaneseq
        %v650 = vshrl.u32 %v649, 7
        %v651 = vsub.s32 3, %v650
        %v652 = vrot.slane %v635, %v651
        %v665 = vunpack.c.l.b16 %v431
        %v666 = vunpack.c.h.b16 %v431
        %v667 = vunpack.c.l.b16 %v432
        %v668 = vunpack.c.h.b16 %v432
        %v669 = vunpack.c.l.b16 %v433
        %v670 = vunpack.c.h.b16 %v433
        %v671 = vunpack.c.l.b16 %v434
        %v672 = vunpack.c.l.b16 %v435
        %v673 = vunpack.c.h.b16 %v435
        %v674 = vunpack.c.l.b16 %v436
        %v675 = vunpack.c.h.b16 %v436
        %v676 = vunpack.c.l.b16 %v437
        %v677 = vunpack.c.h.b16 %v437
        %v678 = vunpack.c.l.b16 %v438
        %v679 = vpack.c.b16 %v672, %v665
        %v680 = vpack.c.b16 %v673, %v666
        %v681 = vpack.c.b16 %v674, %v667
        %v682 = vpack.c.b16 %v675, %v668
        %v683 = vpack.c.b16 %v676, %v669
        %v684 = vpack.c.b16 %v677, %v670
        %v685 = vpack.c.b16 %v678, %v671
        %v888 = vunpack.c.l.b16 %v439
        %v889 = vunpack.c.h.b16 %v439
        %v890 = vunpack.c.l.b16 %v440
        %v891 = vunpack.c.h.b16 %v440
        %v892 = vunpack.c.l.b16 %v441
        %v893 = vunpack.c.h.b16 %v441
        %v894 = vunpack.c.l.b16 %v442
        %v895 = vunpack.c.h.b16 %v442
        %v896 = vunpack.c.l.b16 %v443
        %v897 = vunpack.c.h.b16 %v443
        %v898 = vunpack.c.l.b16 %v444
        %v899 = vunpack.c.h.b16 %v444
        %v900 = vunpack.c.l.b16 %v445
        %v901 = vunpack.c.h.b16 %v445
        %v902 = vunpack.c.l.b16 %v446
        %v903 = vunpack.c.h.b16 %v446
        %v904 = vunpack.c.l.b16 %v447
        %v905 = vunpack.c.h.b16 %v447
        %v906 = vunpack.c.l.b16 %v448
        %v907 = vunpack.c.h.b16 %v448
        %v908 = vunpack.c.l.b16 %v449
        %v909 = vunpack.c.h.b16 %v449
        %v910 = vunpack.c.l.b16 %v450
        %v911 = vunpack.c.h.b16 %v450
        %v912 = vunpack.c.l.b16 %v451
        %v913 = vunpack.c.h.b16 %v451
        %v914 = vunpack.c.l.b16 %v452
        %v915 = vunpack.c.h.b16 %v452
        %v916 = vunpack.c.l.b16 %v453
        %v917 = vunpack.c.h.b16 %v453
        %v918 = vunpack.c.l.b16 %v454
        %v919 = vunpack.c.h.b16 %v454
        %v920 = vunpack.c.l.b16 %v455
        %v921 = vunpack.c.h.b16 %v455
        %v922 = vunpack.c.l.b16 %v456
        %v923 = vunpack.c.h.b16 %v456
        %v924 = vunpack.c.l.b16 %v457
        %v925 = vunpack.c.h.b16 %v457
        %v926 = vunpack.c.l.b16 %v458
        %v927 = vunpack.c.h.b16 %v458
        %v928 = vunpack.c.l.b16 %v459
        %v929 = vunpack.c.h.b16 %v459
        %v930 = vunpack.c.l.b16 %v460
        %v931 = vunpack.c.h.b16 %v460
        %v932 = vunpack.c.l.b16 %v461
        %v933 = vunpack.c.h.b16 %v461
        %v934 = vunpack.c.l.b16 %v462
        %v935 = vunpack.c.h.b16 %v462
        %v936 = vunpack.c.l.b16 %v463
        %v937 = vunpack.c.h.b16 %v463
        %v938 = vunpack.c.l.b16 %v464
        %v939 = vunpack.c.h.b16 %v464
        %v940 = vunpack.c.l.b16 %v465
        %v941 = vunpack.c.h.b16 %v465
        %v942 = vunpack.c.l.b16 %v466
        %v943 = vunpack.c.h.b16 %v466
        %v944 = vunpack.c.l.b16 %v467
        %v945 = vunpack.c.h.b16 %v467
        %v946 = vunpack.c.l.b16 %v468
        %v947 = vunpack.c.h.b16 %v468
        %v948 = vunpack.c.l.b16 %v469
        %v949 = vunpack.c.h.b16 %v469
        %v950 = vunpack.c.l.b16 %v470
        %v951 = vunpack.c.h.b16 %v470
        %v952 = vunpack.c.l.b16 %v471
        %v953 = vunpack.c.h.b16 %v471
        %v954 = vunpack.c.l.b16 %v472
        %v955 = vunpack.c.h.b16 %v472
        %v956 = vunpack.c.l.b16 %v473
        %v957 = vunpack.c.h.b16 %v473
        %v958 = vunpack.c.l.b16 %v474
        %v959 = vunpack.c.h.b16 %v474
        %v960 = vunpack.c.l.b16 %v475
        %v961 = vunpack.c.h.b16 %v475
        %v962 = vunpack.c.l.b16 %v476
        %v963 = vunpack.c.h.b16 %v476
        %v964 = vunpack.c.l.b16 %v477
        %v965 = vunpack.c.h.b16 %v477
        %v966 = vunpack.c.l.b16 %v478
        %v967 = vunpack.c.h.b16 %v478
        %v968 = vunpack.c.l.b16 %v479
        %v969 = vunpack.c.h.b16 %v479
        %v970 = vunpack.c.l.b16 %v480
        %v971 = vunpack.c.h.b16 %v480
        %v972 = vunpack.c.l.b16 %v481
        %v973 = vunpack.c.h.b16 %v481
        %v974 = vunpack.c.l.b16 %v482
        %v975 = vunpack.c.h.b16 %v482
        %v976 = vunpack.c.l.b16 %v483
        %v977 = vunpack.c.h.b16 %v483
        %v978 = vunpack.c.l.b16 %v484
        %v979 = vunpack.c.h.b16 %v484
        %v980 = vunpack.c.l.b16 %v485
        %v981 = vunpack.c.h.b16 %v485
        %v982 = vunpack.c.l.b16 %v486
        %v983 = vunpack.c.h.b16 %v486
        %v984 = vunpack.c.l.b16 %v487
        %v985 = vunpack.c.h.b16 %v487
        %v986 = vunpack.c.l.b16 %v488
        %v987 = vunpack.c.h.b16 %v488
        %v988 = vunpack.c.l.b16 %v489
        %v989 = vunpack.c.h.b16 %v489
        %v990 = vunpack.c.l.b16 %v490
        %v991 = vunpack.c.h.b16 %v490
        %v992 = vunpack.c.l.b16 %v491
        %v993 = vunpack.c.h.b16 %v491
        %v994 = vunpack.c.l.b16 %v492
        %v995 = vunpack.c.h.b16 %v492
        %v996 = vunpack.c.l.b16 %v493
        %v997 = vunpack.c.h.b16 %v493
        %v998 = vunpack.c.l.b16 %v494
        %v999 = vunpack.c.h.b16 %v494
        %v1000 = vunpack.c.l.b16 %v495
        %v1001 = vunpack.c.h.b16 %v495
        %v1002 = vunpack.c.l.b16 %v496
        %v1003 = vunpack.c.h.b16 %v496
        %v1004 = vunpack.c.l.b16 %v497
        %v1005 = vunpack.c.h.b16 %v497
        %v1006 = vunpack.c.l.b16 %v498
        %v1007 = vunpack.c.h.b16 %v498
        %v1008 = vunpack.c.l.b16 %v499
        %v1009 = vunpack.c.h.b16 %v499
        %v1010 = vunpack.c.l.b16 %v500
        %v1011 = vunpack.c.h.b16 %v500
        %v1012 = vunpack.c.l.b16 %v501
        %v1013 = vunpack.c.h.b16 %v501
        %v1014 = vunpack.c.l.b16 %v502
        %v1015 = vunpack.c.h.b16 %v502
        %v1016 = vunpack.c.l.b16 %v503
        %v1017 = vunpack.c.h.b16 %v503
        %v1018 = vunpack.c.l.b16 %v504
        %v1019 = vunpack.c.h.b16 %v504
        %v1020 = vunpack.c.l.b16 %v505
        %v1021 = vunpack.c.h.b16 %v505
        %v1022 = vunpack.c.l.b16 %v506
        %v1023 = vunpack.c.h.b16 %v506
        %v1024 = vunpack.c.l.b16 %v507
        %v1025 = vunpack.c.h.b16 %v507
        %v1026 = vunpack.c.l.b16 %v508
        %v1027 = vunpack.c.h.b16 %v508
        %v1028 = vunpack.c.l.b16 %v509
        %v1029 = vunpack.c.h.b16 %v509
        %v1030 = vunpack.c.l.b16 %v510
        %v1031 = vunpack.c.h.b16 %v510
        %v1032 = vunpack.c.l.b16 %v511
        %v1033 = vunpack.c.h.b16 %v511
        %v1034 = vunpack.c.l.b16 %v512
        %v1035 = vunpack.c.h.b16 %v512
        %v1036 = vunpack.c.l.b16 %v513
        %v1037 = vunpack.c.h.b16 %v513
        %v1038 = vunpack.c.l.b16 %v514
        %v1039 = vunpack.c.h.b16 %v514
        %v1040 = vunpack.c.l.b16 %v515
        %v1041 = vunpack.c.h.b16 %v515
        %v1042 = vunpack.c.l.b16 %v516
        %v1043 = vunpack.c.h.b16 %v516
        %v1044 = vunpack.c.l.b16 %v517
        %v1045 = vunpack.c.h.b16 %v517
        %v1046 = vunpack.c.l.b16 %v518
        %v1047 = vunpack.c.h.b16 %v518
        %v1048 = vunpack.c.l.b16 %v519
        %v1049 = vunpack.c.h.b16 %v519
        %v1050 = vunpack.c.l.b16 %v520
        %v1051 = vunpack.c.h.b16 %v520
        %v1052 = vunpack.c.l.b16 %v521
        %v1053 = vunpack.c.h.b16 %v521
        %v1054 = vunpack.c.l.b16 %v522
        %v1055 = vunpack.c.h.b16 %v522
        %v1056 = vunpack.c.l.b16 %v523
        %v1057 = vunpack.c.h.b16 %v523
        %v1058 = vunpack.c.l.b16 %v524
        %v1059 = vunpack.c.h.b16 %v524
        %v1060 = vunpack.c.l.b16 %v525
        %v1061 = vunpack.c.h.b16 %v525
        %v1062 = vunpack.c.l.b16 %v526
        %v1063 = vunpack.c.h.b16 %v526
        %v1064 = vunpack.c.l.b16 %v527
        %v1065 = vunpack.c.h.b16 %v527
        %v1066 = vunpack.c.l.b16 %v528
        %v1067 = vunpack.c.h.b16 %v528
        %v1068 = vunpack.c.l.b16 %v529
        %v1069 = vunpack.c.h.b16 %v529
        %v1070 = vunpack.c.l.b16 %v530
        %v1071 = vunpack.c.h.b16 %v530
        %v1072 = vunpack.c.l.b16 %v531
        %v1073 = vunpack.c.h.b16 %v531
        %v1074 = vunpack.c.l.b16 %v532
        %v1075 = vunpack.c.h.b16 %v532
        %v1076 = vunpack.c.l.b16 %v533
        %v1077 = vunpack.c.h.b16 %v533
        %v1078 = vunpack.c.l.b16 %v534
        %v1079 = vunpack.c.h.b16 %v534
        %v1080 = vunpack.c.l.b16 %v535
        %v1081 = vunpack.c.h.b16 %v535
        %v1082 = vunpack.c.l.b16 %v536
        %v1083 = vunpack.c.h.b16 %v536
        %v1084 = vunpack.c.l.b16 %v537
        %v1085 = vunpack.c.h.b16 %v537
        %v1086 = vunpack.c.l.b16 %v538
        %v1087 = vunpack.c.h.b16 %v538
        %v1088 = vunpack.c.l.b16 %v539
        %v1089 = vunpack.c.h.b16 %v539
        %v1090 = vunpack.c.l.b16 %v540
        %v1091 = vunpack.c.h.b16 %v540
        %v1092 = vunpack.c.l.b16 %v541
        %v1093 = vunpack.c.h.b16 %v541
        %v1094 = vunpack.c.l.b16 %v542
        %v1095 = vunpack.c.h.b16 %v542
        %v1096 = vunpack.c.l.b16 %v543
        %v1097 = vunpack.c.h.b16 %v543
        %v1098 = vunpack.c.l.b16 %v544
        %v1099 = vunpack.c.h.b16 %v544
        %v1100 = vunpack.c.l.b16 %v545
        %v1101 = vunpack.c.h.b16 %v545
        %v1102 = vunpack.c.l.b16 %v546
        %v1103 = vunpack.c.h.b16 %v546
        %v1104 = vunpack.c.l.b16 %v547
        %v1105 = vunpack.c.h.b16 %v547
        %v1106 = vunpack.c.l.b16 %v548
        %v1107 = vunpack.c.h.b16 %v548
        %v1108 = vunpack.c.l.b16 %v549
        %v1109 = vunpack.c.h.b16 %v549
        %v1110 = vunpack.c.l.b16 %v550
        %v1111 = vunpack.c.h.b16 %v550
        %v1112 = vunpack.c.l.b16 %v551
        %v1113 = vunpack.c.h.b16 %v551
        %v1114 = vunpack.c.l.b16 %v552
        %v1115 = vunpack.c.h.b16 %v552
        %v1116 = vunpack.c.l.b16 %v553
        %v1117 = vunpack.c.h.b16 %v553
        %v1118 = vunpack.c.l.b16 %v554
        %v1119 = vunpack.c.h.b16 %v554
        %v1120 = vunpack.c.l.b16 %v555
        %v1121 = vunpack.c.h.b16 %v555
        %v1122 = vunpack.c.l.b16 %v556
        %v1123 = vunpack.c.h.b16 %v556
        %v1124 = vunpack.c.l.b16 %v557
        %v1125 = vunpack.c.h.b16 %v557
        %v1126 = vunpack.c.l.b16 %v558
        %v1127 = vunpack.c.h.b16 %v558
        %v1128 = vunpack.c.l.b16 %v559
        %v1129 = vunpack.c.h.b16 %v559
        %v1130 = vunpack.c.l.b16 %v560
        %v1131 = vunpack.c.h.b16 %v560
        %v1132 = vunpack.c.l.b16 %v561
        %v1133 = vunpack.c.h.b16 %v561
        %v1134 = vunpack.c.l.b16 %v562
        %v1135 = vunpack.c.h.b16 %v562
        %v1136 = vunpack.c.l.b16 %v563
        %v1137 = vunpack.c.h.b16 %v563
        %v1138 = vunpack.c.l.b16 %v564
        %v1139 = vunpack.c.h.b16 %v564
        %v1140 = vunpack.c.l.b16 %v565
        %v1141 = vunpack.c.h.b16 %v565
        %v1142 = vunpack.c.l.b16 %v566
        %v1143 = vunpack.c.h.b16 %v566
        %v1144 = vunpack.c.l.b16 %v567
        %v1145 = vunpack.c.h.b16 %v567
        %v1146 = vunpack.c.l.b16 %v568
        %v1147 = vunpack.c.h.b16 %v568
        %v1148 = vunpack.c.l.b16 %v569
        %v1149 = vunpack.c.h.b16 %v569
        %v1150 = vunpack.c.l.b16 %v570
        %v1151 = vunpack.c.h.b16 %v570
        %v1152 = vunpack.c.l.b16 %v571
        %v1153 = vunpack.c.h.b16 %v571
        %v1154 = vunpack.c.l.b16 %v572
        %v1155 = vunpack.c.h.b16 %v572
        %v1156 = vunpack.c.l.b16 %v573
        %v1157 = vunpack.c.h.b16 %v573
        %v1158 = vunpack.c.l.b16 %v574
        %v1159 = vunpack.c.h.b16 %v574
        %v1160 = vunpack.c.l.b16 %v575
        %v1161 = vunpack.c.h.b16 %v575
        %v1162 = vunpack.c.l.b16 %v576
        %v1163 = vunpack.c.h.b16 %v576
        %v1164 = vunpack.c.l.b16 %v577
        %v1165 = vunpack.c.h.b16 %v577
        %v1166 = vunpack.c.l.b16 %v578
        %v1167 = vunpack.c.h.b16 %v578
        %v1168 = vunpack.c.l.b16 %v579
        %v1169 = vunpack.c.h.b16 %v579
        %v1170 = vunpack.c.l.b16 %v580
        %v1171 = vunpack.c.h.b16 %v580
        %v1172 = vunpack.c.l.b16 %v581
        %v1173 = vunpack.c.h.b16 %v581
        %v1174 = vunpack.c.l.b16 %v582
        %v1175 = vunpack.c.h.b16 %v582
        %v1176 = vunpack.c.l.b16 %v583
        %v1177 = vunpack.c.h.b16 %v583
        %v1178 = vunpack.c.l.b16 %v584
        %v1179 = vunpack.c.h.b16 %v584
        %v1180 = vunpack.c.l.b16 %v585
        %v1181 = vunpack.c.h.b16 %v585
        %v1182 = vunpack.c.l.b16 %v586
        %v1183 = vunpack.c.h.b16 %v586
        %v1184 = vunpack.c.l.b16 %v587
        %v1185 = vunpack.c.h.b16 %v587
        %v1186 = vunpack.c.l.b16 %v588
        %v1187 = vunpack.c.h.b16 %v588
        %v1188 = vunpack.c.l.b16 %v589
        %v1189 = vunpack.c.h.b16 %v589
        %v1190 = vunpack.c.l.b16 %v590
        %v1191 = vunpack.c.h.b16 %v590
        %v1192 = vunpack.c.l.b16 %v591
        %v1193 = vunpack.c.h.b16 %v591
        %v1194 = vunpack.c.l.b16 %v592
        %v1195 = vunpack.c.h.b16 %v592
        %v1196 = vunpack.c.l.b16 %v593
        %v1197 = vunpack.c.h.b16 %v593
        %v1198 = vunpack.c.l.b16 %v594
        %v1199 = vunpack.c.h.b16 %v594
        %v1200 = vunpack.c.l.b16 %v595
        %v1201 = vunpack.c.h.b16 %v595
        %v1202 = vunpack.c.l.b16 %v596
        %v1203 = vunpack.c.h.b16 %v596
        %v1204 = vunpack.c.l.b16 %v597
        %v1205 = vunpack.c.h.b16 %v597
        %v1206 = vunpack.c.l.b16 %v598
        %v1207 = vunpack.c.h.b16 %v598
        %v1208 = vunpack.c.l.b16 %v599
        %v1209 = vunpack.c.h.b16 %v599
        %v1210 = vunpack.c.l.b16 %v600
        %v1211 = vunpack.c.h.b16 %v600
        %v1212 = vunpack.c.l.b16 %v601
        %v1213 = vunpack.c.h.b16 %v601
        %v1214 = vunpack.c.l.b16 %v602
        %v1215 = vunpack.c.h.b16 %v602
        %v1216 = vunpack.c.l.b16 %v603
        %v1217 = vunpack.c.h.b16 %v603
        %v1218 = vunpack.c.l.b16 %v604
        %v1219 = vunpack.c.h.b16 %v604
        %v1220 = vunpack.c.l.b16 %v605
        %v1221 = vunpack.c.h.b16 %v605
        %v1222 = vunpack.c.l.b16 %v606
        %v1223 = vunpack.c.h.b16 %v606
        %v1224 = vunpack.c.l.b16 %v607
        %v1225 = vunpack.c.h.b16 %v607
        %v1226 = vunpack.c.l.b16 %v608
        %v1227 = vunpack.c.h.b16 %v608
        %v1228 = vunpack.c.l.b16 %v609
        %v1229 = vunpack.c.h.b16 %v609
        %v1230 = vunpack.c.l.b16 %v610
        %v1231 = vunpack.c.h.b16 %v610
        %v1232 = vunpack.c.l.b16 %v611
        %v1233 = vunpack.c.h.b16 %v611
        %v1234 = vunpack.c.l.b16 %v612
        %v1235 = vunpack.c.h.b16 %v612
        %v1236 = vunpack.c.l.b16 %v613
        %v1237 = vunpack.c.h.b16 %v613
        %v1238 = vunpack.c.l.b16 %v614
        %v1239 = vunpack.c.h.b16 %v614
        %v1240 = vunpack.c.l.b16 %v615
        %v1241 = vunpack.c.h.b16 %v615
        %v1242 = vunpack.c.l.b16 %v616
        %v1243 = vunpack.c.h.b16 %v616
        %v1244 = vunpack.c.l.b16 %v617
        %v1245 = vunpack.c.h.b16 %v617
        %v1246 = vunpack.c.l.b16 %v618
        %v1247 = vunpack.c.h.b16 %v618
        %v1248 = vunpack.c.l.b16 %v619
        %v1249 = vunpack.c.h.b16 %v619
        %v1250 = vunpack.c.l.b16 %v620
        %v1251 = vunpack.c.h.b16 %v620
        %v1252 = vunpack.c.l.b16 %v621
        %v1253 = vunpack.c.h.b16 %v621
        %v1254 = vunpack.c.l.b16 %v622
        %v1255 = vunpack.c.h.b16 %v622
        %v1256 = vunpack.c.l.b16 %v623
        %v1257 = vunpack.c.h.b16 %v623
        %v1258 = vunpack.c.l.b16 %v624
        %v1259 = vunpack.c.h.b16 %v624
        %v1260 = vunpack.c.l.b16 %v625
        %v1261 = vunpack.c.h.b16 %v625
        %v1262 = vunpack.c.l.b16 %v626
        %v1263 = vunpack.c.h.b16 %v626
        %v1264 = vunpack.c.l.b16 %v627
        %v1265 = vunpack.c.h.b16 %v627
        %v1266 = vunpack.c.l.b16 %v628
        %v1267 = vunpack.c.h.b16 %v628
        %v1268 = vunpack.c.l.b16 %v629
        %v1269 = vunpack.c.h.b16 %v629
        %v1270 = vunpack.c.l.b16 %v630
        %v1271 = vunpack.c.h.b16 %v630
        %v1272 = vunpack.c.l.b16 %v631
        %v1273 = vunpack.c.h.b16 %v631
        %v1274 = vunpack.c.l.b16 %v632
        %v1275 = vunpack.c.h.b16 %v632
        %v1276 = vunpack.c.l.b16 %v633
        %v1277 = vunpack.c.h.b16 %v633
        %v1278 = vunpack.c.l.b16 %v634
        %v1279 = vunpack.c.h.b16 %v634
        %v1280 = vpack.c.b16 %v892, %v888
        %v1281 = vpack.c.b16 %v893, %v889
        %v1282 = vpack.c.b16 %v894, %v890
        %v1283 = vpack.c.b16 %v895, %v891
        %v1284 = vpack.c.b16 %v900, %v896
        %v1285 = vpack.c.b16 %v901, %v897
        %v1286 = vpack.c.b16 %v902, %v898
        %v1287 = vpack.c.b16 %v903, %v899
        %v1288 = vpack.c.b16 %v908, %v904
        %v1289 = vpack.c.b16 %v909, %v905
        %v1290 = vpack.c.b16 %v910, %v906
        %v1291 = vpack.c.b16 %v911, %v907
        %v1292 = vpack.c.b16 %v916, %v912
        %v1293 = vpack.c.b16 %v917, %v913
        %v1294 = vpack.c.b16 %v918, %v914
        %v1295 = vpack.c.b16 %v919, %v915
        %v1296 = vpack.c.b16 %v924, %v920
        %v1297 = vpack.c.b16 %v925, %v921
        %v1298 = vpack.c.b16 %v926, %v922
        %v1299 = vpack.c.b16 %v927, %v923
        %v1300 = vpack.c.b16 %v932, %v928
        %v1301 = vpack.c.b16 %v933, %v929
        %v1302 = vpack.c.b16 %v934, %v930
        %v1303 = vpack.c.b16 %v935, %v931
        %v1304 = vpack.c.b16 %v940, %v936
        %v1305 = vpack.c.b16 %v941, %v937
        %v1306 = vpack.c.b16 %v942, %v938
        %v1307 = vpack.c.b16 %v943, %v939
        %v1308 = vpack.c.b16 %v948, %v944
        %v1309 = vpack.c.b16 %v949, %v945
        %v1310 = vpack.c.b16 %v950, %v946
        %v1311 = vpack.c.b16 %v951, %v947
        %v1312 = vpack.c.b16 %v956, %v952
        %v1313 = vpack.c.b16 %v957, %v953
        %v1314 = vpack.c.b16 %v958, %v954
        %v1315 = vpack.c.b16 %v959, %v955
        %v1316 = vpack.c.b16 %v964, %v960
        %v1317 = vpack.c.b16 %v965, %v961
        %v1318 = vpack.c.b16 %v966, %v962
        %v1319 = vpack.c.b16 %v967, %v963
        %v1320 = vpack.c.b16 %v972, %v968
        %v1321 = vpack.c.b16 %v973, %v969
        %v1322 = vpack.c.b16 %v974, %v970
        %v1323 = vpack.c.b16 %v975, %v971
        %v1324 = vpack.c.b16 %v980, %v976
        %v1325 = vpack.c.b16 %v981, %v977
        %v1326 = vpack.c.b16 %v982, %v978
        %v1327 = vpack.c.b16 %v983, %v979
        %v1328 = vpack.c.b16 %v988, %v984
        %v1329 = vpack.c.b16 %v989, %v985
        %v1330 = vpack.c.b16 %v990, %v986
        %v1331 = vpack.c.b16 %v991, %v987
        %v1332 = vpack.c.b16 %v996, %v992
        %v1333 = vpack.c.b16 %v997, %v993
        %v1334 = vpack.c.b16 %v998, %v994
        %v1335 = vpack.c.b16 %v999, %v995
        %v1336 = vpack.c.b16 %v1004, %v1000
        %v1337 = vpack.c.b16 %v1005, %v1001
        %v1338 = vpack.c.b16 %v1006, %v1002
        %v1339 = vpack.c.b16 %v1007, %v1003
        %v1340 = vpack.c.b16 %v1012, %v1008
        %v1341 = vpack.c.b16 %v1013, %v1009
        %v1342 = vpack.c.b16 %v1014, %v1010
        %v1343 = vpack.c.b16 %v1015, %v1011
        %v1344 = vpack.c.b16 %v1020, %v1016
        %v1345 = vpack.c.b16 %v1021, %v1017
        %v1346 = vpack.c.b16 %v1022, %v1018
        %v1347 = vpack.c.b16 %v1023, %v1019
        %v1348 = vpack.c.b16 %v1028, %v1024
        %v1349 = vpack.c.b16 %v1029, %v1025
        %v1350 = vpack.c.b16 %v1030, %v1026
        %v1351 = vpack.c.b16 %v1031, %v1027
        %v1352 = vpack.c.b16 %v1036, %v1032
        %v1353 = vpack.c.b16 %v1037, %v1033
        %v1354 = vpack.c.b16 %v1038, %v1034
        %v1355 = vpack.c.b16 %v1039, %v1035
        %v1356 = vpack.c.b16 %v1044, %v1040
        %v1357 = vpack.c.b16 %v1045, %v1041
        %v1358 = vpack.c.b16 %v1046, %v1042
        %v1359 = vpack.c.b16 %v1047, %v1043
        %v1360 = vpack.c.b16 %v1052, %v1048
        %v1361 = vpack.c.b16 %v1053, %v1049
        %v1362 = vpack.c.b16 %v1054, %v1050
        %v1363 = vpack.c.b16 %v1055, %v1051
        %v1364 = vpack.c.b16 %v1060, %v1056
        %v1365 = vpack.c.b16 %v1061, %v1057
        %v1366 = vpack.c.b16 %v1062, %v1058
        %v1367 = vpack.c.b16 %v1063, %v1059
        %v1368 = vpack.c.b16 %v1068, %v1064
        %v1369 = vpack.c.b16 %v1069, %v1065
        %v1370 = vpack.c.b16 %v1070, %v1066
        %v1371 = vpack.c.b16 %v1071, %v1067
        %v1372 = vpack.c.b16 %v1076, %v1072
        %v1373 = vpack.c.b16 %v1077, %v1073
        %v1374 = vpack.c.b16 %v1078, %v1074
        %v1375 = vpack.c.b16 %v1079, %v1075
        %v1376 = vpack.c.b16 %v1084, %v1080
        %v1377 = vpack.c.b16 %v1085, %v1081
        %v1378 = vpack.c.b16 %v1086, %v1082
        %v1379 = vpack.c.b16 %v1087, %v1083
        %v1380 = vpack.c.b16 %v1092, %v1088
        %v1381 = vpack.c.b16 %v1093, %v1089
        %v1382 = vpack.c.b16 %v1094, %v1090
        %v1383 = vpack.c.b16 %v1095, %v1091
        %v1384 = vpack.c.b16 %v1100, %v1096
        %v1385 = vpack.c.b16 %v1101, %v1097
        %v1386 = vpack.c.b16 %v1102, %v1098
        %v1387 = vpack.c.b16 %v1103, %v1099
        %v1388 = vpack.c.b16 %v1108, %v1104
        %v1389 = vpack.c.b16 %v1109, %v1105
        %v1390 = vpack.c.b16 %v1110, %v1106
        %v1391 = vpack.c.b16 %v1111, %v1107
        %v1392 = vpack.c.b16 %v1116, %v1112
        %v1393 = vpack.c.b16 %v1117, %v1113
        %v1394 = vpack.c.b16 %v1118, %v1114
        %v1395 = vpack.c.b16 %v1119, %v1115
        %v1396 = vpack.c.b16 %v1124, %v1120
        %v1397 = vpack.c.b16 %v1125, %v1121
        %v1398 = vpack.c.b16 %v1126, %v1122
        %v1399 = vpack.c.b16 %v1127, %v1123
        %v1400 = vpack.c.b16 %v1132, %v1128
        %v1401 = vpack.c.b16 %v1133, %v1129
        %v1402 = vpack.c.b16 %v1134, %v1130
        %v1403 = vpack.c.b16 %v1135, %v1131
        %v1404 = vpack.c.b16 %v1140, %v1136
        %v1405 = vpack.c.b16 %v1141, %v1137
        %v1406 = vpack.c.b16 %v1142, %v1138
        %v1407 = vpack.c.b16 %v1143, %v1139
        %v1408 = vpack.c.b16 %v1148, %v1144
        %v1409 = vpack.c.b16 %v1149, %v1145
        %v1410 = vpack.c.b16 %v1150, %v1146
        %v1411 = vpack.c.b16 %v1151, %v1147
        %v1412 = vpack.c.b16 %v1156, %v1152
        %v1413 = vpack.c.b16 %v1157, %v1153
        %v1414 = vpack.c.b16 %v1158, %v1154
        %v1415 = vpack.c.b16 %v1159, %v1155
        %v1416 = vpack.c.b16 %v1164, %v1160
        %v1417 = vpack.c.b16 %v1165, %v1161
        %v1418 = vpack.c.b16 %v1166, %v1162
        %v1419 = vpack.c.b16 %v1167, %v1163
        %v1420 = vpack.c.b16 %v1172, %v1168
        %v1421 = vpack.c.b16 %v1173, %v1169
        %v1422 = vpack.c.b16 %v1174, %v1170
        %v1423 = vpack.c.b16 %v1175, %v1171
        %v1424 = vpack.c.b16 %v1180, %v1176
        %v1425 = vpack.c.b16 %v1181, %v1177
        %v1426 = vpack.c.b16 %v1182, %v1178
        %v1427 = vpack.c.b16 %v1183, %v1179
        %v1428 = vpack.c.b16 %v1188, %v1184
        %v1429 = vpack.c.b16 %v1189, %v1185
        %v1430 = vpack.c.b16 %v1190, %v1186
        %v1431 = vpack.c.b16 %v1191, %v1187
        %v1432 = vpack.c.b16 %v1196, %v1192
        %v1433 = vpack.c.b16 %v1197, %v1193
        %v1434 = vpack.c.b16 %v1198, %v1194
        %v1435 = vpack.c.b16 %v1199, %v1195
        %v1436 = vpack.c.b16 %v1204, %v1200
        %v1437 = vpack.c.b16 %v1205, %v1201
        %v1438 = vpack.c.b16 %v1206, %v1202
        %v1439 = vpack.c.b16 %v1207, %v1203
        %v1440 = vpack.c.b16 %v1212, %v1208
        %v1441 = vpack.c.b16 %v1213, %v1209
        %v1442 = vpack.c.b16 %v1214, %v1210
        %v1443 = vpack.c.b16 %v1215, %v1211
        %v1444 = vpack.c.b16 %v1220, %v1216
        %v1445 = vpack.c.b16 %v1221, %v1217
        %v1446 = vpack.c.b16 %v1222, %v1218
        %v1447 = vpack.c.b16 %v1223, %v1219
        %v1448 = vpack.c.b16 %v1228, %v1224
        %v1449 = vpack.c.b16 %v1229, %v1225
        %v1450 = vpack.c.b16 %v1230, %v1226
        %v1451 = vpack.c.b16 %v1231, %v1227
        %v1452 = vpack.c.b16 %v1236, %v1232
        %v1453 = vpack.c.b16 %v1237, %v1233
        %v1454 = vpack.c.b16 %v1238, %v1234
        %v1455 = vpack.c.b16 %v1239, %v1235
        %v1456 = vpack.c.b16 %v1244, %v1240
        %v1457 = vpack.c.b16 %v1245, %v1241
        %v1458 = vpack.c.b16 %v1246, %v1242
        %v1459 = vpack.c.b16 %v1247, %v1243
        %v1460 = vpack.c.b16 %v1252, %v1248
        %v1461 = vpack.c.b16 %v1253, %v1249
        %v1462 = vpack.c.b16 %v1254, %v1250
        %v1463 = vpack.c.b16 %v1255, %v1251
        %v1464 = vpack.c.b16 %v1260, %v1256
        %v1465 = vpack.c.b16 %v1261, %v1257
        %v1466 = vpack.c.b16 %v1262, %v1258
        %v1467 = vpack.c.b16 %v1263, %v1259
        %v1468 = vpack.c.b16 %v1268, %v1264
        %v1469 = vpack.c.b16 %v1269, %v1265
        %v1470 = vpack.c.b16 %v1270, %v1266
        %v1471 = vpack.c.b16 %v1271, %v1267
        %v1472 = vpack.c.b16 %v1276, %v1272
        %v1473 = vpack.c.b16 %v1277, %v1273
        %v1474 = vpack.c.b16 %v1278, %v1274
        %v1475 = vpack.c.b16 %v1279, %v1275
        %vm1672 = vcmask 130048
        %v1674 = vsel %vm1672, %v685, 0
        %1676 = vmatprep.subr.bf16.mxu0 %v1309
        %1677 = vmatpush1.bf16.msra.mxu0 %v1308
        %1678 = vmatprep.subr.bf16.mxu0 %v1305
        %1679 = vmatpush1.bf16.msra.mxu0 %v1304
        %1680 = vmatprep.subr.bf16.mxu0 %v1301
        %1681 = vmatpush1.bf16.msra.mxu0 %v1300
        %1682 = vmatprep.subr.bf16.mxu0 %v1297
        %1683 = vmatpush1.bf16.msra.mxu0 %v1296
        %1684 = vmatprep.subr.bf16.mxu0 %v1293
        %1685 = vmatpush1.bf16.msra.mxu0 %v1292
        %1686 = vmatprep.subr.bf16.mxu0 %v1289
        %1687 = vmatpush1.bf16.msra.mxu0 %v1288
        %1688 = vmatprep.subr.bf16.mxu0 %v1285
        %1689 = vmatpush1.bf16.msra.mxu0 %v1284
        %1690 = vmatprep.subr.bf16.mxu0 %v1281
        %1691 = vmatpush1.bf16.msra.mxu0 %v1280
        %1692 = vmatprep.subr.bf16.mxu0 %v1341
        %1693 = vmatpush2.bf16.msra.mxu0 %v1340
        %1694 = vmatprep.subr.bf16.mxu0 %v1337
        %1695 = vmatpush2.bf16.msra.mxu0 %v1336
        %1696 = vmatprep.subr.bf16.mxu0 %v1333
        %1697 = vmatpush2.bf16.msra.mxu0 %v1332
        %1698 = vmatprep.subr.bf16.mxu0 %v1329
        %1699 = vmatpush2.bf16.msra.mxu0 %v1328
        %1700 = vmatprep.subr.bf16.mxu0 %v1325
        %1701 = vmatpush2.bf16.msra.mxu0 %v1324
        %1702 = vmatprep.subr.bf16.mxu0 %v1321
        %1703 = vmatpush2.bf16.msra.mxu0 %v1320
        %1704 = vmatprep.subr.bf16.mxu0 %v1317
        %1705 = vmatpush2.bf16.msra.mxu0 %v1316
        %1706 = vmatprep.subr.bf16.mxu0 %v1313
        %1707 = vmatpush2.bf16.msra.mxu0 %v1312
        %1708 = vmatprep.mubr.bf16.mxu0 %v680
        %1709 = vmatmul.mubr.bf16.gmra.mxu0 %v679
        %v1710 = vpop.f32.mrf.mxu0
        %v1711 = vadd.f32 %v640, %v1710
        %v1712 = vpop.f32.mrf.mxu0
        %v1713 = vadd.f32 %v644, %v1712
        %v1714 = vpop.f32.mrf.mxu0
        %v1715 = vadd.f32 %v640, %v1714
        %v1716 = vpop.f32.mrf.mxu0
        %v1717 = vadd.f32 %v644, %v1716
        %1718 = vdwg.mxu0
        %1719 = vmatprep.subr.bf16.mxu0 %v1373
        %1720 = vmatpush1.bf16.msra.mxu0 %v1372
        %1721 = vmatprep.subr.bf16.mxu0 %v1369
        %1722 = vmatpush1.bf16.msra.mxu0 %v1368
        %1723 = vmatprep.subr.bf16.mxu0 %v1365
        %1724 = vmatpush1.bf16.msra.mxu0 %v1364
        %1725 = vmatprep.subr.bf16.mxu0 %v1361
        %1726 = vmatpush1.bf16.msra.mxu0 %v1360
        %1727 = vmatprep.subr.bf16.mxu0 %v1357
        %1728 = vmatpush1.bf16.msra.mxu0 %v1356
        %1729 = vmatprep.subr.bf16.mxu0 %v1353
        %1730 = vmatpush1.bf16.msra.mxu0 %v1352
        %1731 = vmatprep.subr.bf16.mxu0 %v1349
        %1732 = vmatpush1.bf16.msra.mxu0 %v1348
        %1733 = vmatprep.subr.bf16.mxu0 %v1345
        %1734 = vmatpush1.bf16.msra.mxu0 %v1344
        %1735 = vmatprep.subr.bf16.mxu0 %v1405
        %1736 = vmatpush2.bf16.msra.mxu0 %v1404
        %1737 = vmatprep.subr.bf16.mxu0 %v1401
        %1738 = vmatpush2.bf16.msra.mxu0 %v1400
        %1739 = vmatprep.subr.bf16.mxu0 %v1397
        %1740 = vmatpush2.bf16.msra.mxu0 %v1396
        %1741 = vmatprep.subr.bf16.mxu0 %v1393
        %1742 = vmatpush2.bf16.msra.mxu0 %v1392
        %1743 = vmatprep.subr.bf16.mxu0 %v1389
        %1744 = vmatpush2.bf16.msra.mxu0 %v1388
        %1745 = vmatprep.subr.bf16.mxu0 %v1385
        %1746 = vmatpush2.bf16.msra.mxu0 %v1384
        %1747 = vmatprep.subr.bf16.mxu0 %v1381
        %1748 = vmatpush2.bf16.msra.mxu0 %v1380
        %1749 = vmatprep.subr.bf16.mxu0 %v1377
        %1750 = vmatpush2.bf16.msra.mxu0 %v1376
        %1751 = vmatprep.mubr.bf16.mxu0 %v682
        %1752 = vmatmul.mubr.bf16.gmra.mxu0 %v681
        %v1753 = vpop.f32.mrf.mxu0
        %v1754 = vadd.f32 %v1711, %v1753
        %v1755 = vpop.f32.mrf.mxu0
        %v1756 = vadd.f32 %v1713, %v1755
        %v1757 = vpop.f32.mrf.mxu0
        %v1758 = vadd.f32 %v1715, %v1757
        %v1759 = vpop.f32.mrf.mxu0
        %v1760 = vadd.f32 %v1717, %v1759
        %1761 = vdwg.mxu0
        %1762 = vmatprep.subr.bf16.mxu0 %v1437
        %1763 = vmatpush1.bf16.msra.mxu0 %v1436
        %1764 = vmatprep.subr.bf16.mxu0 %v1433
        %1765 = vmatpush1.bf16.msra.mxu0 %v1432
        %1766 = vmatprep.subr.bf16.mxu0 %v1429
        %1767 = vmatpush1.bf16.msra.mxu0 %v1428
        %1768 = vmatprep.subr.bf16.mxu0 %v1425
        %1769 = vmatpush1.bf16.msra.mxu0 %v1424
        %1770 = vmatprep.subr.bf16.mxu0 %v1421
        %1771 = vmatpush1.bf16.msra.mxu0 %v1420
        %1772 = vmatprep.subr.bf16.mxu0 %v1417
        %1773 = vmatpush1.bf16.msra.mxu0 %v1416
        %1774 = vmatprep.subr.bf16.mxu0 %v1413
        %1775 = vmatpush1.bf16.msra.mxu0 %v1412
        %1776 = vmatprep.subr.bf16.mxu0 %v1409
        %1777 = vmatpush1.bf16.msra.mxu0 %v1408
        %1778 = vmatprep.subr.bf16.mxu0 %v1469
        %1779 = vmatpush2.bf16.msra.mxu0 %v1468
        %1780 = vmatprep.subr.bf16.mxu0 %v1465
        %1781 = vmatpush2.bf16.msra.mxu0 %v1464
        %1782 = vmatprep.subr.bf16.mxu0 %v1461
        %1783 = vmatpush2.bf16.msra.mxu0 %v1460
        %1784 = vmatprep.subr.bf16.mxu0 %v1457
        %1785 = vmatpush2.bf16.msra.mxu0 %v1456
        %1786 = vmatprep.subr.bf16.mxu0 %v1453
        %1787 = vmatpush2.bf16.msra.mxu0 %v1452
        %1788 = vmatprep.subr.bf16.mxu0 %v1449
        %1789 = vmatpush2.bf16.msra.mxu0 %v1448
        %1790 = vmatprep.subr.bf16.mxu0 %v1445
        %1791 = vmatpush2.bf16.msra.mxu0 %v1444
        %1792 = vmatprep.subr.bf16.mxu0 %v1441
        %1793 = vmatpush2.bf16.msra.mxu0 %v1440
        %1794 = vmatprep.mubr.bf16.mxu0 %v684
        %1795 = vmatmul.mubr.bf16.gmra.mxu0 %v683
        %v1796 = vpop.f32.mrf.mxu0
        %v1797 = vadd.f32 %v1754, %v1796
        %v1798 = vpop.f32.mrf.mxu0
        %v1799 = vadd.f32 %v1756, %v1798
        %v1800 = vpop.f32.mrf.mxu0
        %v1801 = vadd.f32 %v1758, %v1800
        %v1802 = vpop.f32.mrf.mxu0
        %v1803 = vadd.f32 %v1760, %v1802
        %1804 = vdwg.mxu0
        %1805 = vmatprep.subr.bf16.mxu0 0
        %1806 = vmatpush1.bf16.msra.mxu0 0
        %1807 = vmatprep.subr.bf16.mxu0 0
        %1808 = vmatpush1.bf16.msra.mxu0 0
        %1809 = vmatprep.subr.bf16.mxu0 0
        %1810 = vmatpush1.bf16.msra.mxu0 0
        %1811 = vmatprep.subr.bf16.mxu0 0
        %1812 = vmatpush1.bf16.msra.mxu0 0
        %1813 = vmatprep.subr.bf16.mxu0 0
        %1814 = vmatpush1.bf16.msra.mxu0 0
        %1815 = vmatprep.subr.bf16.mxu0 0
        %1816 = vmatpush1.bf16.msra.mxu0 0
        %1817 = vmatprep.subr.bf16.mxu0 0
        %1818 = vmatpush1.bf16.msra.mxu0 0
        %1819 = vmatprep.subr.bf16.mxu0 %v1473
        %1820 = vmatpush1.bf16.msra.mxu0 %v1472
        %1821 = vmatprep.subr.bf16.mxu0 0
        %1822 = vmatpush2.bf16.msra.mxu0 0
        %1823 = vmatprep.subr.bf16.mxu0 0
        %1824 = vmatpush2.bf16.msra.mxu0 0
        %1825 = vmatprep.subr.bf16.mxu0 0
        %1826 = vmatpush2.bf16.msra.mxu0 0
        %1827 = vmatprep.subr.bf16.mxu0 0
        %1828 = vmatpush2.bf16.msra.mxu0 0
        %1829 = vmatprep.subr.bf16.mxu0 0
        %1830 = vmatpush2.bf16.msra.mxu0 0
        %1831 = vmatprep.subr.bf16.mxu0 0
        %1832 = vmatpush2.bf16.msra.mxu0 0
        %1833 = vmatprep.subr.bf16.mxu0 0
        %1834 = vmatpush2.bf16.msra.mxu0 0
        %1835 = vmatprep.subr.bf16.mxu0 0
        %1836 = vmatpush2.bf16.msra.mxu0 0
        %1837 = vmatprep.mubr.bf16.mxu0 0
        %1838 = vmatmul.mubr.bf16.gmra.mxu0 %v1674
        %v1839 = vpop.f32.mrf.mxu0
        %v1840 = vadd.f32 %v1797, %v1839
        %v1841 = vpop.f32.mrf.mxu0
        %v1842 = vadd.f32 %v1799, %v1841
        %v1843 = vpop.f32.mrf.mxu0
        %v1844 = vadd.f32 %v1801, %v1843
        %v1845 = vpop.f32.mrf.mxu0
        %v1846 = vadd.f32 %v1803, %v1845
        %1847 = vdwg.mxu0
        %1848 = vmatprep.subr.bf16.mxu0 %v1311
        %1849 = vmatpush1.bf16.msra.mxu0 %v1310
        %1850 = vmatprep.subr.bf16.mxu0 %v1307
        %1851 = vmatpush1.bf16.msra.mxu0 %v1306
        %1852 = vmatprep.subr.bf16.mxu0 %v1303
        %1853 = vmatpush1.bf16.msra.mxu0 %v1302
        %1854 = vmatprep.subr.bf16.mxu0 %v1299
        %1855 = vmatpush1.bf16.msra.mxu0 %v1298
        %1856 = vmatprep.subr.bf16.mxu0 %v1295
        %1857 = vmatpush1.bf16.msra.mxu0 %v1294
        %1858 = vmatprep.subr.bf16.mxu0 %v1291
        %1859 = vmatpush1.bf16.msra.mxu0 %v1290
        %1860 = vmatprep.subr.bf16.mxu0 %v1287
        %1861 = vmatpush1.bf16.msra.mxu0 %v1286
        %1862 = vmatprep.subr.bf16.mxu0 %v1283
        %1863 = vmatpush1.bf16.msra.mxu0 %v1282
        %1864 = vmatprep.subr.bf16.mxu0 %v1343
        %1865 = vmatpush2.bf16.msra.mxu0 %v1342
        %1866 = vmatprep.subr.bf16.mxu0 %v1339
        %1867 = vmatpush2.bf16.msra.mxu0 %v1338
        %1868 = vmatprep.subr.bf16.mxu0 %v1335
        %1869 = vmatpush2.bf16.msra.mxu0 %v1334
        %1870 = vmatprep.subr.bf16.mxu0 %v1331
        %1871 = vmatpush2.bf16.msra.mxu0 %v1330
        %1872 = vmatprep.subr.bf16.mxu0 %v1327
        %1873 = vmatpush2.bf16.msra.mxu0 %v1326
        %1874 = vmatprep.subr.bf16.mxu0 %v1323
        %1875 = vmatpush2.bf16.msra.mxu0 %v1322
        %1876 = vmatprep.subr.bf16.mxu0 %v1319
        %1877 = vmatpush2.bf16.msra.mxu0 %v1318
        %1878 = vmatprep.subr.bf16.mxu0 %v1315
        %1879 = vmatpush2.bf16.msra.mxu0 %v1314
        %1880 = vmatprep.mubr.bf16.mxu0 %v680
        %1881 = vmatmul.mubr.bf16.gmra.mxu0 %v679
        %v1882 = vpop.f32.mrf.mxu0
        %v1883 = vadd.f32 %v648, %v1882
        %v1884 = vpop.f32.mrf.mxu0
        %v1885 = vadd.f32 %v652, %v1884
        %v1886 = vpop.f32.mrf.mxu0
        %v1887 = vadd.f32 %v648, %v1886
        %v1888 = vpop.f32.mrf.mxu0
        %v1889 = vadd.f32 %v652, %v1888
        %1890 = vdwg.mxu0
        %1891 = vmatprep.subr.bf16.mxu0 %v1375
        %1892 = vmatpush1.bf16.msra.mxu0 %v1374
        %1893 = vmatprep.subr.bf16.mxu0 %v1371
        %1894 = vmatpush1.bf16.msra.mxu0 %v1370
        %1895 = vmatprep.subr.bf16.mxu0 %v1367
        %1896 = vmatpush1.bf16.msra.mxu0 %v1366
        %1897 = vmatprep.subr.bf16.mxu0 %v1363
        %1898 = vmatpush1.bf16.msra.mxu0 %v1362
        %1899 = vmatprep.subr.bf16.mxu0 %v1359
        %1900 = vmatpush1.bf16.msra.mxu0 %v1358
        %1901 = vmatprep.subr.bf16.mxu0 %v1355
        %1902 = vmatpush1.bf16.msra.mxu0 %v1354
        %1903 = vmatprep.subr.bf16.mxu0 %v1351
        %1904 = vmatpush1.bf16.msra.mxu0 %v1350
        %1905 = vmatprep.subr.bf16.mxu0 %v1347
        %1906 = vmatpush1.bf16.msra.mxu0 %v1346
        %1907 = vmatprep.subr.bf16.mxu0 %v1407
        %1908 = vmatpush2.bf16.msra.mxu0 %v1406
        %1909 = vmatprep.subr.bf16.mxu0 %v1403
        %1910 = vmatpush2.bf16.msra.mxu0 %v1402
        %1911 = vmatprep.subr.bf16.mxu0 %v1399
        %1912 = vmatpush2.bf16.msra.mxu0 %v1398
        %1913 = vmatprep.subr.bf16.mxu0 %v1395
        %1914 = vmatpush2.bf16.msra.mxu0 %v1394
        %1915 = vmatprep.subr.bf16.mxu0 %v1391
        %1916 = vmatpush2.bf16.msra.mxu0 %v1390
        %1917 = vmatprep.subr.bf16.mxu0 %v1387
        %1918 = vmatpush2.bf16.msra.mxu0 %v1386
        %1919 = vmatprep.subr.bf16.mxu0 %v1383
        %1920 = vmatpush2.bf16.msra.mxu0 %v1382
        %1921 = vmatprep.subr.bf16.mxu0 %v1379
        %1922 = vmatpush2.bf16.msra.mxu0 %v1378
        %1923 = vmatprep.mubr.bf16.mxu0 %v682
        %1924 = vmatmul.mubr.bf16.gmra.mxu0 %v681
        %v1925 = vpop.f32.mrf.mxu0
        %v1926 = vadd.f32 %v1883, %v1925
        %v1927 = vpop.f32.mrf.mxu0
        %v1928 = vadd.f32 %v1885, %v1927
        %v1929 = vpop.f32.mrf.mxu0
        %v1930 = vadd.f32 %v1887, %v1929
        %v1931 = vpop.f32.mrf.mxu0
        %v1932 = vadd.f32 %v1889, %v1931
        %1933 = vdwg.mxu0
        %1934 = vmatprep.subr.bf16.mxu0 %v1439
        %1935 = vmatpush1.bf16.msra.mxu0 %v1438
        %1936 = vmatprep.subr.bf16.mxu0 %v1435
        %1937 = vmatpush1.bf16.msra.mxu0 %v1434
        %1938 = vmatprep.subr.bf16.mxu0 %v1431
        %1939 = vmatpush1.bf16.msra.mxu0 %v1430
        %1940 = vmatprep.subr.bf16.mxu0 %v1427
        %1941 = vmatpush1.bf16.msra.mxu0 %v1426
        %1942 = vmatprep.subr.bf16.mxu0 %v1423
        %1943 = vmatpush1.bf16.msra.mxu0 %v1422
        %1944 = vmatprep.subr.bf16.mxu0 %v1419
        %1945 = vmatpush1.bf16.msra.mxu0 %v1418
        %1946 = vmatprep.subr.bf16.mxu0 %v1415
        %1947 = vmatpush1.bf16.msra.mxu0 %v1414
        %1948 = vmatprep.subr.bf16.mxu0 %v1411
        %1949 = vmatpush1.bf16.msra.mxu0 %v1410
        %1950 = vmatprep.subr.bf16.mxu0 %v1471
        %1951 = vmatpush2.bf16.msra.mxu0 %v1470
        %1952 = vmatprep.subr.bf16.mxu0 %v1467
        %1953 = vmatpush2.bf16.msra.mxu0 %v1466
        %1954 = vmatprep.subr.bf16.mxu0 %v1463
        %1955 = vmatpush2.bf16.msra.mxu0 %v1462
        %1956 = vmatprep.subr.bf16.mxu0 %v1459
        %1957 = vmatpush2.bf16.msra.mxu0 %v1458
        %1958 = vmatprep.subr.bf16.mxu0 %v1455
        %1959 = vmatpush2.bf16.msra.mxu0 %v1454
        %1960 = vmatprep.subr.bf16.mxu0 %v1451
        %1961 = vmatpush2.bf16.msra.mxu0 %v1450
        %1962 = vmatprep.subr.bf16.mxu0 %v1447
        %1963 = vmatpush2.bf16.msra.mxu0 %v1446
        %1964 = vmatprep.subr.bf16.mxu0 %v1443
        %1965 = vmatpush2.bf16.msra.mxu0 %v1442
        %1966 = vmatprep.mubr.bf16.mxu0 %v684
        %1967 = vmatmul.mubr.bf16.gmra.mxu0 %v683
        %v1968 = vpop.f32.mrf.mxu0
        %v1969 = vadd.f32 %v1926, %v1968
        %v1970 = vpop.f32.mrf.mxu0
        %v1971 = vadd.f32 %v1928, %v1970
        %v1972 = vpop.f32.mrf.mxu0
        %v1973 = vadd.f32 %v1930, %v1972
        %v1974 = vpop.f32.mrf.mxu0
        %v1975 = vadd.f32 %v1932, %v1974
        %1976 = vdwg.mxu0
        %1977 = vmatprep.subr.bf16.mxu0 0
        %1978 = vmatpush1.bf16.msra.mxu0 0
        %1979 = vmatprep.subr.bf16.mxu0 0
        %1980 = vmatpush1.bf16.msra.mxu0 0
        %1981 = vmatprep.subr.bf16.mxu0 0
        %1982 = vmatpush1.bf16.msra.mxu0 0
        %1983 = vmatprep.subr.bf16.mxu0 0
        %1984 = vmatpush1.bf16.msra.mxu0 0
        %1985 = vmatprep.subr.bf16.mxu0 0
        %1986 = vmatpush1.bf16.msra.mxu0 0
        %1987 = vmatprep.subr.bf16.mxu0 0
        %1988 = vmatpush1.bf16.msra.mxu0 0
        %1989 = vmatprep.subr.bf16.mxu0 0
        %1990 = vmatpush1.bf16.msra.mxu0 0
        %1991 = vmatprep.subr.bf16.mxu0 %v1475
        %1992 = vmatpush1.bf16.msra.mxu0 %v1474
        %1993 = vmatprep.subr.bf16.mxu0 0
        %1994 = vmatpush2.bf16.msra.mxu0 0
        %1995 = vmatprep.subr.bf16.mxu0 0
        %1996 = vmatpush2.bf16.msra.mxu0 0
        %1997 = vmatprep.subr.bf16.mxu0 0
        %1998 = vmatpush2.bf16.msra.mxu0 0
        %1999 = vmatprep.subr.bf16.mxu0 0
        %2000 = vmatpush2.bf16.msra.mxu0 0
        %2001 = vmatprep.subr.bf16.mxu0 0
        %2002 = vmatpush2.bf16.msra.mxu0 0
        %2003 = vmatprep.subr.bf16.mxu0 0
        %2004 = vmatpush2.bf16.msra.mxu0 0
        %2005 = vmatprep.subr.bf16.mxu0 0
        %2006 = vmatpush2.bf16.msra.mxu0 0
        %2007 = vmatprep.subr.bf16.mxu0 0
        %2008 = vmatpush2.bf16.msra.mxu0 0
        %2009 = vmatprep.mubr.bf16.mxu0 0
        %2010 = vmatmul.mubr.bf16.gmra.mxu0 %v1674
        %v2011 = vpop.f32.mrf.mxu0
        %v2012 = vadd.f32 %v1969, %v2011
        %v2013 = vpop.f32.mrf.mxu0
        %v2014 = vadd.f32 %v1971, %v2013
        %v2015 = vpop.f32.mrf.mxu0
        %v2016 = vadd.f32 %v1973, %v2015
        %v2017 = vpop.f32.mrf.mxu0
        %v2018 = vadd.f32 %v1975, %v2017
        %2019 = vdwg.mxu0
        %v2020 = vmax.f32 %v1840, 0.0
        %v2021 = vmax.f32 %v1842, 0.0
        %v2022 = vmax.f32 %v2012, 0.0
        %v2023 = vmax.f32 %v2014, 0.0
        %v2024 = vmax.f32 %v1844, 0.0
        %v2025 = vmax.f32 %v1846, 0.0
        %v2026 = vmax.f32 %v2016, 0.0
        %v2027 = vmax.f32 %v2018, 0.0
        %v2028 = vpack.c.bf16 %v2024, %v2020
        %v2029 = vpack.c.bf16 %v2025, %v2021
        %v2030 = vpack.c.bf16 %v2026, %v2022
        %v2031 = vpack.c.bf16 %v2027, %v2023
        %v2032 = vld [vmem:[%s4] sm:$0xff]
        %v2033 = vld [vmem:[%s4 + $0x8] sm:$0xff]
        %v2034 = vld [vmem:[%s4 + $0x10] sm:$0xff]
        %v2035 = vld [vmem:[%s4 + $0x18] sm:$0xff]
        %v2036 = vld [vmem:[%s4 + $0x20] sm:$0xff]
        %v2037 = vld [vmem:[%s4 + $0x28] sm:$0xff]
        %v2038 = vld [vmem:[%s4 + $0x30] sm:$0xff]
        %v2039 = vld [vmem:[%s4 + $0x38] sm:$0xff]
        %v2040 = vld [vmem:[%s4 + $0x40] sm:$0xff]
        %v2041 = vld [vmem:[%s4 + $0x48] sm:$0xff]
        %v2042 = vld [vmem:[%s4 + $0x50] sm:$0xff]
        %v2043 = vld [vmem:[%s4 + $0x58] sm:$0xff]
        %v2044 = vld [vmem:[%s4 + $0x60] sm:$0xff]
        %v2045 = vld [vmem:[%s4 + $0x68] sm:$0xff]
        %v2046 = vld [vmem:[%s4 + $0x70] sm:$0xff]
        %v2047 = vld [vmem:[%s4 + $0x78] sm:$0xff]
        %v2048 = vld [vmem:[%s4 + $0x80] sm:$0xff]
        %v2049 = vld [vmem:[%s4 + $0x88] sm:$0xff]
        %v2050 = vld [vmem:[%s4 + $0x90] sm:$0xff]
        %v2051 = vld [vmem:[%s4 + $0x98] sm:$0xff]
        %v2052 = vld [vmem:[%s4 + $0xa0] sm:$0xff]
        %v2053 = vld [vmem:[%s4 + $0xa8] sm:$0xff]
        %v2054 = vld [vmem:[%s4 + $0xb0] sm:$0xff]
        %v2055 = vld [vmem:[%s4 + $0xb8] sm:$0xff]
        %v2056 = vld [vmem:[%s4 + $0xc0] sm:$0xff]
        %v2057 = vld [vmem:[%s4 + $0xc8] sm:$0xff]
        %v2058 = vld [vmem:[%s4 + $0xd0] sm:$0xff]
        %v2059 = vld [vmem:[%s4 + $0xd8] sm:$0xff]
        %v2060 = vld [vmem:[%s4 + $0xe0] sm:$0xff]
        %v2061 = vld [vmem:[%s4 + $0xe8] sm:$0xff]
        %v2062 = vld [vmem:[%s4 + $0xf0] sm:$0xff]
        %v2063 = vld [vmem:[%s4 + $0xf8] sm:$0xff]
        %v2064 = vld [vmem:[%s4 + $0x100] sm:$0xff]
        %v2065 = vld [vmem:[%s4 + $0x108] sm:$0xff]
        %v2066 = vld [vmem:[%s4 + $0x110] sm:$0xff]
        %v2067 = vld [vmem:[%s4 + $0x118] sm:$0xff]
        %v2068 = vld [vmem:[%s4 + $0x120] sm:$0xff]
        %v2069 = vld [vmem:[%s4 + $0x128] sm:$0xff]
        %v2070 = vld [vmem:[%s4 + $0x130] sm:$0xff]
        %v2071 = vld [vmem:[%s4 + $0x138] sm:$0xff]
        %v2072 = vld [vmem:[%s4 + $0x140] sm:$0xff]
        %v2073 = vld [vmem:[%s4 + $0x148] sm:$0xff]
        %v2074 = vld [vmem:[%s4 + $0x150] sm:$0xff]
        %v2075 = vld [vmem:[%s4 + $0x158] sm:$0xff]
        %v2076 = vld [vmem:[%s4 + $0x160] sm:$0xff]
        %v2077 = vld [vmem:[%s4 + $0x168] sm:$0xff]
        %v2078 = vld [vmem:[%s4 + $0x170] sm:$0xff]
        %v2079 = vld [vmem:[%s4 + $0x178] sm:$0xff]
        %v2080 = vld [vmem:[%s4 + $0x180] sm:$0xff]
        %v2081 = vld [vmem:[%s4 + $0x188] sm:$0xff]
        %v2082 = vld [vmem:[%s5] sm:$0x3]
        %v2084 = vlaneseq
        %v2085 = vshrl.u32 %v2084, 7
        %v2086 = vsub.s32 0, %v2085
        %v2087 = vrot.slane %v2082, %v2086
        %v2088 = vlaneseq
        %v2089 = vshrl.u32 %v2088, 7
        %v2090 = vsub.s32 1, %v2089
        %v2091 = vrot.slane %v2082, %v2090
        %v2144 = vunpack.c.l.b16 %v2032
        %v2145 = vunpack.c.h.b16 %v2032
        %v2146 = vunpack.c.l.b16 %v2033
        %v2147 = vunpack.c.h.b16 %v2033
        %v2148 = vunpack.c.l.b16 %v2034
        %v2149 = vunpack.c.h.b16 %v2034
        %v2150 = vunpack.c.l.b16 %v2035
        %v2151 = vunpack.c.h.b16 %v2035
        %v2152 = vunpack.c.l.b16 %v2036
        %v2153 = vunpack.c.h.b16 %v2036
        %v2154 = vunpack.c.l.b16 %v2037
        %v2155 = vunpack.c.h.b16 %v2037
        %v2156 = vunpack.c.l.b16 %v2038
        %v2157 = vunpack.c.h.b16 %v2038
        %v2158 = vunpack.c.l.b16 %v2039
        %v2159 = vunpack.c.h.b16 %v2039
        %v2160 = vunpack.c.l.b16 %v2040
        %v2161 = vunpack.c.h.b16 %v2040
        %v2162 = vunpack.c.l.b16 %v2041
        %v2163 = vunpack.c.h.b16 %v2041
        %v2164 = vunpack.c.l.b16 %v2042
        %v2165 = vunpack.c.h.b16 %v2042
        %v2166 = vunpack.c.l.b16 %v2043
        %v2167 = vunpack.c.h.b16 %v2043
        %v2168 = vunpack.c.l.b16 %v2044
        %v2169 = vunpack.c.h.b16 %v2044
        %v2170 = vunpack.c.l.b16 %v2045
        %v2171 = vunpack.c.h.b16 %v2045
        %v2172 = vunpack.c.l.b16 %v2046
        %v2173 = vunpack.c.h.b16 %v2046
        %v2174 = vunpack.c.l.b16 %v2047
        %v2175 = vunpack.c.h.b16 %v2047
        %v2176 = vunpack.c.l.b16 %v2048
        %v2177 = vunpack.c.h.b16 %v2048
        %v2178 = vunpack.c.l.b16 %v2049
        %v2179 = vunpack.c.h.b16 %v2049
        %v2180 = vunpack.c.l.b16 %v2050
        %v2181 = vunpack.c.h.b16 %v2050
        %v2182 = vunpack.c.l.b16 %v2051
        %v2183 = vunpack.c.h.b16 %v2051
        %v2184 = vunpack.c.l.b16 %v2052
        %v2185 = vunpack.c.h.b16 %v2052
        %v2186 = vunpack.c.l.b16 %v2053
        %v2187 = vunpack.c.h.b16 %v2053
        %v2188 = vunpack.c.l.b16 %v2054
        %v2189 = vunpack.c.h.b16 %v2054
        %v2190 = vunpack.c.l.b16 %v2055
        %v2191 = vunpack.c.h.b16 %v2055
        %v2192 = vunpack.c.l.b16 %v2056
        %v2193 = vunpack.c.h.b16 %v2056
        %v2194 = vunpack.c.l.b16 %v2057
        %v2195 = vunpack.c.h.b16 %v2057
        %v2196 = vunpack.c.l.b16 %v2058
        %v2197 = vunpack.c.h.b16 %v2058
        %v2198 = vunpack.c.l.b16 %v2059
        %v2199 = vunpack.c.h.b16 %v2059
        %v2200 = vunpack.c.l.b16 %v2060
        %v2201 = vunpack.c.h.b16 %v2060
        %v2202 = vunpack.c.l.b16 %v2061
        %v2203 = vunpack.c.h.b16 %v2061
        %v2204 = vunpack.c.l.b16 %v2062
        %v2205 = vunpack.c.h.b16 %v2062
        %v2206 = vunpack.c.l.b16 %v2063
        %v2207 = vunpack.c.h.b16 %v2063
        %v2208 = vunpack.c.l.b16 %v2064
        %v2209 = vunpack.c.h.b16 %v2064
        %v2210 = vunpack.c.l.b16 %v2065
        %v2211 = vunpack.c.h.b16 %v2065
        %v2212 = vunpack.c.l.b16 %v2066
        %v2213 = vunpack.c.h.b16 %v2066
        %v2214 = vunpack.c.l.b16 %v2067
        %v2215 = vunpack.c.h.b16 %v2067
        %v2216 = vunpack.c.l.b16 %v2068
        %v2217 = vunpack.c.h.b16 %v2068
        %v2218 = vunpack.c.l.b16 %v2069
        %v2219 = vunpack.c.h.b16 %v2069
        %v2220 = vunpack.c.l.b16 %v2070
        %v2221 = vunpack.c.h.b16 %v2070
        %v2222 = vunpack.c.l.b16 %v2071
        %v2223 = vunpack.c.h.b16 %v2071
        %v2224 = vunpack.c.l.b16 %v2072
        %v2225 = vunpack.c.h.b16 %v2072
        %v2226 = vunpack.c.l.b16 %v2073
        %v2227 = vunpack.c.h.b16 %v2073
        %v2228 = vunpack.c.l.b16 %v2074
        %v2229 = vunpack.c.h.b16 %v2074
        %v2230 = vunpack.c.l.b16 %v2075
        %v2231 = vunpack.c.h.b16 %v2075
        %v2232 = vunpack.c.l.b16 %v2076
        %v2233 = vunpack.c.h.b16 %v2076
        %v2234 = vunpack.c.l.b16 %v2077
        %v2235 = vunpack.c.h.b16 %v2077
        %v2236 = vunpack.c.l.b16 %v2078
        %v2237 = vunpack.c.h.b16 %v2078
        %v2238 = vunpack.c.l.b16 %v2079
        %v2239 = vunpack.c.h.b16 %v2079
        %v2240 = vunpack.c.l.b16 %v2080
        %v2241 = vunpack.c.h.b16 %v2080
        %v2242 = vunpack.c.l.b16 %v2081
        %v2243 = vunpack.c.h.b16 %v2081
        %v2244 = vpack.c.b16 %v2146, %v2144
        %v2245 = vpack.c.b16 %v2147, %v2145
        %v2246 = vpack.c.b16 %v2150, %v2148
        %v2247 = vpack.c.b16 %v2151, %v2149
        %v2248 = vpack.c.b16 %v2154, %v2152
        %v2249 = vpack.c.b16 %v2155, %v2153
        %v2250 = vpack.c.b16 %v2158, %v2156
        %v2251 = vpack.c.b16 %v2159, %v2157
        %v2252 = vpack.c.b16 %v2162, %v2160
        %v2253 = vpack.c.b16 %v2163, %v2161
        %v2254 = vpack.c.b16 %v2166, %v2164
        %v2255 = vpack.c.b16 %v2167, %v2165
        %v2256 = vpack.c.b16 %v2170, %v2168
        %v2257 = vpack.c.b16 %v2171, %v2169
        %v2258 = vpack.c.b16 %v2174, %v2172
        %v2259 = vpack.c.b16 %v2175, %v2173
        %v2260 = vpack.c.b16 %v2178, %v2176
        %v2261 = vpack.c.b16 %v2179, %v2177
        %v2262 = vpack.c.b16 %v2182, %v2180
        %v2263 = vpack.c.b16 %v2183, %v2181
        %v2264 = vpack.c.b16 %v2186, %v2184
        %v2265 = vpack.c.b16 %v2187, %v2185
        %v2266 = vpack.c.b16 %v2190, %v2188
        %v2267 = vpack.c.b16 %v2191, %v2189
        %v2268 = vpack.c.b16 %v2194, %v2192
        %v2269 = vpack.c.b16 %v2195, %v2193
        %v2270 = vpack.c.b16 %v2198, %v2196
        %v2271 = vpack.c.b16 %v2199, %v2197
        %v2272 = vpack.c.b16 %v2202, %v2200
        %v2273 = vpack.c.b16 %v2203, %v2201
        %v2274 = vpack.c.b16 %v2206, %v2204
        %v2275 = vpack.c.b16 %v2207, %v2205
        %v2276 = vpack.c.b16 %v2210, %v2208
        %v2277 = vpack.c.b16 %v2211, %v2209
        %v2278 = vpack.c.b16 %v2214, %v2212
        %v2279 = vpack.c.b16 %v2215, %v2213
        %v2280 = vpack.c.b16 %v2218, %v2216
        %v2281 = vpack.c.b16 %v2219, %v2217
        %v2282 = vpack.c.b16 %v2222, %v2220
        %v2283 = vpack.c.b16 %v2223, %v2221
        %v2284 = vpack.c.b16 %v2226, %v2224
        %v2285 = vpack.c.b16 %v2227, %v2225
        %v2286 = vpack.c.b16 %v2230, %v2228
        %v2287 = vpack.c.b16 %v2231, %v2229
        %v2288 = vpack.c.b16 %v2234, %v2232
        %v2289 = vpack.c.b16 %v2235, %v2233
        %v2290 = vpack.c.b16 %v2238, %v2236
        %v2291 = vpack.c.b16 %v2239, %v2237
        %v2292 = vpack.c.b16 %v2242, %v2240
        %v2293 = vpack.c.b16 %v2243, %v2241
        %v2345 = vsel %vm1672, %v2031, 0
        %2347 = vmatprep.subr.bf16.mxu0 %v2259
        %2348 = vmatpush1.bf16.msra.mxu0 %v2258
        %2349 = vmatprep.subr.bf16.mxu0 %v2257
        %2350 = vmatpush1.bf16.msra.mxu0 %v2256
        %2351 = vmatprep.subr.bf16.mxu0 %v2255
        %2352 = vmatpush1.bf16.msra.mxu0 %v2254
        %2353 = vmatprep.subr.bf16.mxu0 %v2253
        %2354 = vmatpush1.bf16.msra.mxu0 %v2252
        %2355 = vmatprep.subr.bf16.mxu0 %v2251
        %2356 = vmatpush1.bf16.msra.mxu0 %v2250
        %2357 = vmatprep.subr.bf16.mxu0 %v2249
        %2358 = vmatpush1.bf16.msra.mxu0 %v2248
        %2359 = vmatprep.subr.bf16.mxu0 %v2247
        %2360 = vmatpush1.bf16.msra.mxu0 %v2246
        %2361 = vmatprep.subr.bf16.mxu0 %v2245
        %2362 = vmatpush1.bf16.msra.mxu0 %v2244
        %2363 = vmatprep.subr.bf16.mxu0 %v2275
        %2364 = vmatpush2.bf16.msra.mxu0 %v2274
        %2365 = vmatprep.subr.bf16.mxu0 %v2273
        %2366 = vmatpush2.bf16.msra.mxu0 %v2272
        %2367 = vmatprep.subr.bf16.mxu0 %v2271
        %2368 = vmatpush2.bf16.msra.mxu0 %v2270
        %2369 = vmatprep.subr.bf16.mxu0 %v2269
        %2370 = vmatpush2.bf16.msra.mxu0 %v2268
        %2371 = vmatprep.subr.bf16.mxu0 %v2267
        %2372 = vmatpush2.bf16.msra.mxu0 %v2266
        %2373 = vmatprep.subr.bf16.mxu0 %v2265
        %2374 = vmatpush2.bf16.msra.mxu0 %v2264
        %2375 = vmatprep.subr.bf16.mxu0 %v2263
        %2376 = vmatpush2.bf16.msra.mxu0 %v2262
        %2377 = vmatprep.subr.bf16.mxu0 %v2261
        %2378 = vmatpush2.bf16.msra.mxu0 %v2260
        %2379 = vmatprep.mubr.bf16.mxu0 %v2029
        %2380 = vmatmul.mubr.bf16.gmra.mxu0 %v2028
        %v2381 = vpop.f32.mrf.mxu0
        %v2382 = vadd.f32 %v2087, %v2381
        %v2383 = vpop.f32.mrf.mxu0
        %v2384 = vadd.f32 %v2091, %v2383
        %v2385 = vpop.f32.mrf.mxu0
        %v2386 = vadd.f32 %v2087, %v2385
        %v2387 = vpop.f32.mrf.mxu0
        %v2388 = vadd.f32 %v2091, %v2387
        %2389 = vdwg.mxu0
        %2390 = vmatprep.subr.bf16.mxu0 %v2291
        %2391 = vmatpush1.bf16.msra.mxu0 %v2290
        %2392 = vmatprep.subr.bf16.mxu0 %v2289
        %2393 = vmatpush1.bf16.msra.mxu0 %v2288
        %2394 = vmatprep.subr.bf16.mxu0 %v2287
        %2395 = vmatpush1.bf16.msra.mxu0 %v2286
        %2396 = vmatprep.subr.bf16.mxu0 %v2285
        %2397 = vmatpush1.bf16.msra.mxu0 %v2284
        %2398 = vmatprep.subr.bf16.mxu0 %v2283
        %2399 = vmatpush1.bf16.msra.mxu0 %v2282
        %2400 = vmatprep.subr.bf16.mxu0 %v2281
        %2401 = vmatpush1.bf16.msra.mxu0 %v2280
        %2402 = vmatprep.subr.bf16.mxu0 %v2279
        %2403 = vmatpush1.bf16.msra.mxu0 %v2278
        %2404 = vmatprep.subr.bf16.mxu0 %v2277
        %2405 = vmatpush1.bf16.msra.mxu0 %v2276
        %2406 = vmatprep.subr.bf16.mxu0 0
        %2407 = vmatpush2.bf16.msra.mxu0 0
        %2408 = vmatprep.subr.bf16.mxu0 0
        %2409 = vmatpush2.bf16.msra.mxu0 0
        %2410 = vmatprep.subr.bf16.mxu0 0
        %2411 = vmatpush2.bf16.msra.mxu0 0
        %2412 = vmatprep.subr.bf16.mxu0 0
        %2413 = vmatpush2.bf16.msra.mxu0 0
        %2414 = vmatprep.subr.bf16.mxu0 0
        %2415 = vmatpush2.bf16.msra.mxu0 0
        %2416 = vmatprep.subr.bf16.mxu0 0
        %2417 = vmatpush2.bf16.msra.mxu0 0
        %2418 = vmatprep.subr.bf16.mxu0 0
        %2419 = vmatpush2.bf16.msra.mxu0 0
        %2420 = vmatprep.subr.bf16.mxu0 %v2293
        %2421 = vmatpush2.bf16.msra.mxu0 %v2292
        %2422 = vmatprep.mubr.bf16.mxu0 %v2345
        %2423 = vmatmul.mubr.bf16.gmra.mxu0 %v2030
        %v2424 = vpop.f32.mrf.mxu0
        %v2425 = vadd.f32 %v2382, %v2424
        %v2426 = vpop.f32.mrf.mxu0
        %v2427 = vadd.f32 %v2384, %v2426
        %v2428 = vpop.f32.mrf.mxu0
        %v2429 = vadd.f32 %v2386, %v2428
        %v2430 = vpop.f32.mrf.mxu0
        %v2431 = vadd.f32 %v2388, %v2430
        %2432 = vdwg.mxu0
        %v2433 = vmul.f32 %v2427, 0.5
        %v2434 = vmul.f32 %v2431, 0.5
        %v2435 = vmul.f32 %v2433, 1.442695
        %v2436 = vpow.pop %v2435
        %v2437 = vmul.f32 %v2434, 1.442695
        %v2438 = vpow.pop %v2437
        %v2439 = vld [vmem:[%s419] sm:$0xff]
        %v2440 = vld [vmem:[%s419 + $0x8] sm:$0xff]
        %v2441 = vmul.f32 %v2436, %v2439
        %v2442 = vmul.f32 %v2438, %v2440
        %v2443 = vadd.f32 %v2425, %v2441
        %v2444 = vadd.f32 %v2429, %v2442
        %v2445 = vpack.c.bf16 %v2444, %v2443
        %v2446 = vld [vmem:[%s6] sm:$0xff]
        %v2447 = vld [vmem:[%s6 + $0x8] sm:$0xff]
        %v2448 = vld [vmem:[%s6 + $0x10] sm:$0xff]
        %v2449 = vld [vmem:[%s6 + $0x18] sm:$0xff]
        %v2450 = vld [vmem:[%s6 + $0x20] sm:$0xff]
        %v2451 = vld [vmem:[%s6 + $0x28] sm:$0xff]
        %v2452 = vld [vmem:[%s6 + $0x30] sm:$0xff]
        %v2453 = vld [vmem:[%s6 + $0x38] sm:$0xff]
        %v2454 = vld [vmem:[%s6 + $0x40] sm:$0xff]
        %v2455 = vld [vmem:[%s6 + $0x48] sm:$0xff]
        %v2456 = vld [vmem:[%s6 + $0x50] sm:$0xff]
        %v2457 = vld [vmem:[%s6 + $0x58] sm:$0xff]
        %v2458 = vld [vmem:[%s6 + $0x60] sm:$0xff]
        %v2459 = vld [vmem:[%s6 + $0x68] sm:$0xff]
        %v2460 = vld [vmem:[%s6 + $0x70] sm:$0xff]
        %v2461 = vld [vmem:[%s6 + $0x78] sm:$0xff]
        %v2462 = vld [vmem:[%s6 + $0x80] sm:$0xff]
        %v2463 = vld [vmem:[%s6 + $0x88] sm:$0xff]
        %v2464 = vld [vmem:[%s6 + $0x90] sm:$0xff]
        %v2465 = vld [vmem:[%s6 + $0x98] sm:$0xff]
        %v2466 = vld [vmem:[%s6 + $0xa0] sm:$0xff]
        %v2467 = vld [vmem:[%s6 + $0xa8] sm:$0xff]
        %v2468 = vld [vmem:[%s6 + $0xb0] sm:$0xff]
        %v2469 = vld [vmem:[%s6 + $0xb8] sm:$0xff]
        %v2470 = vld [vmem:[%s6 + $0xc0] sm:$0xff]
        %v2471 = vld [vmem:[%s6 + $0xc8] sm:$0xff]
        %v2472 = vld [vmem:[%s6 + $0xd0] sm:$0xff]
        %v2473 = vld [vmem:[%s6 + $0xd8] sm:$0xff]
        %v2474 = vld [vmem:[%s6 + $0xe0] sm:$0xff]
        %v2475 = vld [vmem:[%s6 + $0xe8] sm:$0xff]
        %v2476 = vld [vmem:[%s6 + $0xf0] sm:$0xff]
        %v2477 = vld [vmem:[%s6 + $0xf8] sm:$0xff]
        %v2478 = vld [vmem:[%s7] sm:$0xf]
        %v2480 = vlaneseq
        %v2481 = vshrl.u32 %v2480, 7
        %v2482 = vsub.s32 0, %v2481
        %v2483 = vrot.slane %v2478, %v2482
        %v2484 = vlaneseq
        %v2485 = vshrl.u32 %v2484, 7
        %v2486 = vsub.s32 1, %v2485
        %v2487 = vrot.slane %v2478, %v2486
        %v2488 = vlaneseq
        %v2489 = vshrl.u32 %v2488, 7
        %v2490 = vsub.s32 2, %v2489
        %v2491 = vrot.slane %v2478, %v2490
        %v2492 = vlaneseq
        %v2493 = vshrl.u32 %v2492, 7
        %v2494 = vsub.s32 3, %v2493
        %v2495 = vrot.slane %v2478, %v2494
        %v2532 = vunpack.c.l.b16 %v2446
        %v2533 = vunpack.c.h.b16 %v2446
        %v2534 = vunpack.c.l.b16 %v2447
        %v2535 = vunpack.c.h.b16 %v2447
        %v2536 = vunpack.c.l.b16 %v2448
        %v2537 = vunpack.c.h.b16 %v2448
        %v2538 = vunpack.c.l.b16 %v2449
        %v2539 = vunpack.c.h.b16 %v2449
        %v2540 = vunpack.c.l.b16 %v2450
        %v2541 = vunpack.c.h.b16 %v2450
        %v2542 = vunpack.c.l.b16 %v2451
        %v2543 = vunpack.c.h.b16 %v2451
        %v2544 = vunpack.c.l.b16 %v2452
        %v2545 = vunpack.c.h.b16 %v2452
        %v2546 = vunpack.c.l.b16 %v2453
        %v2547 = vunpack.c.h.b16 %v2453
        %v2548 = vunpack.c.l.b16 %v2454
        %v2549 = vunpack.c.h.b16 %v2454
        %v2550 = vunpack.c.l.b16 %v2455
        %v2551 = vunpack.c.h.b16 %v2455
        %v2552 = vunpack.c.l.b16 %v2456
        %v2553 = vunpack.c.h.b16 %v2456
        %v2554 = vunpack.c.l.b16 %v2457
        %v2555 = vunpack.c.h.b16 %v2457
        %v2556 = vunpack.c.l.b16 %v2458
        %v2557 = vunpack.c.h.b16 %v2458
        %v2558 = vunpack.c.l.b16 %v2459
        %v2559 = vunpack.c.h.b16 %v2459
        %v2560 = vunpack.c.l.b16 %v2460
        %v2561 = vunpack.c.h.b16 %v2460
        %v2562 = vunpack.c.l.b16 %v2461
        %v2563 = vunpack.c.h.b16 %v2461
        %v2564 = vunpack.c.l.b16 %v2462
        %v2565 = vunpack.c.h.b16 %v2462
        %v2566 = vunpack.c.l.b16 %v2463
        %v2567 = vunpack.c.h.b16 %v2463
        %v2568 = vunpack.c.l.b16 %v2464
        %v2569 = vunpack.c.h.b16 %v2464
        %v2570 = vunpack.c.l.b16 %v2465
        %v2571 = vunpack.c.h.b16 %v2465
        %v2572 = vunpack.c.l.b16 %v2466
        %v2573 = vunpack.c.h.b16 %v2466
        %v2574 = vunpack.c.l.b16 %v2467
        %v2575 = vunpack.c.h.b16 %v2467
        %v2576 = vunpack.c.l.b16 %v2468
        %v2577 = vunpack.c.h.b16 %v2468
        %v2578 = vunpack.c.l.b16 %v2469
        %v2579 = vunpack.c.h.b16 %v2469
        %v2580 = vunpack.c.l.b16 %v2470
        %v2581 = vunpack.c.h.b16 %v2470
        %v2582 = vunpack.c.l.b16 %v2471
        %v2583 = vunpack.c.h.b16 %v2471
        %v2584 = vunpack.c.l.b16 %v2472
        %v2585 = vunpack.c.h.b16 %v2472
        %v2586 = vunpack.c.l.b16 %v2473
        %v2587 = vunpack.c.h.b16 %v2473
        %v2588 = vunpack.c.l.b16 %v2474
        %v2589 = vunpack.c.h.b16 %v2474
        %v2590 = vunpack.c.l.b16 %v2475
        %v2591 = vunpack.c.h.b16 %v2475
        %v2592 = vunpack.c.l.b16 %v2476
        %v2593 = vunpack.c.h.b16 %v2476
        %v2594 = vunpack.c.l.b16 %v2477
        %v2595 = vunpack.c.h.b16 %v2477
        %v2596 = vpack.c.b16 %v2536, %v2532
        %v2597 = vpack.c.b16 %v2537, %v2533
        %v2598 = vpack.c.b16 %v2538, %v2534
        %v2599 = vpack.c.b16 %v2539, %v2535
        %v2600 = vpack.c.b16 %v2544, %v2540
        %v2601 = vpack.c.b16 %v2545, %v2541
        %v2602 = vpack.c.b16 %v2546, %v2542
        %v2603 = vpack.c.b16 %v2547, %v2543
        %v2604 = vpack.c.b16 %v2552, %v2548
        %v2605 = vpack.c.b16 %v2553, %v2549
        %v2606 = vpack.c.b16 %v2554, %v2550
        %v2607 = vpack.c.b16 %v2555, %v2551
        %v2608 = vpack.c.b16 %v2560, %v2556
        %v2609 = vpack.c.b16 %v2561, %v2557
        %v2610 = vpack.c.b16 %v2562, %v2558
        %v2611 = vpack.c.b16 %v2563, %v2559
        %v2612 = vpack.c.b16 %v2568, %v2564
        %v2613 = vpack.c.b16 %v2569, %v2565
        %v2614 = vpack.c.b16 %v2570, %v2566
        %v2615 = vpack.c.b16 %v2571, %v2567
        %v2616 = vpack.c.b16 %v2576, %v2572
        %v2617 = vpack.c.b16 %v2577, %v2573
        %v2618 = vpack.c.b16 %v2578, %v2574
        %v2619 = vpack.c.b16 %v2579, %v2575
        %v2620 = vpack.c.b16 %v2584, %v2580
        %v2621 = vpack.c.b16 %v2585, %v2581
        %v2622 = vpack.c.b16 %v2586, %v2582
        %v2623 = vpack.c.b16 %v2587, %v2583
        %v2624 = vpack.c.b16 %v2592, %v2588
        %v2625 = vpack.c.b16 %v2593, %v2589
        %v2626 = vpack.c.b16 %v2594, %v2590
        %v2627 = vpack.c.b16 %v2595, %v2591
        %2660 = vmatprep.subr.bf16.mxu0 %v2625
        %2661 = vmatpush1.bf16.msra.mxu0 %v2624
        %2662 = vmatprep.subr.bf16.mxu0 %v2621
        %2663 = vmatpush1.bf16.msra.mxu0 %v2620
        %2664 = vmatprep.subr.bf16.mxu0 %v2617
        %2665 = vmatpush1.bf16.msra.mxu0 %v2616
        %2666 = vmatprep.subr.bf16.mxu0 %v2613
        %2667 = vmatpush1.bf16.msra.mxu0 %v2612
        %2668 = vmatprep.subr.bf16.mxu0 %v2609
        %2669 = vmatpush1.bf16.msra.mxu0 %v2608
        %2670 = vmatprep.subr.bf16.mxu0 %v2605
        %2671 = vmatpush1.bf16.msra.mxu0 %v2604
        %2672 = vmatprep.subr.bf16.mxu0 %v2601
        %2673 = vmatpush1.bf16.msra.mxu0 %v2600
        %2674 = vmatprep.subr.bf16.mxu0 %v2597
        %2675 = vmatpush1.bf16.msra.mxu0 %v2596
        %2676 = vmatprep.subr.bf16.mxu0 0
        %2677 = vmatpush2.bf16.msra.mxu0 0
        %2678 = vmatprep.subr.bf16.mxu0 0
        %2679 = vmatpush2.bf16.msra.mxu0 0
        %2680 = vmatprep.subr.bf16.mxu0 0
        %2681 = vmatpush2.bf16.msra.mxu0 0
        %2682 = vmatprep.subr.bf16.mxu0 0
        %2683 = vmatpush2.bf16.msra.mxu0 0
        %2684 = vmatprep.subr.bf16.mxu0 0
        %2685 = vmatpush2.bf16.msra.mxu0 0
        %2686 = vmatprep.subr.bf16.mxu0 0
        %2687 = vmatpush2.bf16.msra.mxu0 0
        %2688 = vmatprep.subr.bf16.mxu0 0
        %2689 = vmatpush2.bf16.msra.mxu0 0
        %2690 = vmatprep.subr.bf16.mxu0 0
        %2691 = vmatpush2.bf16.msra.mxu0 0
        %2692 = vmatprep.mubr.bf16.mxu0 0
        %2693 = vmatmul.mubr.bf16.gmra.mxu0 %v2445
        %v2694 = vpop.f32.mrf.mxu0
        %v2695 = vadd.f32 %v2483, %v2694
        %v2696 = vpop.f32.mrf.mxu0
        %v2697 = vadd.f32 %v2487, %v2696
        %v2698 = vpop.f32.mrf.mxu0
        %v2699 = vadd.f32 %v2483, %v2698
        %v2700 = vpop.f32.mrf.mxu0
        %v2701 = vadd.f32 %v2487, %v2700
        %2702 = vdwg.mxu0
        %2703 = vmatprep.subr.bf16.mxu0 %v2627
        %2704 = vmatpush1.bf16.msra.mxu0 %v2626
        %2705 = vmatprep.subr.bf16.mxu0 %v2623
        %2706 = vmatpush1.bf16.msra.mxu0 %v2622
        %2707 = vmatprep.subr.bf16.mxu0 %v2619
        %2708 = vmatpush1.bf16.msra.mxu0 %v2618
        %2709 = vmatprep.subr.bf16.mxu0 %v2615
        %2710 = vmatpush1.bf16.msra.mxu0 %v2614
        %2711 = vmatprep.subr.bf16.mxu0 %v2611
        %2712 = vmatpush1.bf16.msra.mxu0 %v2610
        %2713 = vmatprep.subr.bf16.mxu0 %v2607
        %2714 = vmatpush1.bf16.msra.mxu0 %v2606
        %2715 = vmatprep.subr.bf16.mxu0 %v2603
        %2716 = vmatpush1.bf16.msra.mxu0 %v2602
        %2717 = vmatprep.subr.bf16.mxu0 %v2599
        %2718 = vmatpush1.bf16.msra.mxu0 %v2598
        %2719 = vmatprep.subr.bf16.mxu0 0
        %2720 = vmatpush2.bf16.msra.mxu0 0
        %2721 = vmatprep.subr.bf16.mxu0 0
        %2722 = vmatpush2.bf16.msra.mxu0 0
        %2723 = vmatprep.subr.bf16.mxu0 0
        %2724 = vmatpush2.bf16.msra.mxu0 0
        %2725 = vmatprep.subr.bf16.mxu0 0
        %2726 = vmatpush2.bf16.msra.mxu0 0
        %2727 = vmatprep.subr.bf16.mxu0 0
        %2728 = vmatpush2.bf16.msra.mxu0 0
        %2729 = vmatprep.subr.bf16.mxu0 0
        %2730 = vmatpush2.bf16.msra.mxu0 0
        %2731 = vmatprep.subr.bf16.mxu0 0
        %2732 = vmatpush2.bf16.msra.mxu0 0
        %2733 = vmatprep.subr.bf16.mxu0 0
        %2734 = vmatpush2.bf16.msra.mxu0 0
        %2735 = vmatprep.mubr.bf16.mxu0 0
        %2736 = vmatmul.mubr.bf16.gmra.mxu0 %v2445
        %v2737 = vpop.f32.mrf.mxu0
        %v2738 = vadd.f32 %v2491, %v2737
        %v2739 = vpop.f32.mrf.mxu0
        %v2740 = vadd.f32 %v2495, %v2739
        %v2741 = vpop.f32.mrf.mxu0
        %v2742 = vadd.f32 %v2491, %v2741
        %v2743 = vpop.f32.mrf.mxu0
        %v2744 = vadd.f32 %v2495, %v2743
        %2745 = vdwg.mxu0
        %v2746 = vmax.f32 %v2695, 0.0
        %v2747 = vmax.f32 %v2697, 0.0
        %v2748 = vmax.f32 %v2738, 0.0
        %v2749 = vmax.f32 %v2740, 0.0
        %v2750 = vmax.f32 %v2699, 0.0
        %v2751 = vmax.f32 %v2701, 0.0
        %v2752 = vmax.f32 %v2742, 0.0
        %v2753 = vmax.f32 %v2744, 0.0
        %v2754 = vpack.c.bf16 %v2750, %v2746
        %v2755 = vpack.c.bf16 %v2751, %v2747
        %v2756 = vpack.c.bf16 %v2752, %v2748
        %v2757 = vpack.c.bf16 %v2753, %v2749
        %v2758 = vld [vmem:[%s8] sm:$0xff]
        %v2759 = vld [vmem:[%s8 + $0x8] sm:$0xff]
        %v2760 = vld [vmem:[%s8 + $0x10] sm:$0xff]
        %v2761 = vld [vmem:[%s8 + $0x18] sm:$0xf]
        %v2762 = vld [vmem:[%s8 + $0x1c] sm:$0xff]
        %v2763 = vld [vmem:[%s8 + $0x24] sm:$0xff]
        %v2764 = vld [vmem:[%s8 + $0x2c] sm:$0xff]
        %v2765 = vld [vmem:[%s8 + $0x34] sm:$0xf]
        %v2766 = vld [vmem:[%s8 + $0x38] sm:$0xff]
        %v2767 = vld [vmem:[%s8 + $0x40] sm:$0xff]
        %v2768 = vld [vmem:[%s8 + $0x48] sm:$0xff]
        %v2769 = vld [vmem:[%s8 + $0x50] sm:$0xf]
        %v2770 = vld [vmem:[%s8 + $0x54] sm:$0xff]
        %v2771 = vld [vmem:[%s8 + $0x5c] sm:$0xff]
        %v2772 = vld [vmem:[%s8 + $0x64] sm:$0xff]
        %v2773 = vld [vmem:[%s8 + $0x6c] sm:$0xf]
        %v2774 = vld [vmem:[%s8 + $0x70] sm:$0xff]
        %v2775 = vld [vmem:[%s8 + $0x78] sm:$0xff]
        %v2776 = vld [vmem:[%s8 + $0x80] sm:$0xff]
        %v2777 = vld [vmem:[%s8 + $0x88] sm:$0xf]
        %v2778 = vld [vmem:[%s8 + $0x8c] sm:$0xff]
        %v2779 = vld [vmem:[%s8 + $0x94] sm:$0xff]
        %v2780 = vld [vmem:[%s8 + $0x9c] sm:$0xff]
        %v2781 = vld [vmem:[%s8 + $0xa4] sm:$0xf]
        %v2782 = vld [vmem:[%s8 + $0xa8] sm:$0xff]
        %v2783 = vld [vmem:[%s8 + $0xb0] sm:$0xff]
        %v2784 = vld [vmem:[%s8 + $0xb8] sm:$0xff]
        %v2785 = vld [vmem:[%s8 + $0xc0] sm:$0xf]
        %v2786 = vld [vmem:[%s8 + $0xc4] sm:$0xff]
        %v2787 = vld [vmem:[%s8 + $0xcc] sm:$0xff]
        %v2788 = vld [vmem:[%s8 + $0xd4] sm:$0xff]
        %v2789 = vld [vmem:[%s8 + $0xdc] sm:$0xf]
        %v2790 = vld [vmem:[%s8 + $0xe0] sm:$0xff]
        %v2791 = vld [vmem:[%s8 + $0xe8] sm:$0xff]
        %v2792 = vld [vmem:[%s8 + $0xf0] sm:$0xff]
        %v2793 = vld [vmem:[%s8 + $0xf8] sm:$0xf]
        %v2794 = vld [vmem:[%s8 + $0xfc] sm:$0xff]
        %v2795 = vld [vmem:[%s8 + $0x104] sm:$0xff]
        %v2796 = vld [vmem:[%s8 + $0x10c] sm:$0xff]
        %v2797 = vld [vmem:[%s8 + $0x114] sm:$0xf]
        %v2798 = vld [vmem:[%s8 + $0x118] sm:$0xff]
        %v2799 = vld [vmem:[%s8 + $0x120] sm:$0xff]
        %v2800 = vld [vmem:[%s8 + $0x128] sm:$0xff]
        %v2801 = vld [vmem:[%s8 + $0x130] sm:$0xf]
        %v2802 = vld [vmem:[%s8 + $0x134] sm:$0xff]
        %v2803 = vld [vmem:[%s8 + $0x13c] sm:$0xff]
        %v2804 = vld [vmem:[%s8 + $0x144] sm:$0xff]
        %v2805 = vld [vmem:[%s8 + $0x14c] sm:$0xf]
        %v2806 = vld [vmem:[%s8 + $0x150] sm:$0xff]
        %v2807 = vld [vmem:[%s8 + $0x158] sm:$0xff]
        %v2808 = vld [vmem:[%s8 + $0x160] sm:$0xff]
        %v2809 = vld [vmem:[%s8 + $0x168] sm:$0xf]
        %v2810 = vld [vmem:[%s8 + $0x16c] sm:$0xff]
        %v2811 = vld [vmem:[%s8 + $0x174] sm:$0xff]
        %v2812 = vld [vmem:[%s8 + $0x17c] sm:$0xff]
        %v2813 = vld [vmem:[%s8 + $0x184] sm:$0xf]
        %v2814 = vld [vmem:[%s8 + $0x188] sm:$0xff]
        %v2815 = vld [vmem:[%s8 + $0x190] sm:$0xff]
        %v2816 = vld [vmem:[%s8 + $0x198] sm:$0xff]
        %v2817 = vld [vmem:[%s8 + $0x1a0] sm:$0xf]
        %v2818 = vld [vmem:[%s8 + $0x1a4] sm:$0xff]
        %v2819 = vld [vmem:[%s8 + $0x1ac] sm:$0xff]
        %v2820 = vld [vmem:[%s8 + $0x1b4] sm:$0xff]
        %v2821 = vld [vmem:[%s8 + $0x1bc] sm:$0xf]
        %v2822 = vld [vmem:[%s8 + $0x1c0] sm:$0xff]
        %v2823 = vld [vmem:[%s8 + $0x1c8] sm:$0xff]
        %v2824 = vld [vmem:[%s8 + $0x1d0] sm:$0xff]
        %v2825 = vld [vmem:[%s8 + $0x1d8] sm:$0xf]
        %v2826 = vld [vmem:[%s8 + $0x1dc] sm:$0xff]
        %v2827 = vld [vmem:[%s8 + $0x1e4] sm:$0xff]
        %v2828 = vld [vmem:[%s8 + $0x1ec] sm:$0xff]
        %v2829 = vld [vmem:[%s8 + $0x1f4] sm:$0xf]
        %v2830 = vld [vmem:[%s8 + $0x1f8] sm:$0xff]
        %v2831 = vld [vmem:[%s8 + $0x200] sm:$0xff]
        %v2832 = vld [vmem:[%s8 + $0x208] sm:$0xff]
        %v2833 = vld [vmem:[%s8 + $0x210] sm:$0xf]
        %v2834 = vld [vmem:[%s8 + $0x214] sm:$0xff]
        %v2835 = vld [vmem:[%s8 + $0x21c] sm:$0xff]
        %v2836 = vld [vmem:[%s8 + $0x224] sm:$0xff]
        %v2837 = vld [vmem:[%s8 + $0x22c] sm:$0xf]
        %v2838 = vld [vmem:[%s8 + $0x230] sm:$0xff]
        %v2839 = vld [vmem:[%s8 + $0x238] sm:$0xff]
        %v2840 = vld [vmem:[%s8 + $0x240] sm:$0xff]
        %v2841 = vld [vmem:[%s8 + $0x248] sm:$0xf]
        %v2842 = vld [vmem:[%s8 + $0x24c] sm:$0xff]
        %v2843 = vld [vmem:[%s8 + $0x254] sm:$0xff]
        %v2844 = vld [vmem:[%s8 + $0x25c] sm:$0xff]
        %v2845 = vld [vmem:[%s8 + $0x264] sm:$0xf]
        %v2846 = vld [vmem:[%s8 + $0x268] sm:$0xff]
        %v2847 = vld [vmem:[%s8 + $0x270] sm:$0xff]
        %v2848 = vld [vmem:[%s8 + $0x278] sm:$0xff]
        %v2849 = vld [vmem:[%s8 + $0x280] sm:$0xf]
        %v2850 = vld [vmem:[%s8 + $0x284] sm:$0xff]
        %v2851 = vld [vmem:[%s8 + $0x28c] sm:$0xff]
        %v2852 = vld [vmem:[%s8 + $0x294] sm:$0xff]
        %v2853 = vld [vmem:[%s8 + $0x29c] sm:$0xf]
        %v2854 = vld [vmem:[%s8 + $0x2a0] sm:$0xff]
        %v2855 = vld [vmem:[%s8 + $0x2a8] sm:$0xff]
        %v2856 = vld [vmem:[%s8 + $0x2b0] sm:$0xff]
        %v2857 = vld [vmem:[%s8 + $0x2b8] sm:$0xf]
        %v2858 = vld [vmem:[%s8 + $0x2bc] sm:$0xff]
        %v2859 = vld [vmem:[%s8 + $0x2c4] sm:$0xff]
        %v2860 = vld [vmem:[%s8 + $0x2cc] sm:$0xff]
        %v2861 = vld [vmem:[%s8 + $0x2d4] sm:$0xf]
        %v2862 = vld [vmem:[%s8 + $0x2d8] sm:$0xff]
        %v2863 = vld [vmem:[%s8 + $0x2e0] sm:$0xff]
        %v2864 = vld [vmem:[%s8 + $0x2e8] sm:$0xff]
        %v2865 = vld [vmem:[%s8 + $0x2f0] sm:$0xf]
        %v2866 = vld [vmem:[%s8 + $0x2f4] sm:$0xff]
        %v2867 = vld [vmem:[%s8 + $0x2fc] sm:$0xff]
        %v2868 = vld [vmem:[%s8 + $0x304] sm:$0xff]
        %v2869 = vld [vmem:[%s8 + $0x30c] sm:$0xf]
        %v2870 = vld [vmem:[%s8 + $0x310] sm:$0xff]
        %v2871 = vld [vmem:[%s8 + $0x318] sm:$0xff]
        %v2872 = vld [vmem:[%s8 + $0x320] sm:$0xff]
        %v2873 = vld [vmem:[%s8 + $0x328] sm:$0xf]
        %v2874 = vld [vmem:[%s8 + $0x32c] sm:$0xff]
        %v2875 = vld [vmem:[%s8 + $0x334] sm:$0xff]
        %v2876 = vld [vmem:[%s8 + $0x33c] sm:$0xff]
        %v2877 = vld [vmem:[%s8 + $0x344] sm:$0xf]
        %v2878 = vld [vmem:[%s8 + $0x348] sm:$0xff]
        %v2879 = vld [vmem:[%s8 + $0x350] sm:$0xff]
        %v2880 = vld [vmem:[%s8 + $0x358] sm:$0xff]
        %v2881 = vld [vmem:[%s8 + $0x360] sm:$0xf]
        %v2882 = vld [vmem:[%s8 + $0x364] sm:$0xff]
        %v2883 = vld [vmem:[%s8 + $0x36c] sm:$0xff]
        %v2884 = vld [vmem:[%s8 + $0x374] sm:$0xff]
        %v2885 = vld [vmem:[%s8 + $0x37c] sm:$0xf]
        %v2886 = vld [vmem:[%s8 + $0x380] sm:$0xff]
        %v2887 = vld [vmem:[%s8 + $0x388] sm:$0xff]
        %v2888 = vld [vmem:[%s8 + $0x390] sm:$0xff]
        %v2889 = vld [vmem:[%s8 + $0x398] sm:$0xf]
        %v2890 = vld [vmem:[%s8 + $0x39c] sm:$0xff]
        %v2891 = vld [vmem:[%s8 + $0x3a4] sm:$0xff]
        %v2892 = vld [vmem:[%s8 + $0x3ac] sm:$0xff]
        %v2893 = vld [vmem:[%s8 + $0x3b4] sm:$0xf]
        %v2894 = vld [vmem:[%s8 + $0x3b8] sm:$0xff]
        %v2895 = vld [vmem:[%s8 + $0x3c0] sm:$0xff]
        %v2896 = vld [vmem:[%s8 + $0x3c8] sm:$0xff]
        %v2897 = vld [vmem:[%s8 + $0x3d0] sm:$0xf]
        %v2898 = vld [vmem:[%s8 + $0x3d4] sm:$0xff]
        %v2899 = vld [vmem:[%s8 + $0x3dc] sm:$0xff]
        %v2900 = vld [vmem:[%s8 + $0x3e4] sm:$0xff]
        %v2901 = vld [vmem:[%s8 + $0x3ec] sm:$0xf]
        %v2902 = vld [vmem:[%s8 + $0x3f0] sm:$0xff]
        %v2903 = vld [vmem:[%s8 + $0x3f8] sm:$0xff]
        %v2904 = vld [vmem:[%s8 + $0x400] sm:$0xff]
        %v2905 = vld [vmem:[%s8 + $0x408] sm:$0xf]
        %v2906 = vld [vmem:[%s8 + $0x40c] sm:$0xff]
        %v2907 = vld [vmem:[%s8 + $0x414] sm:$0xff]
        %v2908 = vld [vmem:[%s8 + $0x41c] sm:$0xff]
        %v2909 = vld [vmem:[%s8 + $0x424] sm:$0xf]
        %v2910 = vld [vmem:[%s8 + $0x428] sm:$0xff]
        %v2911 = vld [vmem:[%s8 + $0x430] sm:$0xff]
        %v2912 = vld [vmem:[%s8 + $0x438] sm:$0xff]
        %v2913 = vld [vmem:[%s8 + $0x440] sm:$0xf]
        %v2914 = vld [vmem:[%s8 + $0x444] sm:$0xff]
        %v2915 = vld [vmem:[%s8 + $0x44c] sm:$0xff]
        %v2916 = vld [vmem:[%s8 + $0x454] sm:$0xff]
        %v2917 = vld [vmem:[%s8 + $0x45c] sm:$0xf]
        %v2918 = vld [vmem:[%s8 + $0x460] sm:$0xff]
        %v2919 = vld [vmem:[%s8 + $0x468] sm:$0xff]
        %v2920 = vld [vmem:[%s8 + $0x470] sm:$0xff]
        %v2921 = vld [vmem:[%s8 + $0x478] sm:$0xf]
        %v2922 = vld [vmem:[%s8 + $0x47c] sm:$0xff]
        %v2923 = vld [vmem:[%s8 + $0x484] sm:$0xff]
        %v2924 = vld [vmem:[%s8 + $0x48c] sm:$0xff]
        %v2925 = vld [vmem:[%s8 + $0x494] sm:$0xf]
        %v2926 = vld [vmem:[%s8 + $0x498] sm:$0xff]
        %v2927 = vld [vmem:[%s8 + $0x4a0] sm:$0xff]
        %v2928 = vld [vmem:[%s8 + $0x4a8] sm:$0xff]
        %v2929 = vld [vmem:[%s8 + $0x4b0] sm:$0xf]
        %v2930 = vld [vmem:[%s8 + $0x4b4] sm:$0xff]
        %v2931 = vld [vmem:[%s8 + $0x4bc] sm:$0xff]
        %v2932 = vld [vmem:[%s8 + $0x4c4] sm:$0xff]
        %v2933 = vld [vmem:[%s8 + $0x4cc] sm:$0xf]
        %v2934 = vld [vmem:[%s8 + $0x4d0] sm:$0xff]
        %v2935 = vld [vmem:[%s8 + $0x4d8] sm:$0xff]
        %v2936 = vld [vmem:[%s8 + $0x4e0] sm:$0xff]
        %v2937 = vld [vmem:[%s8 + $0x4e8] sm:$0xf]
        %v2938 = vld [vmem:[%s8 + $0x4ec] sm:$0xff]
        %v2939 = vld [vmem:[%s8 + $0x4f4] sm:$0xff]
        %v2940 = vld [vmem:[%s8 + $0x4fc] sm:$0xff]
        %v2941 = vld [vmem:[%s8 + $0x504] sm:$0xf]
        %v2942 = vld [vmem:[%s8 + $0x508] sm:$0xff]
        %v2943 = vld [vmem:[%s8 + $0x510] sm:$0xff]
        %v2944 = vld [vmem:[%s8 + $0x518] sm:$0xff]
        %v2945 = vld [vmem:[%s8 + $0x520] sm:$0xf]
        %v2946 = vld [vmem:[%s8 + $0x524] sm:$0xff]
        %v2947 = vld [vmem:[%s8 + $0x52c] sm:$0xff]
        %v2948 = vld [vmem:[%s8 + $0x534] sm:$0xff]
        %v2949 = vld [vmem:[%s8 + $0x53c] sm:$0xf]
        %v2950 = vld [vmem:[%s8 + $0x540] sm:$0xff]
        %v2951 = vld [vmem:[%s8 + $0x548] sm:$0xff]
        %v2952 = vld [vmem:[%s8 + $0x550] sm:$0xff]
        %v2953 = vld [vmem:[%s8 + $0x558] sm:$0xf]
        %v2954 = vld [vmem:[%s8 + $0x55c] sm:$0xff]
        %v2955 = vld [vmem:[%s8 + $0x564] sm:$0xff]
        %v2956 = vld [vmem:[%s8 + $0x56c] sm:$0xff]
        %v2957 = vld [vmem:[%s8 + $0x574] sm:$0xf]
        %v2958 = vld [vmem:[%s9] sm:$0x7f]
        %v2960 = vlaneseq
        %v2961 = vshrl.u32 %v2960, 7
        %v2962 = vsub.s32 0, %v2961
        %v2963 = vrot.slane %v2958, %v2962
        %v2964 = vlaneseq
        %v2965 = vshrl.u32 %v2964, 7
        %v2966 = vsub.s32 1, %v2965
        %v2967 = vrot.slane %v2958, %v2966
        %v2968 = vlaneseq
        %v2969 = vshrl.u32 %v2968, 7
        %v2970 = vsub.s32 2, %v2969
        %v2971 = vrot.slane %v2958, %v2970
        %v2972 = vlaneseq
        %v2973 = vshrl.u32 %v2972, 7
        %v2974 = vsub.s32 3, %v2973
        %v2975 = vrot.slane %v2958, %v2974
        %v2976 = vlaneseq
        %v2977 = vshrl.u32 %v2976, 7
        %v2978 = vsub.s32 4, %v2977
        %v2979 = vrot.slane %v2958, %v2978
        %v2980 = vlaneseq
        %v2981 = vshrl.u32 %v2980, 7
        %v2982 = vsub.s32 5, %v2981
        %v2983 = vrot.slane %v2958, %v2982
        %v2984 = vlaneseq
        %v2985 = vshrl.u32 %v2984, 7
        %v2986 = vsub.s32 6, %v2985
        %v2987 = vrot.slane %v2958, %v2986
        %v3195 = vunpack.c.l.b16 %v2758
        %v3196 = vunpack.c.h.b16 %v2758
        %v3197 = vunpack.c.l.b16 %v2759
        %v3198 = vunpack.c.h.b16 %v2759
        %v3199 = vunpack.c.l.b16 %v2760
        %v3200 = vunpack.c.h.b16 %v2760
        %v3201 = vunpack.c.l.b16 %v2761
        %v3202 = vunpack.c.l.b16 %v2762
        %v3203 = vunpack.c.h.b16 %v2762
        %v3204 = vunpack.c.l.b16 %v2763
        %v3205 = vunpack.c.h.b16 %v2763
        %v3206 = vunpack.c.l.b16 %v2764
        %v3207 = vunpack.c.h.b16 %v2764
        %v3208 = vunpack.c.l.b16 %v2765
        %v3209 = vunpack.c.l.b16 %v2766
        %v3210 = vunpack.c.h.b16 %v2766
        %v3211 = vunpack.c.l.b16 %v2767
        %v3212 = vunpack.c.h.b16 %v2767
        %v3213 = vunpack.c.l.b16 %v2768
        %v3214 = vunpack.c.h.b16 %v2768
        %v3215 = vunpack.c.l.b16 %v2769
        %v3216 = vunpack.c.l.b16 %v2770
        %v3217 = vunpack.c.h.b16 %v2770
        %v3218 = vunpack.c.l.b16 %v2771
        %v3219 = vunpack.c.h.b16 %v2771
        %v3220 = vunpack.c.l.b16 %v2772
        %v3221 = vunpack.c.h.b16 %v2772
        %v3222 = vunpack.c.l.b16 %v2773
        %v3223 = vunpack.c.l.b16 %v2774
        %v3224 = vunpack.c.h.b16 %v2774
        %v3225 = vunpack.c.l.b16 %v2775
        %v3226 = vunpack.c.h.b16 %v2775
        %v3227 = vunpack.c.l.b16 %v2776
        %v3228 = vunpack.c.h.b16 %v2776
        %v3229 = vunpack.c.l.b16 %v2777
        %v3230 = vunpack.c.l.b16 %v2778
        %v3231 = vunpack.c.h.b16 %v2778
        %v3232 = vunpack.c.l.b16 %v2779
        %v3233 = vunpack.c.h.b16 %v2779
        %v3234 = vunpack.c.l.b16 %v2780
        %v3235 = vunpack.c.h.b16 %v2780
        %v3236 = vunpack.c.l.b16 %v2781
        %v3237 = vunpack.c.l.b16 %v2782
        %v3238 = vunpack.c.h.b16 %v2782
        %v3239 = vunpack.c.l.b16 %v2783
        %v3240 = vunpack.c.h.b16 %v2783
        %v3241 = vunpack.c.l.b16 %v2784
        %v3242 = vunpack.c.h.b16 %v2784
        %v3243 = vunpack.c.l.b16 %v2785
        %v3244 = vunpack.c.l.b16 %v2786
        %v3245 = vunpack.c.h.b16 %v2786
        %v3246 = vunpack.c.l.b16 %v2787
        %v3247 = vunpack.c.h.b16 %v2787
        %v3248 = vunpack.c.l.b16 %v2788
        %v3249 = vunpack.c.h.b16 %v2788
        %v3250 = vunpack.c.l.b16 %v2789
        %v3251 = vunpack.c.l.b16 %v2790
        %v3252 = vunpack.c.h.b16 %v2790
        %v3253 = vunpack.c.l.b16 %v2791
        %v3254 = vunpack.c.h.b16 %v2791
        %v3255 = vunpack.c.l.b16 %v2792
        %v3256 = vunpack.c.h.b16 %v2792
        %v3257 = vunpack.c.l.b16 %v2793
        %v3258 = vunpack.c.l.b16 %v2794
        %v3259 = vunpack.c.h.b16 %v2794
        %v3260 = vunpack.c.l.b16 %v2795
        %v3261 = vunpack.c.h.b16 %v2795
        %v3262 = vunpack.c.l.b16 %v2796
        %v3263 = vunpack.c.h.b16 %v2796
        %v3264 = vunpack.c.l.b16 %v2797
        %v3265 = vunpack.c.l.b16 %v2798
        %v3266 = vunpack.c.h.b16 %v2798
        %v3267 = vunpack.c.l.b16 %v2799
        %v3268 = vunpack.c.h.b16 %v2799
        %v3269 = vunpack.c.l.b16 %v2800
        %v3270 = vunpack.c.h.b16 %v2800
        %v3271 = vunpack.c.l.b16 %v2801
        %v3272 = vunpack.c.l.b16 %v2802
        %v3273 = vunpack.c.h.b16 %v2802
        %v3274 = vunpack.c.l.b16 %v2803
        %v3275 = vunpack.c.h.b16 %v2803
        %v3276 = vunpack.c.l.b16 %v2804
        %v3277 = vunpack.c.h.b16 %v2804
        %v3278 = vunpack.c.l.b16 %v2805
        %v3279 = vunpack.c.l.b16 %v2806
        %v3280 = vunpack.c.h.b16 %v2806
        %v3281 = vunpack.c.l.b16 %v2807
        %v3282 = vunpack.c.h.b16 %v2807
        %v3283 = vunpack.c.l.b16 %v2808
        %v3284 = vunpack.c.h.b16 %v2808
        %v3285 = vunpack.c.l.b16 %v2809
        %v3286 = vunpack.c.l.b16 %v2810
        %v3287 = vunpack.c.h.b16 %v2810
        %v3288 = vunpack.c.l.b16 %v2811
        %v3289 = vunpack.c.h.b16 %v2811
        %v3290 = vunpack.c.l.b16 %v2812
        %v3291 = vunpack.c.h.b16 %v2812
        %v3292 = vunpack.c.l.b16 %v2813
        %v3293 = vunpack.c.l.b16 %v2814
        %v3294 = vunpack.c.h.b16 %v2814
        %v3295 = vunpack.c.l.b16 %v2815
        %v3296 = vunpack.c.h.b16 %v2815
        %v3297 = vunpack.c.l.b16 %v2816
        %v3298 = vunpack.c.h.b16 %v2816
        %v3299 = vunpack.c.l.b16 %v2817
        %v3300 = vunpack.c.l.b16 %v2818
        %v3301 = vunpack.c.h.b16 %v2818
        %v3302 = vunpack.c.l.b16 %v2819
        %v3303 = vunpack.c.h.b16 %v2819
        %v3304 = vunpack.c.l.b16 %v2820
        %v3305 = vunpack.c.h.b16 %v2820
        %v3306 = vunpack.c.l.b16 %v2821
        %v3307 = vunpack.c.l.b16 %v2822
        %v3308 = vunpack.c.h.b16 %v2822
        %v3309 = vunpack.c.l.b16 %v2823
        %v3310 = vunpack.c.h.b16 %v2823
        %v3311 = vunpack.c.l.b16 %v2824
        %v3312 = vunpack.c.h.b16 %v2824
        %v3313 = vunpack.c.l.b16 %v2825
        %v3314 = vunpack.c.l.b16 %v2826
        %v3315 = vunpack.c.h.b16 %v2826
        %v3316 = vunpack.c.l.b16 %v2827
        %v3317 = vunpack.c.h.b16 %v2827
        %v3318 = vunpack.c.l.b16 %v2828
        %v3319 = vunpack.c.h.b16 %v2828
        %v3320 = vunpack.c.l.b16 %v2829
        %v3321 = vunpack.c.l.b16 %v2830
        %v3322 = vunpack.c.h.b16 %v2830
        %v3323 = vunpack.c.l.b16 %v2831
        %v3324 = vunpack.c.h.b16 %v2831
        %v3325 = vunpack.c.l.b16 %v2832
        %v3326 = vunpack.c.h.b16 %v2832
        %v3327 = vunpack.c.l.b16 %v2833
        %v3328 = vunpack.c.l.b16 %v2834
        %v3329 = vunpack.c.h.b16 %v2834
        %v3330 = vunpack.c.l.b16 %v2835
        %v3331 = vunpack.c.h.b16 %v2835
        %v3332 = vunpack.c.l.b16 %v2836
        %v3333 = vunpack.c.h.b16 %v2836
        %v3334 = vunpack.c.l.b16 %v2837
        %v3335 = vunpack.c.l.b16 %v2838
        %v3336 = vunpack.c.h.b16 %v2838
        %v3337 = vunpack.c.l.b16 %v2839
        %v3338 = vunpack.c.h.b16 %v2839
        %v3339 = vunpack.c.l.b16 %v2840
        %v3340 = vunpack.c.h.b16 %v2840
        %v3341 = vunpack.c.l.b16 %v2841
        %v3342 = vunpack.c.l.b16 %v2842
        %v3343 = vunpack.c.h.b16 %v2842
        %v3344 = vunpack.c.l.b16 %v2843
        %v3345 = vunpack.c.h.b16 %v2843
        %v3346 = vunpack.c.l.b16 %v2844
        %v3347 = vunpack.c.h.b16 %v2844
        %v3348 = vunpack.c.l.b16 %v2845
        %v3349 = vunpack.c.l.b16 %v2846
        %v3350 = vunpack.c.h.b16 %v2846
        %v3351 = vunpack.c.l.b16 %v2847
        %v3352 = vunpack.c.h.b16 %v2847
        %v3353 = vunpack.c.l.b16 %v2848
        %v3354 = vunpack.c.h.b16 %v2848
        %v3355 = vunpack.c.l.b16 %v2849
        %v3356 = vunpack.c.l.b16 %v2850
        %v3357 = vunpack.c.h.b16 %v2850
        %v3358 = vunpack.c.l.b16 %v2851
        %v3359 = vunpack.c.h.b16 %v2851
        %v3360 = vunpack.c.l.b16 %v2852
        %v3361 = vunpack.c.h.b16 %v2852
        %v3362 = vunpack.c.l.b16 %v2853
        %v3363 = vunpack.c.l.b16 %v2854
        %v3364 = vunpack.c.h.b16 %v2854
        %v3365 = vunpack.c.l.b16 %v2855
        %v3366 = vunpack.c.h.b16 %v2855
        %v3367 = vunpack.c.l.b16 %v2856
        %v3368 = vunpack.c.h.b16 %v2856
        %v3369 = vunpack.c.l.b16 %v2857
        %v3370 = vunpack.c.l.b16 %v2858
        %v3371 = vunpack.c.h.b16 %v2858
        %v3372 = vunpack.c.l.b16 %v2859
        %v3373 = vunpack.c.h.b16 %v2859
        %v3374 = vunpack.c.l.b16 %v2860
        %v3375 = vunpack.c.h.b16 %v2860
        %v3376 = vunpack.c.l.b16 %v2861
        %v3377 = vunpack.c.l.b16 %v2862
        %v3378 = vunpack.c.h.b16 %v2862
        %v3379 = vunpack.c.l.b16 %v2863
        %v3380 = vunpack.c.h.b16 %v2863
        %v3381 = vunpack.c.l.b16 %v2864
        %v3382 = vunpack.c.h.b16 %v2864
        %v3383 = vunpack.c.l.b16 %v2865
        %v3384 = vunpack.c.l.b16 %v2866
        %v3385 = vunpack.c.h.b16 %v2866
        %v3386 = vunpack.c.l.b16 %v2867
        %v3387 = vunpack.c.h.b16 %v2867
        %v3388 = vunpack.c.l.b16 %v2868
        %v3389 = vunpack.c.h.b16 %v2868
        %v3390 = vunpack.c.l.b16 %v2869
        %v3391 = vunpack.c.l.b16 %v2870
        %v3392 = vunpack.c.h.b16 %v2870
        %v3393 = vunpack.c.l.b16 %v2871
        %v3394 = vunpack.c.h.b16 %v2871
        %v3395 = vunpack.c.l.b16 %v2872
        %v3396 = vunpack.c.h.b16 %v2872
        %v3397 = vunpack.c.l.b16 %v2873
        %v3398 = vunpack.c.l.b16 %v2874
        %v3399 = vunpack.c.h.b16 %v2874
        %v3400 = vunpack.c.l.b16 %v2875
        %v3401 = vunpack.c.h.b16 %v2875
        %v3402 = vunpack.c.l.b16 %v2876
        %v3403 = vunpack.c.h.b16 %v2876
        %v3404 = vunpack.c.l.b16 %v2877
        %v3405 = vunpack.c.l.b16 %v2878
        %v3406 = vunpack.c.h.b16 %v2878
        %v3407 = vunpack.c.l.b16 %v2879
        %v3408 = vunpack.c.h.b16 %v2879
        %v3409 = vunpack.c.l.b16 %v2880
        %v3410 = vunpack.c.h.b16 %v2880
        %v3411 = vunpack.c.l.b16 %v2881
        %v3412 = vunpack.c.l.b16 %v2882
        %v3413 = vunpack.c.h.b16 %v2882
        %v3414 = vunpack.c.l.b16 %v2883
        %v3415 = vunpack.c.h.b16 %v2883
        %v3416 = vunpack.c.l.b16 %v2884
        %v3417 = vunpack.c.h.b16 %v2884
        %v3418 = vunpack.c.l.b16 %v2885
        %v3419 = vunpack.c.l.b16 %v2886
        %v3420 = vunpack.c.h.b16 %v2886
        %v3421 = vunpack.c.l.b16 %v2887
        %v3422 = vunpack.c.h.b16 %v2887
        %v3423 = vunpack.c.l.b16 %v2888
        %v3424 = vunpack.c.h.b16 %v2888
        %v3425 = vunpack.c.l.b16 %v2889
        %v3426 = vunpack.c.l.b16 %v2890
        %v3427 = vunpack.c.h.b16 %v2890
        %v3428 = vunpack.c.l.b16 %v2891
        %v3429 = vunpack.c.h.b16 %v2891
        %v3430 = vunpack.c.l.b16 %v2892
        %v3431 = vunpack.c.h.b16 %v2892
        %v3432 = vunpack.c.l.b16 %v2893
        %v3433 = vunpack.c.l.b16 %v2894
        %v3434 = vunpack.c.h.b16 %v2894
        %v3435 = vunpack.c.l.b16 %v2895
        %v3436 = vunpack.c.h.b16 %v2895
        %v3437 = vunpack.c.l.b16 %v2896
        %v3438 = vunpack.c.h.b16 %v2896
        %v3439 = vunpack.c.l.b16 %v2897
        %v3440 = vunpack.c.l.b16 %v2898
        %v3441 = vunpack.c.h.b16 %v2898
        %v3442 = vunpack.c.l.b16 %v2899
        %v3443 = vunpack.c.h.b16 %v2899
        %v3444 = vunpack.c.l.b16 %v2900
        %v3445 = vunpack.c.h.b16 %v2900
        %v3446 = vunpack.c.l.b16 %v2901
        %v3447 = vunpack.c.l.b16 %v2902
        %v3448 = vunpack.c.h.b16 %v2902
        %v3449 = vunpack.c.l.b16 %v2903
        %v3450 = vunpack.c.h.b16 %v2903
        %v3451 = vunpack.c.l.b16 %v2904
        %v3452 = vunpack.c.h.b16 %v2904
        %v3453 = vunpack.c.l.b16 %v2905
        %v3454 = vunpack.c.l.b16 %v2906
        %v3455 = vunpack.c.h.b16 %v2906
        %v3456 = vunpack.c.l.b16 %v2907
        %v3457 = vunpack.c.h.b16 %v2907
        %v3458 = vunpack.c.l.b16 %v2908
        %v3459 = vunpack.c.h.b16 %v2908
        %v3460 = vunpack.c.l.b16 %v2909
        %v3461 = vunpack.c.l.b16 %v2910
        %v3462 = vunpack.c.h.b16 %v2910
        %v3463 = vunpack.c.l.b16 %v2911
        %v3464 = vunpack.c.h.b16 %v2911
        %v3465 = vunpack.c.l.b16 %v2912
        %v3466 = vunpack.c.h.b16 %v2912
        %v3467 = vunpack.c.l.b16 %v2913
        %v3468 = vunpack.c.l.b16 %v2914
        %v3469 = vunpack.c.h.b16 %v2914
        %v3470 = vunpack.c.l.b16 %v2915
        %v3471 = vunpack.c.h.b16 %v2915
        %v3472 = vunpack.c.l.b16 %v2916
        %v3473 = vunpack.c.h.b16 %v2916
        %v3474 = vunpack.c.l.b16 %v2917
        %v3475 = vunpack.c.l.b16 %v2918
        %v3476 = vunpack.c.h.b16 %v2918
        %v3477 = vunpack.c.l.b16 %v2919
        %v3478 = vunpack.c.h.b16 %v2919
        %v3479 = vunpack.c.l.b16 %v2920
        %v3480 = vunpack.c.h.b16 %v2920
        %v3481 = vunpack.c.l.b16 %v2921
        %v3482 = vunpack.c.l.b16 %v2922
        %v3483 = vunpack.c.h.b16 %v2922
        %v3484 = vunpack.c.l.b16 %v2923
        %v3485 = vunpack.c.h.b16 %v2923
        %v3486 = vunpack.c.l.b16 %v2924
        %v3487 = vunpack.c.h.b16 %v2924
        %v3488 = vunpack.c.l.b16 %v2925
        %v3489 = vunpack.c.l.b16 %v2926
        %v3490 = vunpack.c.h.b16 %v2926
        %v3491 = vunpack.c.l.b16 %v2927
        %v3492 = vunpack.c.h.b16 %v2927
        %v3493 = vunpack.c.l.b16 %v2928
        %v3494 = vunpack.c.h.b16 %v2928
        %v3495 = vunpack.c.l.b16 %v2929
        %v3496 = vunpack.c.l.b16 %v2930
        %v3497 = vunpack.c.h.b16 %v2930
        %v3498 = vunpack.c.l.b16 %v2931
        %v3499 = vunpack.c.h.b16 %v2931
        %v3500 = vunpack.c.l.b16 %v2932
        %v3501 = vunpack.c.h.b16 %v2932
        %v3502 = vunpack.c.l.b16 %v2933
        %v3503 = vunpack.c.l.b16 %v2934
        %v3504 = vunpack.c.h.b16 %v2934
        %v3505 = vunpack.c.l.b16 %v2935
        %v3506 = vunpack.c.h.b16 %v2935
        %v3507 = vunpack.c.l.b16 %v2936
        %v3508 = vunpack.c.h.b16 %v2936
        %v3509 = vunpack.c.l.b16 %v2937
        %v3510 = vunpack.c.l.b16 %v2938
        %v3511 = vunpack.c.h.b16 %v2938
        %v3512 = vunpack.c.l.b16 %v2939
        %v3513 = vunpack.c.h.b16 %v2939
        %v3514 = vunpack.c.l.b16 %v2940
        %v3515 = vunpack.c.h.b16 %v2940
        %v3516 = vunpack.c.l.b16 %v2941
        %v3517 = vunpack.c.l.b16 %v2942
        %v3518 = vunpack.c.h.b16 %v2942
        %v3519 = vunpack.c.l.b16 %v2943
        %v3520 = vunpack.c.h.b16 %v2943
        %v3521 = vunpack.c.l.b16 %v2944
        %v3522 = vunpack.c.h.b16 %v2944
        %v3523 = vunpack.c.l.b16 %v2945
        %v3524 = vunpack.c.l.b16 %v2946
        %v3525 = vunpack.c.h.b16 %v2946
        %v3526 = vunpack.c.l.b16 %v2947
        %v3527 = vunpack.c.h.b16 %v2947
        %v3528 = vunpack.c.l.b16 %v2948
        %v3529 = vunpack.c.h.b16 %v2948
        %v3530 = vunpack.c.l.b16 %v2949
        %v3531 = vunpack.c.l.b16 %v2950
        %v3532 = vunpack.c.h.b16 %v2950
        %v3533 = vunpack.c.l.b16 %v2951
        %v3534 = vunpack.c.h.b16 %v2951
        %v3535 = vunpack.c.l.b16 %v2952
        %v3536 = vunpack.c.h.b16 %v2952
        %v3537 = vunpack.c.l.b16 %v2953
        %v3538 = vunpack.c.l.b16 %v2954
        %v3539 = vunpack.c.h.b16 %v2954
        %v3540 = vunpack.c.l.b16 %v2955
        %v3541 = vunpack.c.h.b16 %v2955
        %v3542 = vunpack.c.l.b16 %v2956
        %v3543 = vunpack.c.h.b16 %v2956
        %v3544 = vunpack.c.l.b16 %v2957
        %v3545 = vpack.c.b16 %v3202, %v3195
        %v3546 = vpack.c.b16 %v3203, %v3196
        %v3547 = vpack.c.b16 %v3204, %v3197
        %v3548 = vpack.c.b16 %v3205, %v3198
        %v3549 = vpack.c.b16 %v3206, %v3199
        %v3550 = vpack.c.b16 %v3207, %v3200
        %v3551 = vpack.c.b16 %v3208, %v3201
        %v3552 = vpack.c.b16 %v3216, %v3209
        %v3553 = vpack.c.b16 %v3217, %v3210
        %v3554 = vpack.c.b16 %v3218, %v3211
        %v3555 = vpack.c.b16 %v3219, %v3212
        %v3556 = vpack.c.b16 %v3220, %v3213
        %v3557 = vpack.c.b16 %v3221, %v3214
        %v3558 = vpack.c.b16 %v3222, %v3215
        %v3559 = vpack.c.b16 %v3230, %v3223
        %v3560 = vpack.c.b16 %v3231, %v3224
        %v3561 = vpack.c.b16 %v3232, %v3225
        %v3562 = vpack.c.b16 %v3233, %v3226
        %v3563 = vpack.c.b16 %v3234, %v3227
        %v3564 = vpack.c.b16 %v3235, %v3228
        %v3565 = vpack.c.b16 %v3236, %v3229
        %v3566 = vpack.c.b16 %v3244, %v3237
        %v3567 = vpack.c.b16 %v3245, %v3238
        %v3568 = vpack.c.b16 %v3246, %v3239
        %v3569 = vpack.c.b16 %v3247, %v3240
        %v3570 = vpack.c.b16 %v3248, %v3241
        %v3571 = vpack.c.b16 %v3249, %v3242
        %v3572 = vpack.c.b16 %v3250, %v3243
        %v3573 = vpack.c.b16 %v3258, %v3251
        %v3574 = vpack.c.b16 %v3259, %v3252
        %v3575 = vpack.c.b16 %v3260, %v3253
        %v3576 = vpack.c.b16 %v3261, %v3254
        %v3577 = vpack.c.b16 %v3262, %v3255
        %v3578 = vpack.c.b16 %v3263, %v3256
        %v3579 = vpack.c.b16 %v3264, %v3257
        %v3580 = vpack.c.b16 %v3272, %v3265
        %v3581 = vpack.c.b16 %v3273, %v3266
        %v3582 = vpack.c.b16 %v3274, %v3267
        %v3583 = vpack.c.b16 %v3275, %v3268
        %v3584 = vpack.c.b16 %v3276, %v3269
        %v3585 = vpack.c.b16 %v3277, %v3270
        %v3586 = vpack.c.b16 %v3278, %v3271
        %v3587 = vpack.c.b16 %v3286, %v3279
        %v3588 = vpack.c.b16 %v3287, %v3280
        %v3589 = vpack.c.b16 %v3288, %v3281
        %v3590 = vpack.c.b16 %v3289, %v3282
        %v3591 = vpack.c.b16 %v3290, %v3283
        %v3592 = vpack.c.b16 %v3291, %v3284
        %v3593 = vpack.c.b16 %v3292, %v3285
        %v3594 = vpack.c.b16 %v3300, %v3293
        %v3595 = vpack.c.b16 %v3301, %v3294
        %v3596 = vpack.c.b16 %v3302, %v3295
        %v3597 = vpack.c.b16 %v3303, %v3296
        %v3598 = vpack.c.b16 %v3304, %v3297
        %v3599 = vpack.c.b16 %v3305, %v3298
        %v3600 = vpack.c.b16 %v3306, %v3299
        %v3601 = vpack.c.b16 %v3314, %v3307
        %v3602 = vpack.c.b16 %v3315, %v3308
        %v3603 = vpack.c.b16 %v3316, %v3309
        %v3604 = vpack.c.b16 %v3317, %v3310
        %v3605 = vpack.c.b16 %v3318, %v3311
        %v3606 = vpack.c.b16 %v3319, %v3312
        %v3607 = vpack.c.b16 %v3320, %v3313
        %v3608 = vpack.c.b16 %v3328, %v3321
        %v3609 = vpack.c.b16 %v3329, %v3322
        %v3610 = vpack.c.b16 %v3330, %v3323
        %v3611 = vpack.c.b16 %v3331, %v3324
        %v3612 = vpack.c.b16 %v3332, %v3325
        %v3613 = vpack.c.b16 %v3333, %v3326
        %v3614 = vpack.c.b16 %v3334, %v3327
        %v3615 = vpack.c.b16 %v3342, %v3335
        %v3616 = vpack.c.b16 %v3343, %v3336
        %v3617 = vpack.c.b16 %v3344, %v3337
        %v3618 = vpack.c.b16 %v3345, %v3338
        %v3619 = vpack.c.b16 %v3346, %v3339
        %v3620 = vpack.c.b16 %v3347, %v3340
        %v3621 = vpack.c.b16 %v3348, %v3341
        %v3622 = vpack.c.b16 %v3356, %v3349
        %v3623 = vpack.c.b16 %v3357, %v3350
        %v3624 = vpack.c.b16 %v3358, %v3351
        %v3625 = vpack.c.b16 %v3359, %v3352
        %v3626 = vpack.c.b16 %v3360, %v3353
        %v3627 = vpack.c.b16 %v3361, %v3354
        %v3628 = vpack.c.b16 %v3362, %v3355
        %v3629 = vpack.c.b16 %v3370, %v3363
        %v3630 = vpack.c.b16 %v3371, %v3364
        %v3631 = vpack.c.b16 %v3372, %v3365
        %v3632 = vpack.c.b16 %v3373, %v3366
        %v3633 = vpack.c.b16 %v3374, %v3367
        %v3634 = vpack.c.b16 %v3375, %v3368
        %v3635 = vpack.c.b16 %v3376, %v3369
        %v3636 = vpack.c.b16 %v3384, %v3377
        %v3637 = vpack.c.b16 %v3385, %v3378
        %v3638 = vpack.c.b16 %v3386, %v3379
        %v3639 = vpack.c.b16 %v3387, %v3380
        %v3640 = vpack.c.b16 %v3388, %v3381
        %v3641 = vpack.c.b16 %v3389, %v3382
        %v3642 = vpack.c.b16 %v3390, %v3383
        %v3643 = vpack.c.b16 %v3398, %v3391
        %v3644 = vpack.c.b16 %v3399, %v3392
        %v3645 = vpack.c.b16 %v3400, %v3393
        %v3646 = vpack.c.b16 %v3401, %v3394
        %v3647 = vpack.c.b16 %v3402, %v3395
        %v3648 = vpack.c.b16 %v3403, %v3396
        %v3649 = vpack.c.b16 %v3404, %v3397
        %v3650 = vpack.c.b16 %v3412, %v3405
        %v3651 = vpack.c.b16 %v3413, %v3406
        %v3652 = vpack.c.b16 %v3414, %v3407
        %v3653 = vpack.c.b16 %v3415, %v3408
        %v3654 = vpack.c.b16 %v3416, %v3409
        %v3655 = vpack.c.b16 %v3417, %v3410
        %v3656 = vpack.c.b16 %v3418, %v3411
        %v3657 = vpack.c.b16 %v3426, %v3419
        %v3658 = vpack.c.b16 %v3427, %v3420
        %v3659 = vpack.c.b16 %v3428, %v3421
        %v3660 = vpack.c.b16 %v3429, %v3422
        %v3661 = vpack.c.b16 %v3430, %v3423
        %v3662 = vpack.c.b16 %v3431, %v3424
        %v3663 = vpack.c.b16 %v3432, %v3425
        %v3664 = vpack.c.b16 %v3440, %v3433
        %v3665 = vpack.c.b16 %v3441, %v3434
        %v3666 = vpack.c.b16 %v3442, %v3435
        %v3667 = vpack.c.b16 %v3443, %v3436
        %v3668 = vpack.c.b16 %v3444, %v3437
        %v3669 = vpack.c.b16 %v3445, %v3438
        %v3670 = vpack.c.b16 %v3446, %v3439
        %v3671 = vpack.c.b16 %v3454, %v3447
        %v3672 = vpack.c.b16 %v3455, %v3448
        %v3673 = vpack.c.b16 %v3456, %v3449
        %v3674 = vpack.c.b16 %v3457, %v3450
        %v3675 = vpack.c.b16 %v3458, %v3451
        %v3676 = vpack.c.b16 %v3459, %v3452
        %v3677 = vpack.c.b16 %v3460, %v3453
        %v3678 = vpack.c.b16 %v3468, %v3461
        %v3679 = vpack.c.b16 %v3469, %v3462
        %v3680 = vpack.c.b16 %v3470, %v3463
        %v3681 = vpack.c.b16 %v3471, %v3464
        %v3682 = vpack.c.b16 %v3472, %v3465
        %v3683 = vpack.c.b16 %v3473, %v3466
        %v3684 = vpack.c.b16 %v3474, %v3467
        %v3685 = vpack.c.b16 %v3482, %v3475
        %v3686 = vpack.c.b16 %v3483, %v3476
        %v3687 = vpack.c.b16 %v3484, %v3477
        %v3688 = vpack.c.b16 %v3485, %v3478
        %v3689 = vpack.c.b16 %v3486, %v3479
        %v3690 = vpack.c.b16 %v3487, %v3480
        %v3691 = vpack.c.b16 %v3488, %v3481
        %v3692 = vpack.c.b16 %v3496, %v3489
        %v3693 = vpack.c.b16 %v3497, %v3490
        %v3694 = vpack.c.b16 %v3498, %v3491
        %v3695 = vpack.c.b16 %v3499, %v3492
        %v3696 = vpack.c.b16 %v3500, %v3493
        %v3697 = vpack.c.b16 %v3501, %v3494
        %v3698 = vpack.c.b16 %v3502, %v3495
        %v3699 = vpack.c.b16 %v3510, %v3503
        %v3700 = vpack.c.b16 %v3511, %v3504
        %v3701 = vpack.c.b16 %v3512, %v3505
        %v3702 = vpack.c.b16 %v3513, %v3506
        %v3703 = vpack.c.b16 %v3514, %v3507
        %v3704 = vpack.c.b16 %v3515, %v3508
        %v3705 = vpack.c.b16 %v3516, %v3509
        %v3706 = vpack.c.b16 %v3524, %v3517
        %v3707 = vpack.c.b16 %v3525, %v3518
        %v3708 = vpack.c.b16 %v3526, %v3519
        %v3709 = vpack.c.b16 %v3527, %v3520
        %v3710 = vpack.c.b16 %v3528, %v3521
        %v3711 = vpack.c.b16 %v3529, %v3522
        %v3712 = vpack.c.b16 %v3530, %v3523
        %v3713 = vpack.c.b16 %v3538, %v3531
        %v3714 = vpack.c.b16 %v3539, %v3532
        %v3715 = vpack.c.b16 %v3540, %v3533
        %v3716 = vpack.c.b16 %v3541, %v3534
        %v3717 = vpack.c.b16 %v3542, %v3535
        %v3718 = vpack.c.b16 %v3543, %v3536
        %v3719 = vpack.c.b16 %v3544, %v3537
        %v3896 = vsel %vm1672, %v2757, 0
        %3898 = vmatprep.subr.bf16.mxu0 %v3595
        %3899 = vmatpush1.bf16.msra.mxu0 %v3594
        %3900 = vmatprep.subr.bf16.mxu0 %v3588
        %3901 = vmatpush1.bf16.msra.mxu0 %v3587
        %3902 = vmatprep.subr.bf16.mxu0 %v3581
        %3903 = vmatpush1.bf16.msra.mxu0 %v3580
        %3904 = vmatprep.subr.bf16.mxu0 %v3574
        %3905 = vmatpush1.bf16.msra.mxu0 %v3573
        %3906 = vmatprep.subr.bf16.mxu0 %v3567
        %3907 = vmatpush1.bf16.msra.mxu0 %v3566
        %3908 = vmatprep.subr.bf16.mxu0 %v3560
        %3909 = vmatpush1.bf16.msra.mxu0 %v3559
        %3910 = vmatprep.subr.bf16.mxu0 %v3553
        %3911 = vmatpush1.bf16.msra.mxu0 %v3552
        %3912 = vmatprep.subr.bf16.mxu0 %v3546
        %3913 = vmatpush1.bf16.msra.mxu0 %v3545
        %3914 = vmatprep.subr.bf16.mxu0 %v3651
        %3915 = vmatpush2.bf16.msra.mxu0 %v3650
        %3916 = vmatprep.subr.bf16.mxu0 %v3644
        %3917 = vmatpush2.bf16.msra.mxu0 %v3643
        %3918 = vmatprep.subr.bf16.mxu0 %v3637
        %3919 = vmatpush2.bf16.msra.mxu0 %v3636
        %3920 = vmatprep.subr.bf16.mxu0 %v3630
        %3921 = vmatpush2.bf16.msra.mxu0 %v3629
        %3922 = vmatprep.subr.bf16.mxu0 %v3623
        %3923 = vmatpush2.bf16.msra.mxu0 %v3622
        %3924 = vmatprep.subr.bf16.mxu0 %v3616
        %3925 = vmatpush2.bf16.msra.mxu0 %v3615
        %3926 = vmatprep.subr.bf16.mxu0 %v3609
        %3927 = vmatpush2.bf16.msra.mxu0 %v3608
        %3928 = vmatprep.subr.bf16.mxu0 %v3602
        %3929 = vmatpush2.bf16.msra.mxu0 %v3601
        %3930 = vmatprep.mubr.bf16.mxu0 %v2755
        %3931 = vmatmul.mubr.bf16.gmra.mxu0 %v2754
        %v3932 = vpop.f32.mrf.mxu0
        %v3933 = vadd.f32 %v2963, %v3932
        %v3934 = vpop.f32.mrf.mxu0
        %v3935 = vadd.f32 %v2967, %v3934
        %v3936 = vpop.f32.mrf.mxu0
        %v3937 = vadd.f32 %v2963, %v3936
        %v3938 = vpop.f32.mrf.mxu0
        %v3939 = vadd.f32 %v2967, %v3938
        %3940 = vdwg.mxu0
        %3941 = vmatprep.subr.bf16.mxu0 %v3707
        %3942 = vmatpush1.bf16.msra.mxu0 %v3706
        %3943 = vmatprep.subr.bf16.mxu0 %v3700
        %3944 = vmatpush1.bf16.msra.mxu0 %v3699
        %3945 = vmatprep.subr.bf16.mxu0 %v3693
        %3946 = vmatpush1.bf16.msra.mxu0 %v3692
        %3947 = vmatprep.subr.bf16.mxu0 %v3686
        %3948 = vmatpush1.bf16.msra.mxu0 %v3685
        %3949 = vmatprep.subr.bf16.mxu0 %v3679
        %3950 = vmatpush1.bf16.msra.mxu0 %v3678
        %3951 = vmatprep.subr.bf16.mxu0 %v3672
        %3952 = vmatpush1.bf16.msra.mxu0 %v3671
        %3953 = vmatprep.subr.bf16.mxu0 %v3665
        %3954 = vmatpush1.bf16.msra.mxu0 %v3664
        %3955 = vmatprep.subr.bf16.mxu0 %v3658
        %3956 = vmatpush1.bf16.msra.mxu0 %v3657
        %3957 = vmatprep.subr.bf16.mxu0 0
        %3958 = vmatpush2.bf16.msra.mxu0 0
        %3959 = vmatprep.subr.bf16.mxu0 0
        %3960 = vmatpush2.bf16.msra.mxu0 0
        %3961 = vmatprep.subr.bf16.mxu0 0
        %3962 = vmatpush2.bf16.msra.mxu0 0
        %3963 = vmatprep.subr.bf16.mxu0 0
        %3964 = vmatpush2.bf16.msra.mxu0 0
        %3965 = vmatprep.subr.bf16.mxu0 0
        %3966 = vmatpush2.bf16.msra.mxu0 0
        %3967 = vmatprep.subr.bf16.mxu0 0
        %3968 = vmatpush2.bf16.msra.mxu0 0
        %3969 = vmatprep.subr.bf16.mxu0 0
        %3970 = vmatpush2.bf16.msra.mxu0 0
        %3971 = vmatprep.subr.bf16.mxu0 %v3714
        %3972 = vmatpush2.bf16.msra.mxu0 %v3713
        %3973 = vmatprep.mubr.bf16.mxu0 %v3896
        %3974 = vmatmul.mubr.bf16.gmra.mxu0 %v2756
        %v3975 = vpop.f32.mrf.mxu0
        %v3976 = vadd.f32 %v3933, %v3975
        %v3977 = vpop.f32.mrf.mxu0
        %v3978 = vadd.f32 %v3935, %v3977
        %v3979 = vpop.f32.mrf.mxu0
        %v3980 = vadd.f32 %v3937, %v3979
        %v3981 = vpop.f32.mrf.mxu0
        %v3982 = vadd.f32 %v3939, %v3981
        %3983 = vdwg.mxu0
        %3984 = vmatprep.subr.bf16.mxu0 %v3597
        %3985 = vmatpush1.bf16.msra.mxu0 %v3596
        %3986 = vmatprep.subr.bf16.mxu0 %v3590
        %3987 = vmatpush1.bf16.msra.mxu0 %v3589
        %3988 = vmatprep.subr.bf16.mxu0 %v3583
        %3989 = vmatpush1.bf16.msra.mxu0 %v3582
        %3990 = vmatprep.subr.bf16.mxu0 %v3576
        %3991 = vmatpush1.bf16.msra.mxu0 %v3575
        %3992 = vmatprep.subr.bf16.mxu0 %v3569
        %3993 = vmatpush1.bf16.msra.mxu0 %v3568
        %3994 = vmatprep.subr.bf16.mxu0 %v3562
        %3995 = vmatpush1.bf16.msra.mxu0 %v3561
        %3996 = vmatprep.subr.bf16.mxu0 %v3555
        %3997 = vmatpush1.bf16.msra.mxu0 %v3554
        %3998 = vmatprep.subr.bf16.mxu0 %v3548
        %3999 = vmatpush1.bf16.msra.mxu0 %v3547
        %4000 = vmatprep.subr.bf16.mxu0 %v3653
        %4001 = vmatpush2.bf16.msra.mxu0 %v3652
        %4002 = vmatprep.subr.bf16.mxu0 %v3646
        %4003 = vmatpush2.bf16.msra.mxu0 %v3645
        %4004 = vmatprep.subr.bf16.mxu0 %v3639
        %4005 = vmatpush2.bf16.msra.mxu0 %v3638
        %4006 = vmatprep.subr.bf16.mxu0 %v3632
        %4007 = vmatpush2.bf16.msra.mxu0 %v3631
        %4008 = vmatprep.subr.bf16.mxu0 %v3625
        %4009 = vmatpush2.bf16.msra.mxu0 %v3624
        %4010 = vmatprep.subr.bf16.mxu0 %v3618
        %4011 = vmatpush2.bf16.msra.mxu0 %v3617
        %4012 = vmatprep.subr.bf16.mxu0 %v3611
        %4013 = vmatpush2.bf16.msra.mxu0 %v3610
        %4014 = vmatprep.subr.bf16.mxu0 %v3604
        %4015 = vmatpush2.bf16.msra.mxu0 %v3603
        %4016 = vmatprep.mubr.bf16.mxu0 %v2755
        %4017 = vmatmul.mubr.bf16.gmra.mxu0 %v2754
        %v4018 = vpop.f32.mrf.mxu0
        %v4019 = vadd.f32 %v2971, %v4018
        %v4020 = vpop.f32.mrf.mxu0
        %v4021 = vadd.f32 %v2975, %v4020
        %v4022 = vpop.f32.mrf.mxu0
        %v4023 = vadd.f32 %v2971, %v4022
        %v4024 = vpop.f32.mrf.mxu0
        %v4025 = vadd.f32 %v2975, %v4024
        %4026 = vdwg.mxu0
        %4027 = vmatprep.subr.bf16.mxu0 %v3709
        %4028 = vmatpush1.bf16.msra.mxu0 %v3708
        %4029 = vmatprep.subr.bf16.mxu0 %v3702
        %4030 = vmatpush1.bf16.msra.mxu0 %v3701
        %4031 = vmatprep.subr.bf16.mxu0 %v3695
        %4032 = vmatpush1.bf16.msra.mxu0 %v3694
        %4033 = vmatprep.subr.bf16.mxu0 %v3688
        %4034 = vmatpush1.bf16.msra.mxu0 %v3687
        %4035 = vmatprep.subr.bf16.mxu0 %v3681
        %4036 = vmatpush1.bf16.msra.mxu0 %v3680
        %4037 = vmatprep.subr.bf16.mxu0 %v3674
        %4038 = vmatpush1.bf16.msra.mxu0 %v3673
        %4039 = vmatprep.subr.bf16.mxu0 %v3667
        %4040 = vmatpush1.bf16.msra.mxu0 %v3666
        %4041 = vmatprep.subr.bf16.mxu0 %v3660
        %4042 = vmatpush1.bf16.msra.mxu0 %v3659
        %4043 = vmatprep.subr.bf16.mxu0 0
        %4044 = vmatpush2.bf16.msra.mxu0 0
        %4045 = vmatprep.subr.bf16.mxu0 0
        %4046 = vmatpush2.bf16.msra.mxu0 0
        %4047 = vmatprep.subr.bf16.mxu0 0
        %4048 = vmatpush2.bf16.msra.mxu0 0
        %4049 = vmatprep.subr.bf16.mxu0 0
        %4050 = vmatpush2.bf16.msra.mxu0 0
        %4051 = vmatprep.subr.bf16.mxu0 0
        %4052 = vmatpush2.bf16.msra.mxu0 0
        %4053 = vmatprep.subr.bf16.mxu0 0
        %4054 = vmatpush2.bf16.msra.mxu0 0
        %4055 = vmatprep.subr.bf16.mxu0 0
        %4056 = vmatpush2.bf16.msra.mxu0 0
        %4057 = vmatprep.subr.bf16.mxu0 %v3716
        %4058 = vmatpush2.bf16.msra.mxu0 %v3715
        %4059 = vmatprep.mubr.bf16.mxu0 %v3896
        %4060 = vmatmul.mubr.bf16.gmra.mxu0 %v2756
        %v4061 = vpop.f32.mrf.mxu0
        %v4062 = vadd.f32 %v4019, %v4061
        %v4063 = vpop.f32.mrf.mxu0
        %v4064 = vadd.f32 %v4021, %v4063
        %v4065 = vpop.f32.mrf.mxu0
        %v4066 = vadd.f32 %v4023, %v4065
        %v4067 = vpop.f32.mrf.mxu0
        %v4068 = vadd.f32 %v4025, %v4067
        %4069 = vdwg.mxu0
        %4070 = vmatprep.subr.bf16.mxu0 %v3599
        %4071 = vmatpush1.bf16.msra.mxu0 %v3598
        %4072 = vmatprep.subr.bf16.mxu0 %v3592
        %4073 = vmatpush1.bf16.msra.mxu0 %v3591
        %4074 = vmatprep.subr.bf16.mxu0 %v3585
        %4075 = vmatpush1.bf16.msra.mxu0 %v3584
        %4076 = vmatprep.subr.bf16.mxu0 %v3578
        %4077 = vmatpush1.bf16.msra.mxu0 %v3577
        %4078 = vmatprep.subr.bf16.mxu0 %v3571
        %4079 = vmatpush1.bf16.msra.mxu0 %v3570
        %4080 = vmatprep.subr.bf16.mxu0 %v3564
        %4081 = vmatpush1.bf16.msra.mxu0 %v3563
        %4082 = vmatprep.subr.bf16.mxu0 %v3557
        %4083 = vmatpush1.bf16.msra.mxu0 %v3556
        %4084 = vmatprep.subr.bf16.mxu0 %v3550
        %4085 = vmatpush1.bf16.msra.mxu0 %v3549
        %4086 = vmatprep.subr.bf16.mxu0 %v3655
        %4087 = vmatpush2.bf16.msra.mxu0 %v3654
        %4088 = vmatprep.subr.bf16.mxu0 %v3648
        %4089 = vmatpush2.bf16.msra.mxu0 %v3647
        %4090 = vmatprep.subr.bf16.mxu0 %v3641
        %4091 = vmatpush2.bf16.msra.mxu0 %v3640
        %4092 = vmatprep.subr.bf16.mxu0 %v3634
        %4093 = vmatpush2.bf16.msra.mxu0 %v3633
        %4094 = vmatprep.subr.bf16.mxu0 %v3627
        %4095 = vmatpush2.bf16.msra.mxu0 %v3626
        %4096 = vmatprep.subr.bf16.mxu0 %v3620
        %4097 = vmatpush2.bf16.msra.mxu0 %v3619
        %4098 = vmatprep.subr.bf16.mxu0 %v3613
        %4099 = vmatpush2.bf16.msra.mxu0 %v3612
        %4100 = vmatprep.subr.bf16.mxu0 %v3606
        %4101 = vmatpush2.bf16.msra.mxu0 %v3605
        %4102 = vmatprep.mubr.bf16.mxu0 %v2755
        %4103 = vmatmul.mubr.bf16.gmra.mxu0 %v2754
        %v4104 = vpop.f32.mrf.mxu0
        %v4105 = vadd.f32 %v2979, %v4104
        %v4106 = vpop.f32.mrf.mxu0
        %v4107 = vadd.f32 %v2983, %v4106
        %v4108 = vpop.f32.mrf.mxu0
        %v4109 = vadd.f32 %v2979, %v4108
        %v4110 = vpop.f32.mrf.mxu0
        %v4111 = vadd.f32 %v2983, %v4110
        %4112 = vdwg.mxu0
        %4113 = vmatprep.subr.bf16.mxu0 %v3711
        %4114 = vmatpush1.bf16.msra.mxu0 %v3710
        %4115 = vmatprep.subr.bf16.mxu0 %v3704
        %4116 = vmatpush1.bf16.msra.mxu0 %v3703
        %4117 = vmatprep.subr.bf16.mxu0 %v3697
        %4118 = vmatpush1.bf16.msra.mxu0 %v3696
        %4119 = vmatprep.subr.bf16.mxu0 %v3690
        %4120 = vmatpush1.bf16.msra.mxu0 %v3689
        %4121 = vmatprep.subr.bf16.mxu0 %v3683
        %4122 = vmatpush1.bf16.msra.mxu0 %v3682
        %4123 = vmatprep.subr.bf16.mxu0 %v3676
        %4124 = vmatpush1.bf16.msra.mxu0 %v3675
        %4125 = vmatprep.subr.bf16.mxu0 %v3669
        %4126 = vmatpush1.bf16.msra.mxu0 %v3668
        %4127 = vmatprep.subr.bf16.mxu0 %v3662
        %4128 = vmatpush1.bf16.msra.mxu0 %v3661
        %4129 = vmatprep.subr.bf16.mxu0 0
        %4130 = vmatpush2.bf16.msra.mxu0 0
        %4131 = vmatprep.subr.bf16.mxu0 0
        %4132 = vmatpush2.bf16.msra.mxu0 0
        %4133 = vmatprep.subr.bf16.mxu0 0
        %4134 = vmatpush2.bf16.msra.mxu0 0
        %4135 = vmatprep.subr.bf16.mxu0 0
        %4136 = vmatpush2.bf16.msra.mxu0 0
        %4137 = vmatprep.subr.bf16.mxu0 0
        %4138 = vmatpush2.bf16.msra.mxu0 0
        %4139 = vmatprep.subr.bf16.mxu0 0
        %4140 = vmatpush2.bf16.msra.mxu0 0
        %4141 = vmatprep.subr.bf16.mxu0 0
        %4142 = vmatpush2.bf16.msra.mxu0 0
        %4143 = vmatprep.subr.bf16.mxu0 %v3718
        %4144 = vmatpush2.bf16.msra.mxu0 %v3717
        %4145 = vmatprep.mubr.bf16.mxu0 %v3896
        %4146 = vmatmul.mubr.bf16.gmra.mxu0 %v2756
        %v4147 = vpop.f32.mrf.mxu0
        %v4148 = vadd.f32 %v4105, %v4147
        %v4149 = vpop.f32.mrf.mxu0
        %v4150 = vadd.f32 %v4107, %v4149
        %v4151 = vpop.f32.mrf.mxu0
        %v4152 = vadd.f32 %v4109, %v4151
        %v4153 = vpop.f32.mrf.mxu0
        %v4154 = vadd.f32 %v4111, %v4153
        %4155 = vdwg.mxu0
        %4156 = vmatprep.subr.bf16.mxu0 0
        %4157 = vmatpush1.bf16.msra.mxu0 %v3600
        %4158 = vmatprep.subr.bf16.mxu0 0
        %4159 = vmatpush1.bf16.msra.mxu0 %v3593
        %4160 = vmatprep.subr.bf16.mxu0 0
        %4161 = vmatpush1.bf16.msra.mxu0 %v3586
        %4162 = vmatprep.subr.bf16.mxu0 0
        %4163 = vmatpush1.bf16.msra.mxu0 %v3579
        %4164 = vmatprep.subr.bf16.mxu0 0
        %4165 = vmatpush1.bf16.msra.mxu0 %v3572
        %4166 = vmatprep.subr.bf16.mxu0 0
        %4167 = vmatpush1.bf16.msra.mxu0 %v3565
        %4168 = vmatprep.subr.bf16.mxu0 0
        %4169 = vmatpush1.bf16.msra.mxu0 %v3558
        %4170 = vmatprep.subr.bf16.mxu0 0
        %4171 = vmatpush1.bf16.msra.mxu0 %v3551
        %4172 = vmatprep.subr.bf16.mxu0 0
        %4173 = vmatpush2.bf16.msra.mxu0 %v3656
        %4174 = vmatprep.subr.bf16.mxu0 0
        %4175 = vmatpush2.bf16.msra.mxu0 %v3649
        %4176 = vmatprep.subr.bf16.mxu0 0
        %4177 = vmatpush2.bf16.msra.mxu0 %v3642
        %4178 = vmatprep.subr.bf16.mxu0 0
        %4179 = vmatpush2.bf16.msra.mxu0 %v3635
        %4180 = vmatprep.subr.bf16.mxu0 0
        %4181 = vmatpush2.bf16.msra.mxu0 %v3628
        %4182 = vmatprep.subr.bf16.mxu0 0
        %4183 = vmatpush2.bf16.msra.mxu0 %v3621
        %4184 = vmatprep.subr.bf16.mxu0 0
        %4185 = vmatpush2.bf16.msra.mxu0 %v3614
        %4186 = vmatprep.subr.bf16.mxu0 0
        %4187 = vmatpush2.bf16.msra.mxu0 %v3607
        %4188 = vmatprep.mubr.bf16.mxu0 %v2755
        %4189 = vmatmul.mubr.bf16.gmra.mxu0 %v2754
        %v4190 = vpop.f32.mrf.mxu0
        %v4191 = vadd.f32 %v2987, %v4190
        %v4192 = vpop.f32.mrf.mxu0
        %v4193 = vpop.f32.mrf.mxu0
        %v4194 = vadd.f32 %v2987, %v4193
        %v4195 = vpop.f32.mrf.mxu0
        %4196 = vdwg.mxu0
        %4197 = vmatprep.subr.bf16.mxu0 0
        %4198 = vmatpush1.bf16.msra.mxu0 %v3712
        %4199 = vmatprep.subr.bf16.mxu0 0
        %4200 = vmatpush1.bf16.msra.mxu0 %v3705
        %4201 = vmatprep.subr.bf16.mxu0 0
        %4202 = vmatpush1.bf16.msra.mxu0 %v3698
        %4203 = vmatprep.subr.bf16.mxu0 0
        %4204 = vmatpush1.bf16.msra.mxu0 %v3691
        %4205 = vmatprep.subr.bf16.mxu0 0
        %4206 = vmatpush1.bf16.msra.mxu0 %v3684
        %4207 = vmatprep.subr.bf16.mxu0 0
        %4208 = vmatpush1.bf16.msra.mxu0 %v3677
        %4209 = vmatprep.subr.bf16.mxu0 0
        %4210 = vmatpush1.bf16.msra.mxu0 %v3670
        %4211 = vmatprep.subr.bf16.mxu0 0
        %4212 = vmatpush1.bf16.msra.mxu0 %v3663
        %4213 = vmatprep.subr.bf16.mxu0 0
        %4214 = vmatpush2.bf16.msra.mxu0 0
        %4215 = vmatprep.subr.bf16.mxu0 0
        %4216 = vmatpush2.bf16.msra.mxu0 0
        %4217 = vmatprep.subr.bf16.mxu0 0
        %4218 = vmatpush2.bf16.msra.mxu0 0
        %4219 = vmatprep.subr.bf16.mxu0 0
        %4220 = vmatpush2.bf16.msra.mxu0 0
        %4221 = vmatprep.subr.bf16.mxu0 0
        %4222 = vmatpush2.bf16.msra.mxu0 0
        %4223 = vmatprep.subr.bf16.mxu0 0
        %4224 = vmatpush2.bf16.msra.mxu0 0
        %4225 = vmatprep.subr.bf16.mxu0 0
        %4226 = vmatpush2.bf16.msra.mxu0 0
        %4227 = vmatprep.subr.bf16.mxu0 0
        %4228 = vmatpush2.bf16.msra.mxu0 %v3719
        %4229 = vmatprep.mubr.bf16.mxu0 %v3896
        %4230 = vmatmul.mubr.bf16.gmra.mxu0 %v2756
        %v4231 = vpop.f32.mrf.mxu0
        %v4232 = vadd.f32 %v4191, %v4231
        %v4233 = vpop.f32.mrf.mxu0
        %v4234 = vpop.f32.mrf.mxu0
        %v4235 = vadd.f32 %v4194, %v4234
        %v4236 = vpop.f32.mrf.mxu0
        %4237 = vdwg.mxu0
        %v4238 = vpack.c.bf16 %v3980, %v3976
        %v4239 = vpack.c.bf16 %v3982, %v3978
        %v4240 = vpack.c.bf16 %v4066, %v4062
        %v4241 = vpack.c.bf16 %v4068, %v4064
        %v4242 = vpack.c.bf16 %v4152, %v4148
        %v4243 = vpack.c.bf16 %v4154, %v4150
        %v4244 = vpack.c.bf16 %v4235, %v4232
        %v4245 = vxor.u32 %v4238, 2147516416
        %v4246 = vxor.u32 %v4239, 2147516416
        %v4247 = vxor.u32 %v4240, 2147516416
        %v4248 = vxor.u32 %v4241, 2147516416
        %v4249 = vxor.u32 %v4242, 2147516416
        %v4250 = vxor.u32 %v4243, 2147516416
        %v4251 = vxor.u32 %v4244, 2147516416
        %v4253 = vmul.bf16 %v4245, 1069105081
        %v4254 = vpow.bf16.pop %v4253
        %v4256 = vmul.bf16 %v4246, 1069105081
        %v4257 = vpow.bf16.pop %v4256
        %v4259 = vmul.bf16 %v4247, 1069105081
        %v4260 = vpow.bf16.pop %v4259
        %v4262 = vmul.bf16 %v4248, 1069105081
        %v4263 = vpow.bf16.pop %v4262
        %v4265 = vmul.bf16 %v4249, 1069105081
        %v4266 = vpow.bf16.pop %v4265
        %v4268 = vmul.bf16 %v4250, 1069105081
        %v4269 = vpow.bf16.pop %v4268
        %v4271 = vmul.bf16 %v4251, 1069105081
        %v4272 = vpow.bf16.pop %v4271
        %v4273 = vadd.bf16 %v4254, 1065369472
        %v4274 = vadd.bf16 %v4257, 1065369472
        %v4275 = vadd.bf16 %v4260, 1065369472
        %v4276 = vadd.bf16 %v4263, 1065369472
        %v4277 = vadd.bf16 %v4266, 1065369472
        %v4278 = vadd.bf16 %v4269, 1065369472
        %v4279 = vadd.bf16 %v4272, 1065369472
        %v4280 = vrcp.bf16.pop %v4273
        %v4281 = vmul.bf16 1065369472, %v4280
        %v4282 = vrcp.bf16.pop %v4274
        %v4283 = vmul.bf16 1065369472, %v4282
        %v4284 = vrcp.bf16.pop %v4275
        %v4285 = vmul.bf16 1065369472, %v4284
        %v4286 = vrcp.bf16.pop %v4276
        %v4287 = vmul.bf16 1065369472, %v4286
        %v4288 = vrcp.bf16.pop %v4277
        %v4289 = vmul.bf16 1065369472, %v4288
        %v4290 = vrcp.bf16.pop %v4278
        %v4291 = vmul.bf16 1065369472, %v4290
        %v4292 = vrcp.bf16.pop %v4279
        %v4293 = vmul.bf16 1065369472, %v4292
        %v4301 = vunpack.c.l.b16 %v4281
        %v4302 = vunpack.c.l.b16 %v4283
        %v4303 = vunpack.c.l.b16 %v4285
        %v4304 = vunpack.c.l.b16 %v4287
        %v4305 = vunpack.c.l.b16 %v4289
        %v4306 = vunpack.c.l.b16 %v4291
        %v4307 = vunpack.c.l.b16 %v4293
        %v4308 = vunpack.c.h.b16 %v4281
        %v4309 = vunpack.c.h.b16 %v4283
        %v4310 = vunpack.c.h.b16 %v4285
        %v4311 = vunpack.c.h.b16 %v4287
        %v4312 = vunpack.c.h.b16 %v4289
        %v4313 = vunpack.c.h.b16 %v4291
        %v4314 = vunpack.c.h.b16 %v4293
        %v4315 = vpack.c.b16 %v4302, %v4301
        %v4316 = vpack.c.b16 %v4304, %v4303
        %v4317 = vpack.c.b16 %v4306, %v4305
        %v4318 = vpack.c.b16 %v4307, %v4307
        %v4319 = vpack.c.b16 %v4309, %v4308
        %v4320 = vpack.c.b16 %v4311, %v4310
        %v4321 = vpack.c.b16 %v4313, %v4312
        %v4322 = vpack.c.b16 %v4314, %v4314
        %4331 = vst [vmem:[%s399] sm:$0xff] %v4315
        %4332 = vst [vmem:[%s399 + $0x8] sm:$0xff] %v4316
        %4333 = vst [vmem:[%s399 + $0x10] sm:$0xff] %v4317
        %vm4334 = vcmask 125952
        %4335 = vst.msk [vmem:[%s399 + $0x18] sm:$0xf] %vm4334, %v4318
        %4336 = vst [vmem:[%s399 + $0x1c] sm:$0xff] %v4319
        %4337 = vst [vmem:[%s399 + $0x24] sm:$0xff] %v4320
        %4338 = vst [vmem:[%s399 + $0x2c] sm:$0xff] %v4321
        %4339 = vst.msk [vmem:[%s399 + $0x34] sm:$0xf] %vm4334, %v4322
        %4340 = vst [vmem:[%s427] sm:$0xff] %v2425
        %4341 = vst [vmem:[%s427 + $0x8] sm:$0xff] %v2427
        %4342 = vst [vmem:[%s427 + $0x10] sm:$0xff] %v2429
        %4343 = vst [vmem:[%s427 + $0x18] sm:$0xff] %v2431
        %s4344 = sand.u32 %s254, 1
        %s4345 = scalar_lea.sflag [#allocation3], %s4344
        %s4346 = sand.u32 %s254, 1
        %s4347 = smul.addr %s4346, 56
        %s4348 = scalar_lea.vmem [#allocation2], %s4347
        %s4349 = smul.u32 2, %s26
        %p4350 = scmp.lt.s32.totalorder %s4349, 3
        %s4351 = scalar_select %p4350, %s4349, 3
        %s4352 = smul.addr %s4351, 2
        %s4353 = smul.addr %s4352, 8
        %s4354 = scalar_lea.vmem %s11, %s4353
        // Predicated region
        $region61: #{vae_forward.1} parent=59 // pred_check
          %p4355 = pneg %p264
        $region62: #{vae_forward.1} parent=59 // pred_check_branch
          %4357 = sbr.rel (%p4355) target = $region64
        $region63: #{vae_forward.1} parent=59 // pred_region
          %s4358 = smul.u32 2, %s26
          %s4360 = ssub.s32 896, 896
          %4361 = vsyncadd %s4345, %s4360
          %s4362 = smul.addr %s4358, 7
          %s4363 = smul.addr %s4362, 64
          %s4364 = scalar_lea.hbm %s10, %s4363
          %s4365 = sshll.u32 %s4348, 4
          %s4366 = int_to_ptr.vmem [resolvable:$true] %s4365
          %4371 = dma.vmem_to_hbm [thread:$0]  %s4366, 896, %s4364, %s4345, 448, 448, 28
        $region64: #{vae_forward.1} parent=59 // pred_fallthru
          _
        // Predicated region
        $region65: #{vae_forward.1} parent=59 // pred_check
          %p4372 = pneg %p290
        $region66: #{vae_forward.1} parent=59 // pred_check_branch
          %4374 = sbr.rel (%p4372) target = $region68
        $region67: #{vae_forward.1} parent=59 // pred_region
          %s4375 = smul.u32 2, %s26
        $region68: #{vae_forward.1} parent=59 // pred_fallthru
          _
      $region60: #{vae_forward.1} parent=5 // pred_fallthru
        _
      %p4376 = scmp.le.s32.totalorder 2, %s21
      // Predicated region
      $region69: #{vae_forward.1} parent=5 // pred_check
        %p4377 = pneg %p4376
      $region70: #{vae_forward.1} parent=5 // pred_check_branch
        %4379 = sbr.rel (%p4377) target = $region72
      $region71: #{vae_forward.1} parent=5 // pred_region
        %s4380 = ssub.s32 %s21, 2
        // Predicated region
        $region73: #{vae_forward.1} parent=71 // pred_check
          %p4381 = pneg %p270
        $region74: #{vae_forward.1} parent=71 // pred_check_branch
          %4383 = sbr.rel (%p4381) target = $region76
        $region75: #{vae_forward.1} parent=71 // pred_region
          %s4384 = sand.u32 %s255, 1
          %s4385 = scalar_lea.sflag [#allocation3], %s4384
          %s4386 = sand.u32 %s255, 1
          %s4387 = smul.addr %s4386, 56
          %s4388 = scalar_lea.vmem [#allocation2], %s4387
          %4389 = dma.done %s4385, 896
        $region76: #{vae_forward.1} parent=71 // pred_fallthru
          _
        // Predicated region
        $region77: #{vae_forward.1} parent=71 // pred_check
          %p4390 = pneg %p296
        $region78: #{vae_forward.1} parent=71 // pred_check_branch
          %4392 = sbr.rel (%p4390) target = $region80
        $region79: #{vae_forward.1} parent=71 // pred_region
          %s4393 = smul.u32 2, %s27
          %p4394 = scmp.lt.s32.totalorder %s4393, 3
          %s4395 = scalar_select %p4394, %s4393, 3
          %s4396 = smul.addr %s4395, 2
          %s4397 = smul.addr %s4396, 8
          %s4398 = scalar_lea.vmem %s11, %s4397
        $region80: #{vae_forward.1} parent=71 // pred_fallthru
          _
      $region72: #{vae_forward.1} parent=5 // pred_fallthru
        _
    $region6: #{vae_forward.1} parent=1 // loop_footer
      %s25 = sadd.s32 1, %s21
    $region7: #{vae_forward.1} parent=1 // loop_footer_branch
      %20 = sbr.rel target = $region3
    $region8: #{vae_forward.1} parent=1 // loop_exit
      _
    %4399 = vsyncpa [#allocation3], 1
    %s4400 = scalar_lea.sflag [#allocation3], 1
    %4401 = vsyncpa %s4400, 1

</llo_original>
